<compile_context>
chip_gen: v7x
topology: tpu7x:2x2x1
jax: 0.10.0
libtpu: 0.0.40
codegen_flags: <defaults>
</compile_context>

<pallas_src>
import functools
import math

import jax
import jax.numpy as jnp
from jax.experimental import pallas as pl
from jax.experimental.pallas import tpu as pltpu

EPS = 1e-5


def _layer_norm(x, gamma, beta):
    # x: (M, E); gamma/beta: (1, E). PyTorch nn.LayerNorm semantics
    # (eps=1e-5, population variance over the last dim), kept in f32.
    mean = jnp.mean(x, axis=-1, keepdims=True)
    var = jnp.mean((x - mean) ** 2, axis=-1, keepdims=True)
    return (x - mean) * jax.lax.rsqrt(var + EPS) * gamma + beta


def encoder_kernel(num_heads,
                   q_ref, k_ref, v_ref,
                   lnq_g, lnq_b, lnk_g, lnk_b, lnv_g, lnv_b,
                   wq_ref, wk_ref, wv_ref, bq_ref, bk_ref, bv_ref,
                   opw_ref, opb_ref, post_g, post_b, linw_ref, linb_ref,
                   latent_ref, weights_ref):
    Bt, L, E = q_ref.shape
    Lk = k_ref.shape[1]
    H = num_heads
    Dh = E // H
    bf16 = jnp.bfloat16

    # Flatten the batch block into the M dim for all dense matmuls.
    q = q_ref[...].reshape(Bt * L, E)
    k = k_ref[...].reshape(Bt * Lk, E)
    v = v_ref[...].reshape(Bt * Lk, E)

    # --- pre layer norms (f32); only qn must stay live (residual) ---
    qn = _layer_norm(q, lnq_g[...], lnq_b[...])
    kn = _layer_norm(k, lnk_g[...], lnk_b[...])
    vn = _layer_norm(v, lnv_g[...], lnv_b[...])

    # --- in-projection: weights pre-transposed (E, E) bf16 on the host, the
    #     1/sqrt(Dh) scale folded into wq/bq; cast to bf16 right after the
    #     bias add so only one (bf16) copy of each projection stays live. ---
    qp = (jnp.dot(qn.astype(bf16), wq_ref[...],
                  preferred_element_type=jnp.float32) + bq_ref[...]).astype(bf16)
    kp = (jnp.dot(kn.astype(bf16), wk_ref[...],
                  preferred_element_type=jnp.float32) + bk_ref[...]).astype(bf16)
    vp = (jnp.dot(vn.astype(bf16), wv_ref[...],
                  preferred_element_type=jnp.float32) + bv_ref[...]).astype(bf16)

    # Split heads into the batch dim once: (Bt*len, E) -> (H*Bt, len, Dh).
    def split_heads(x, length):
        x3 = x.reshape(Bt, length, E)
        return jnp.concatenate(
            [x3[:, :, h * Dh:(h + 1) * Dh] for h in range(H)], axis=0)

    qh = split_heads(qp, L)    # (H*Bt, L,  Dh) bf16
    kh = split_heads(kp, Lk)   # (H*Bt, Lk, Dh) bf16
    vh = split_heads(vp, Lk)   # (H*Bt, Lk, Dh) bf16

    # --- attention for ALL heads in two batched einsums ---
    # TODO(synk): attention dropout (p=0.25) skipped — eval-mode semantics.
    s = jnp.einsum('bqd,bkd->bqk', qh, kh,
                   preferred_element_type=jnp.float32)          # (H*Bt, L, Lk)
    s = s - jnp.max(s, axis=-1, keepdims=True)
    p = jnp.exp(s)
    p = p / jnp.sum(p, axis=-1, keepdims=True)   # exact softmax (rows sum to 1)
    ctx = jnp.einsum('bqk,bkd->bqd', p.astype(bf16), vh,
                     preferred_element_type=jnp.float32)        # (H*Bt, L, Dh)

    # Head-averaged attention weights (average_attn_weights=True).
    w_avg = jnp.mean(p.reshape(H, Bt, L, Lk), axis=0)           # (Bt, L, Lk)

    # Merge heads back to lanes once, then ONE K=E out-projection matmul.
    ctx4 = ctx.astype(bf16).reshape(H, Bt, L, Dh)
    ctx_m = jnp.concatenate([ctx4[h] for h in range(H)],
                            axis=-1).reshape(Bt * L, E)          # (Bt*L, E) bf16
    ctx_o = jnp.dot(ctx_m, opw_ref[...],
                    preferred_element_type=jnp.float32) + opb_ref[...]

    # --- post norm, residual on the *normalized* Query, GELU MLP, residual ---
    ctx_o = _layer_norm(ctx_o, post_g[...], post_b[...])
    latent = qn + ctx_o
    y = jnp.dot(latent.astype(bf16), linw_ref[...],
                preferred_element_type=jnp.float32) + linb_ref[...]
    # TODO(synk): F.gelu default is exact-erf; tanh approximation used here so
    # the nonlinearity lowers to the (otherwise idle) EUP slot (~1e-3 max dev).
    c = math.sqrt(2.0 / math.pi)
    gelu = 0.5 * y * (1.0 + jnp.tanh(c * (y + 0.044715 * (y * y * y))))
    latent = latent + gelu

    latent_ref[...] = latent.reshape(Bt, L, E)
    weights_ref[...] = w_avg.astype(weights_ref.dtype)


def make_params(key, embed_dim):
    """Parameters in PyTorch-native layout (source of truth)."""
    E = embed_dim
    ks = jax.random.split(key, 6)
    return {
        "lnq_g": jnp.ones((1, E), jnp.float32), "lnq_b": jnp.zeros((1, E), jnp.float32),
        "lnk_g": jnp.ones((1, E), jnp.float32), "lnk_b": jnp.zeros((1, E), jnp.float32),
        "lnv_g": jnp.ones((1, E), jnp.float32), "lnv_b": jnp.zeros((1, E), jnp.float32),
        "in_w": 0.05 * jax.random.normal(ks[0], (3 * E, E), jnp.float32),  # [Wq; Wk; Wv]
        "in_b": 0.01 * jax.random.normal(ks[1], (1, 3 * E), jnp.float32),
        "op_w": 0.05 * jax.random.normal(ks[2], (E, E), jnp.float32),
        "op_b": 0.01 * jax.random.normal(ks[3], (1, E), jnp.float32),
        "post_g": jnp.ones((1, E), jnp.float32), "post_b": jnp.zeros((1, E), jnp.float32),
        "lin_w": 0.05 * jax.random.normal(ks[4], (E, E), jnp.float32),
        "lin_b": 0.01 * jax.random.normal(ks[5], (1, E), jnp.float32),
    }


def _prep_params(params, embed_dim, num_heads):
    """Host-side layout prep: split + pre-transpose weights, fold 1/sqrt(Dh)
    into Wq/bq, cast matmul weights to bf16 (biases / LN params stay f32)."""
    E = embed_dim
    Dh = E // num_heads
    scale = 1.0 / math.sqrt(Dh)
    bf = jnp.bfloat16
    in_w = params["in_w"]
    in_b = params["in_b"]
    return {
        "lnq_g": params["lnq_g"], "lnq_b": params["lnq_b"],
        "lnk_g": params["lnk_g"], "lnk_b": params["lnk_b"],
        "lnv_g": params["lnv_g"], "lnv_b": params["lnv_b"],
        "wq": (in_w[:E, :].T * scale).astype(bf),
        "wk": in_w[E:2 * E, :].T.astype(bf),
        "wv": in_w[2 * E:, :].T.astype(bf),
        "bq": in_b[:, :E] * scale,
        "bk": in_b[:, E:2 * E],
        "bv": in_b[:, 2 * E:],
        "op_w": params["op_w"].T.astype(bf),
        "op_b": params["op_b"],
        "post_g": params["post_g"], "post_b": params["post_b"],
        "lin_w": params["lin_w"].T.astype(bf),
        "lin_b": params["lin_b"],
    }


def _vmem_budget_bytes():
    """Half of physical VMEM (v5e/v6e: 64 MiB, v7x: 32 MiB); safe fallback."""
    try:
        cap = getattr(pltpu.get_tpu_info(), "vmem_capacity_bytes", None)
        cap = int(cap) if cap else (64 << 20)
    except Exception:
        cap = 64 << 20
    return min(cap // 2, 64 << 20)


def _per_step_vmem_bytes(Bt, L, Lk, E, H, param_bytes, weights_itemsize):
    """Conservative estimate of the per-grid-step VMEM live set."""
    f32, bf16 = 4, 2
    m_q, m_kv = Bt * L, Bt * Lk
    est = 2 * f32 * (m_q + 2 * m_kv) * E                          # Q/K/V tiles (x2 buffers)
    est += 2 * (f32 * m_q * E + weights_itemsize * Bt * L * Lk)   # outputs (x2 buffers)
    est += f32 * (m_q + 2 * m_kv) * E                             # normalized q/k/v
    est += bf16 * (m_q + 2 * m_kv) * E                            # bf16 projections
    est += 2 * f32 * Bt * H * L * Lk                              # scores + probs
    est += (f32 + bf16) * m_q * E                                 # context (+bf16 copy)
    est += 3 * f32 * m_q * E                                      # latent / MLP temporaries
    return est + param_bytes


def _pick_batch_block(B, L, Lk, E, H, param_bytes, budget, weights_itemsize):
    # Keep >= 2 grid steps when possible so both v7x TensorCores get work
    # (negligible cost on single-TC v5e/v6e); within that, pick the smallest
    # Bt that reaches M = Bt*L >= 256 (full 256-wide MXU pass), else the
    # largest Bt that fits the VMEM budget.
    cap = max(1, B // 2) if B >= 2 else 1
    divisors = [d for d in range(1, cap + 1) if B % d == 0]
    feasible = [d for d in divisors
                if _per_step_vmem_bytes(d, L, Lk, E, H, param_bytes,
                                        weights_itemsize) <= budget]
    if not feasible:
        return 1
    good = [d for d in feasible if d * L >= 256]
    return min(good) if good else max(feasible)


def encoder_forward(Q, K, V, params, num_heads, batch_block=None,
                    weights_dtype=jnp.float32):
    B, L, E = Q.shape
    Lk = K.shape[1]
    assert E % num_heads == 0

    p = _prep_params(params, E, num_heads)
    param_order = ["lnq_g", "lnq_b", "lnk_g", "lnk_b", "lnv_g", "lnv_b",
                   "wq", "wk", "wv", "bq", "bk", "bv",
                   "op_w", "op_b", "post_g", "post_b", "lin_w", "lin_b"]
    param_list = [p[n] for n in param_order]
    param_bytes = sum(int(a.size) * a.dtype.itemsize for a in param_list)

    budget = _vmem_budget_bytes()
    w_isize = jnp.dtype(weights_dtype).itemsize
    Bt = batch_block if batch_block is not None else _pick_batch_block(
        B, L, Lk, E, num_heads, param_bytes, budget, w_isize)
    assert B % Bt == 0
    est = _per_step_vmem_bytes(Bt, L, Lk, E, num_heads, param_bytes, w_isize)
    vmem_limit = int(min(budget, max(2 * est, 8 << 20)))

    seq_spec = lambda length: pl.BlockSpec((Bt, length, E), lambda b: (b, 0, 0))
    out_specs = (pl.BlockSpec((Bt, L, E), lambda b: (b, 0, 0)),
                 pl.BlockSpec((Bt, L, Lk), lambda b: (b, 0, 0)))
    out_shape = (jax.ShapeDtypeStruct((B, L, E), jnp.float32),
                 jax.ShapeDtypeStruct((B, L, Lk), weights_dtype))

    # Advisory cost estimate for XLA's scheduler.
    flops = 2 * B * (L * E * E + 2 * Lk * E * E    # in-proj (q + k/v)
                     + 2 * L * Lk * E              # scores + context
                     + L * E * E                   # out-proj
                     + L * E * E)                  # final linear
    transcendentals = B * (num_heads * L * Lk + L * E)    # exp + tanh
    bytes_accessed = (4 * (Q.size + K.size + V.size + B * L * E)
                      + w_isize * B * L * Lk + param_bytes)
    cost = pl.CostEstimate(flops=flops, transcendentals=transcendentals,
                           bytes_accessed=bytes_accessed)

    kernel = functools.partial(encoder_kernel, num_heads)

    def build(single_buffer_params):
        if single_buffer_params:
            par_spec = lambda a: pl.BlockSpec(a.shape, lambda b: (0, 0),
                                              pipeline_mode=pl.Buffered(1))
        else:
            par_spec = lambda a: pl.BlockSpec(a.shape, lambda b: (0, 0))
        in_specs = ([seq_spec(L), seq_spec(Lk), seq_spec(Lk)]
                    + [par_spec(a) for a in param_list])
        return pl.pallas_call(
            kernel,
            grid=(B // Bt,),
            in_specs=in_specs,
            out_specs=out_specs,
            out_shape=out_shape,
            compiler_params=pltpu.CompilerParams(
                dimension_semantics=("parallel",),
                vmem_limit_bytes=vmem_limit),
            cost_estimate=cost)

    try:
        out = build(single_buffer_params=True)(Q, K, V, *param_list)
        jax.block_until_ready(out)
        return out
    except Exception:
        # pl.Buffered(1) single-buffering of grid-invariant params is a pure
        # perf hint; fall back to default double-buffering if it is rejected.
        out = build(single_buffer_params=False)(Q, K, V, *param_list)
        jax.block_until_ready(out)
        return out


if __name__ == "__main__":
    B, L, E, H = 2, 8, 32, 4
    key = jax.random.PRNGKey(0)
    kq, kk, kv, kp = jax.random.split(key, 4)
    Q = jax.random.normal(kq, (B, L, E), jnp.float32)
    K = jax.random.normal(kk, (B, L, E), jnp.float32)
    V = jax.random.normal(kv, (B, L, E), jnp.float32)
    params = make_params(kp, E)

    latent, weights = encoder_forward(Q, K, V, params, H)
    jax.block_until_ready((latent, weights))
    assert latent.shape == (B, L, E) and weights.shape == (B, L, L)
    assert bool(jnp.all(jnp.isfinite(latent))) and bool(jnp.all(jnp.isfinite(weights)))
    print("KERNEL_OK")
</pallas_src>

<mosaic_0001>
module attributes {stable_mosaic.version = 11 : i64} {
  func.func @encoder_kernel(%arg0: i32, %arg1: memref<1x8x32xf32, #tpu.memory_space<vmem>>, %arg2: memref<1x8x32xf32, #tpu.memory_space<vmem>>, %arg3: memref<1x8x32xf32, #tpu.memory_space<vmem>>, %arg4: memref<1x32xf32, #tpu.memory_space<vmem>>, %arg5: memref<1x32xf32, #tpu.memory_space<vmem>>, %arg6: memref<1x32xf32, #tpu.memory_space<vmem>>, %arg7: memref<1x32xf32, #tpu.memory_space<vmem>>, %arg8: memref<1x32xf32, #tpu.memory_space<vmem>>, %arg9: memref<1x32xf32, #tpu.memory_space<vmem>>, %arg10: memref<32x32xbf16, #tpu.memory_space<vmem>>, %arg11: memref<32x32xbf16, #tpu.memory_space<vmem>>, %arg12: memref<32x32xbf16, #tpu.memory_space<vmem>>, %arg13: memref<1x32xf32, #tpu.memory_space<vmem>>, %arg14: memref<1x32xf32, #tpu.memory_space<vmem>>, %arg15: memref<1x32xf32, #tpu.memory_space<vmem>>, %arg16: memref<32x32xbf16, #tpu.memory_space<vmem>>, %arg17: memref<1x32xf32, #tpu.memory_space<vmem>>, %arg18: memref<1x32xf32, #tpu.memory_space<vmem>>, %arg19: memref<1x32xf32, #tpu.memory_space<vmem>>, %arg20: memref<32x32xbf16, #tpu.memory_space<vmem>>, %arg21: memref<1x32xf32, #tpu.memory_space<vmem>>, %arg22: memref<1x8x32xf32, #tpu.memory_space<vmem>>, %arg23: memref<1x8x8xf32, #tpu.memory_space<vmem>>) attributes {dimension_semantics = [#tpu.dimension_semantics<parallel>], iteration_bounds = array<i64: 2>, scalar_prefetch = 0 : i64, scratch_operands = 0 : i64, tpu.core_type = #tpu.core_type<tc>, window_params = [{transform_indices = @transform_0, window_bounds = array<i64: 1, 8, 32>}, {transform_indices = @transform_1, window_bounds = array<i64: 1, 8, 32>}, {transform_indices = @transform_2, window_bounds = array<i64: 1, 8, 32>}, {pipeline_mode = #tpu.pipeline_mode<synchronous>, transform_indices = @transform_3, window_bounds = array<i64: 1, 32>}, {pipeline_mode = #tpu.pipeline_mode<synchronous>, transform_indices = @transform_4, window_bounds = array<i64: 1, 32>}, {pipeline_mode = #tpu.pipeline_mode<synchronous>, transform_indices = @transform_5, window_bounds = array<i64: 1, 32>}, {pipeline_mode = #tpu.pipeline_mode<synchronous>, transform_indices = @transform_6, window_bounds = array<i64: 1, 32>}, {pipeline_mode = #tpu.pipeline_mode<synchronous>, transform_indices = @transform_7, window_bounds = array<i64: 1, 32>}, {pipeline_mode = #tpu.pipeline_mode<synchronous>, transform_indices = @transform_8, window_bounds = array<i64: 1, 32>}, {pipeline_mode = #tpu.pipeline_mode<synchronous>, transform_indices = @transform_9, window_bounds = array<i64: 32, 32>}, {pipeline_mode = #tpu.pipeline_mode<synchronous>, transform_indices = @transform_10, window_bounds = array<i64: 32, 32>}, {pipeline_mode = #tpu.pipeline_mode<synchronous>, transform_indices = @transform_11, window_bounds = array<i64: 32, 32>}, {pipeline_mode = #tpu.pipeline_mode<synchronous>, transform_indices = @transform_12, window_bounds = array<i64: 1, 32>}, {pipeline_mode = #tpu.pipeline_mode<synchronous>, transform_indices = @transform_13, window_bounds = array<i64: 1, 32>}, {pipeline_mode = #tpu.pipeline_mode<synchronous>, transform_indices = @transform_14, window_bounds = array<i64: 1, 32>}, {pipeline_mode = #tpu.pipeline_mode<synchronous>, transform_indices = @transform_15, window_bounds = array<i64: 32, 32>}, {pipeline_mode = #tpu.pipeline_mode<synchronous>, transform_indices = @transform_16, window_bounds = array<i64: 1, 32>}, {pipeline_mode = #tpu.pipeline_mode<synchronous>, transform_indices = @transform_17, window_bounds = array<i64: 1, 32>}, {pipeline_mode = #tpu.pipeline_mode<synchronous>, transform_indices = @transform_18, window_bounds = array<i64: 1, 32>}, {pipeline_mode = #tpu.pipeline_mode<synchronous>, transform_indices = @transform_19, window_bounds = array<i64: 32, 32>}, {pipeline_mode = #tpu.pipeline_mode<synchronous>, transform_indices = @transform_20, window_bounds = array<i64: 1, 32>}, {transform_indices = @transform_21, window_bounds = array<i64: 1, 8, 32>}, {transform_indices = @transform_22, window_bounds = array<i64: 1, 8, 8>}]} {
    %c0 = arith.constant 0 : index
    %c0_0 = arith.constant 0 : index
    %c0_1 = arith.constant 0 : index
    %0 = vector.load %arg1[%c0, %c0_0, %c0_1] : memref<1x8x32xf32, #tpu.memory_space<vmem>>, vector<1x8x32xf32>
    %1 = vector.shape_cast %0 : vector<1x8x32xf32> to vector<8x32xf32>
    %c0_2 = arith.constant 0 : index
    %c0_3 = arith.constant 0 : index
    %c0_4 = arith.constant 0 : index
    %2 = vector.load %arg2[%c0_2, %c0_3, %c0_4] : memref<1x8x32xf32, #tpu.memory_space<vmem>>, vector<1x8x32xf32>
    %3 = vector.shape_cast %2 : vector<1x8x32xf32> to vector<8x32xf32>
    %c0_5 = arith.constant 0 : index
    %c0_6 = arith.constant 0 : index
    %c0_7 = arith.constant 0 : index
    %4 = vector.load %arg3[%c0_5, %c0_6, %c0_7] : memref<1x8x32xf32, #tpu.memory_space<vmem>>, vector<1x8x32xf32>
    %5 = vector.shape_cast %4 : vector<1x8x32xf32> to vector<8x32xf32>
    %c0_8 = arith.constant 0 : index
    %c0_9 = arith.constant 0 : index
    %6 = vector.load %arg4[%c0_8, %c0_9] : memref<1x32xf32, #tpu.memory_space<vmem>>, vector<1x32xf32>
    %c0_10 = arith.constant 0 : index
    %c0_11 = arith.constant 0 : index
    %7 = vector.load %arg5[%c0_10, %c0_11] : memref<1x32xf32, #tpu.memory_space<vmem>>, vector<1x32xf32>
    %cst = arith.constant dense<0.000000e+00> : vector<8xf32>
    %8 = vector.multi_reduction <add>, %1, %cst [1] : vector<8x32xf32> to vector<8xf32>
    %9 = vector.shape_cast %8 : vector<8xf32> to vector<8x1xf32>
    %cst_12 = arith.constant 3.200000e+01 : f32
    %10 = vector.broadcast %cst_12 : f32 to vector<8x1xf32>
    %11 = arith.divf %9, %10 : vector<8x1xf32>
    %12 = vector.broadcast %11 : vector<8x1xf32> to vector<8x32xf32>
    %13 = arith.subf %1, %12 : vector<8x32xf32>
    %14 = arith.mulf %13, %13 : vector<8x32xf32>
    %cst_13 = arith.constant dense<0.000000e+00> : vector<8xf32>
    %15 = vector.multi_reduction <add>, %14, %cst_13 [1] : vector<8x32xf32> to vector<8xf32>
    %16 = vector.shape_cast %15 : vector<8xf32> to vector<8x1xf32>
    %cst_14 = arith.constant 3.200000e+01 : f32
    %17 = vector.broadcast %cst_14 : f32 to vector<8x1xf32>
    %18 = arith.divf %16, %17 : vector<8x1xf32>
    %19 = vector.broadcast %11 : vector<8x1xf32> to vector<8x32xf32>
    %20 = arith.subf %1, %19 : vector<8x32xf32>
    %cst_15 = arith.constant 9.99999974E-6 : f32
    %21 = vector.broadcast %cst_15 : f32 to vector<8x1xf32>
    %22 = arith.addf %18, %21 : vector<8x1xf32>
    %23 = math.rsqrt %22 : vector<8x1xf32>
    %24 = vector.broadcast %23 : vector<8x1xf32> to vector<8x32xf32>
    %25 = arith.mulf %20, %24 : vector<8x32xf32>
    %26 = vector.broadcast %6 : vector<1x32xf32> to vector<8x32xf32>
    %27 = arith.mulf %25, %26 : vector<8x32xf32>
    %28 = vector.broadcast %7 : vector<1x32xf32> to vector<8x32xf32>
    %29 = arith.addf %27, %28 : vector<8x32xf32>
    %c0_16 = arith.constant 0 : index
    %c0_17 = arith.constant 0 : index
    %30 = vector.load %arg6[%c0_16, %c0_17] : memref<1x32xf32, #tpu.memory_space<vmem>>, vector<1x32xf32>
    %c0_18 = arith.constant 0 : index
    %c0_19 = arith.constant 0 : index
    %31 = vector.load %arg7[%c0_18, %c0_19] : memref<1x32xf32, #tpu.memory_space<vmem>>, vector<1x32xf32>
    %cst_20 = arith.constant dense<0.000000e+00> : vector<8xf32>
    %32 = vector.multi_reduction <add>, %3, %cst_20 [1] : vector<8x32xf32> to vector<8xf32>
    %33 = vector.shape_cast %32 : vector<8xf32> to vector<8x1xf32>
    %cst_21 = arith.constant 3.200000e+01 : f32
    %34 = vector.broadcast %cst_21 : f32 to vector<8x1xf32>
    %35 = arith.divf %33, %34 : vector<8x1xf32>
    %36 = vector.broadcast %35 : vector<8x1xf32> to vector<8x32xf32>
    %37 = arith.subf %3, %36 : vector<8x32xf32>
    %38 = arith.mulf %37, %37 : vector<8x32xf32>
    %cst_22 = arith.constant dense<0.000000e+00> : vector<8xf32>
    %39 = vector.multi_reduction <add>, %38, %cst_22 [1] : vector<8x32xf32> to vector<8xf32>
    %40 = vector.shape_cast %39 : vector<8xf32> to vector<8x1xf32>
    %cst_23 = arith.constant 3.200000e+01 : f32
    %41 = vector.broadcast %cst_23 : f32 to vector<8x1xf32>
    %42 = arith.divf %40, %41 : vector<8x1xf32>
    %43 = vector.broadcast %35 : vector<8x1xf32> to vector<8x32xf32>
    %44 = arith.subf %3, %43 : vector<8x32xf32>
    %cst_24 = arith.constant 9.99999974E-6 : f32
    %45 = vector.broadcast %cst_24 : f32 to vector<8x1xf32>
    %46 = arith.addf %42, %45 : vector<8x1xf32>
    %47 = math.rsqrt %46 : vector<8x1xf32>
    %48 = vector.broadcast %47 : vector<8x1xf32> to vector<8x32xf32>
    %49 = arith.mulf %44, %48 : vector<8x32xf32>
    %50 = vector.broadcast %30 : vector<1x32xf32> to vector<8x32xf32>
    %51 = arith.mulf %49, %50 : vector<8x32xf32>
    %52 = vector.broadcast %31 : vector<1x32xf32> to vector<8x32xf32>
    %53 = arith.addf %51, %52 : vector<8x32xf32>
    %c0_25 = arith.constant 0 : index
    %c0_26 = arith.constant 0 : index
    %54 = vector.load %arg8[%c0_25, %c0_26] : memref<1x32xf32, #tpu.memory_space<vmem>>, vector<1x32xf32>
    %c0_27 = arith.constant 0 : index
    %c0_28 = arith.constant 0 : index
    %55 = vector.load %arg9[%c0_27, %c0_28] : memref<1x32xf32, #tpu.memory_space<vmem>>, vector<1x32xf32>
    %cst_29 = arith.constant dense<0.000000e+00> : vector<8xf32>
    %56 = vector.multi_reduction <add>, %5, %cst_29 [1] : vector<8x32xf32> to vector<8xf32>
    %57 = vector.shape_cast %56 : vector<8xf32> to vector<8x1xf32>
    %cst_30 = arith.constant 3.200000e+01 : f32
    %58 = vector.broadcast %cst_30 : f32 to vector<8x1xf32>
    %59 = arith.divf %57, %58 : vector<8x1xf32>
    %60 = vector.broadcast %59 : vector<8x1xf32> to vector<8x32xf32>
    %61 = arith.subf %5, %60 : vector<8x32xf32>
    %62 = arith.mulf %61, %61 : vector<8x32xf32>
    %cst_31 = arith.constant dense<0.000000e+00> : vector<8xf32>
    %63 = vector.multi_reduction <add>, %62, %cst_31 [1] : vector<8x32xf32> to vector<8xf32>
    %64 = vector.shape_cast %63 : vector<8xf32> to vector<8x1xf32>
    %cst_32 = arith.constant 3.200000e+01 : f32
    %65 = vector.broadcast %cst_32 : f32 to vector<8x1xf32>
    %66 = arith.divf %64, %65 : vector<8x1xf32>
    %67 = vector.broadcast %59 : vector<8x1xf32> to vector<8x32xf32>
    %68 = arith.subf %5, %67 : vector<8x32xf32>
    %cst_33 = arith.constant 9.99999974E-6 : f32
    %69 = vector.broadcast %cst_33 : f32 to vector<8x1xf32>
    %70 = arith.addf %66, %69 : vector<8x1xf32>
    %71 = math.rsqrt %70 : vector<8x1xf32>
    %72 = vector.broadcast %71 : vector<8x1xf32> to vector<8x32xf32>
    %73 = arith.mulf %68, %72 : vector<8x32xf32>
    %74 = vector.broadcast %54 : vector<1x32xf32> to vector<8x32xf32>
    %75 = arith.mulf %73, %74 : vector<8x32xf32>
    %76 = vector.broadcast %55 : vector<1x32xf32> to vector<8x32xf32>
    %77 = arith.addf %75, %76 : vector<8x32xf32>
    %78 = arith.truncf %29 : vector<8x32xf32> to vector<8x32xbf16>
    %c0_34 = arith.constant 0 : index
    %c0_35 = arith.constant 0 : index
    %79 = vector.load %arg10[%c0_34, %c0_35] : memref<32x32xbf16, #tpu.memory_space<vmem>>, vector<32x32xbf16>
    %cst_36 = arith.constant dense<0.000000e+00> : vector<8x32xf32>
    %80 = tpu.matmul %78, %79, %cst_36 {dimension_numbers = #tpu.dot_dimension_numbers<[1], [0], [0], [1], [0, 0, 1, 1], [], []>} : vector<8x32xbf16>, vector<32x32xbf16>, vector<8x32xf32> -> vector<8x32xf32>
    %c0_37 = arith.constant 0 : index
    %c0_38 = arith.constant 0 : index
    %81 = vector.load %arg13[%c0_37, %c0_38] : memref<1x32xf32, #tpu.memory_space<vmem>>, vector<1x32xf32>
    %82 = vector.broadcast %81 : vector<1x32xf32> to vector<8x32xf32>
    %83 = arith.addf %80, %82 : vector<8x32xf32>
    %84 = arith.truncf %83 : vector<8x32xf32> to vector<8x32xbf16>
    %85 = arith.truncf %53 : vector<8x32xf32> to vector<8x32xbf16>
    %c0_39 = arith.constant 0 : index
    %c0_40 = arith.constant 0 : index
    %86 = vector.load %arg11[%c0_39, %c0_40] : memref<32x32xbf16, #tpu.memory_space<vmem>>, vector<32x32xbf16>
    %cst_41 = arith.constant dense<0.000000e+00> : vector<8x32xf32>
    %87 = tpu.matmul %85, %86, %cst_41 {dimension_numbers = #tpu.dot_dimension_numbers<[1], [0], [0], [1], [0, 0, 1, 1], [], []>} : vector<8x32xbf16>, vector<32x32xbf16>, vector<8x32xf32> -> vector<8x32xf32>
    %c0_42 = arith.constant 0 : index
    %c0_43 = arith.constant 0 : index
    %88 = vector.load %arg14[%c0_42, %c0_43] : memref<1x32xf32, #tpu.memory_space<vmem>>, vector<1x32xf32>
    %89 = vector.broadcast %88 : vector<1x32xf32> to vector<8x32xf32>
    %90 = arith.addf %87, %89 : vector<8x32xf32>
    %91 = arith.truncf %90 : vector<8x32xf32> to vector<8x32xbf16>
    %92 = arith.truncf %77 : vector<8x32xf32> to vector<8x32xbf16>
    %c0_44 = arith.constant 0 : index
    %c0_45 = arith.constant 0 : index
    %93 = vector.load %arg12[%c0_44, %c0_45] : memref<32x32xbf16, #tpu.memory_space<vmem>>, vector<32x32xbf16>
    %cst_46 = arith.constant dense<0.000000e+00> : vector<8x32xf32>
    %94 = tpu.matmul %92, %93, %cst_46 {dimension_numbers = #tpu.dot_dimension_numbers<[1], [0], [0], [1], [0, 0, 1, 1], [], []>} : vector<8x32xbf16>, vector<32x32xbf16>, vector<8x32xf32> -> vector<8x32xf32>
    %c0_47 = arith.constant 0 : index
    %c0_48 = arith.constant 0 : index
    %95 = vector.load %arg15[%c0_47, %c0_48] : memref<1x32xf32, #tpu.memory_space<vmem>>, vector<1x32xf32>
    %96 = vector.broadcast %95 : vector<1x32xf32> to vector<8x32xf32>
    %97 = arith.addf %94, %96 : vector<8x32xf32>
    %98 = arith.truncf %97 : vector<8x32xf32> to vector<8x32xbf16>
    %99 = vector.shape_cast %84 : vector<8x32xbf16> to vector<1x8x32xbf16>
    %100 = vector.extract_strided_slice %99 {offsets = [0, 0, 0], sizes = [1, 8, 8], strides = [1, 1, 1]} : vector<1x8x32xbf16> to vector<1x8x8xbf16>
    %101 = vector.extract_strided_slice %99 {offsets = [0, 0, 8], sizes = [1, 8, 8], strides = [1, 1, 1]} : vector<1x8x32xbf16> to vector<1x8x8xbf16>
    %102 = vector.extract_strided_slice %99 {offsets = [0, 0, 16], sizes = [1, 8, 8], strides = [1, 1, 1]} : vector<1x8x32xbf16> to vector<1x8x8xbf16>
    %103 = vector.extract_strided_slice %99 {offsets = [0, 0, 24], sizes = [1, 8, 8], strides = [1, 1, 1]} : vector<1x8x32xbf16> to vector<1x8x8xbf16>
    %104 = tpu.concatenate %100, %101, %102, %103 in 0 : vector<1x8x8xbf16>, vector<1x8x8xbf16>, vector<1x8x8xbf16>, vector<1x8x8xbf16> -> vector<4x8x8xbf16>
    %105 = vector.shape_cast %91 : vector<8x32xbf16> to vector<1x8x32xbf16>
    %106 = vector.extract_strided_slice %105 {offsets = [0, 0, 0], sizes = [1, 8, 8], strides = [1, 1, 1]} : vector<1x8x32xbf16> to vector<1x8x8xbf16>
    %107 = vector.extract_strided_slice %105 {offsets = [0, 0, 8], sizes = [1, 8, 8], strides = [1, 1, 1]} : vector<1x8x32xbf16> to vector<1x8x8xbf16>
    %108 = vector.extract_strided_slice %105 {offsets = [0, 0, 16], sizes = [1, 8, 8], strides = [1, 1, 1]} : vector<1x8x32xbf16> to vector<1x8x8xbf16>
    %109 = vector.extract_strided_slice %105 {offsets = [0, 0, 24], sizes = [1, 8, 8], strides = [1, 1, 1]} : vector<1x8x32xbf16> to vector<1x8x8xbf16>
    %110 = tpu.concatenate %106, %107, %108, %109 in 0 : vector<1x8x8xbf16>, vector<1x8x8xbf16>, vector<1x8x8xbf16>, vector<1x8x8xbf16> -> vector<4x8x8xbf16>
    %111 = vector.shape_cast %98 : vector<8x32xbf16> to vector<1x8x32xbf16>
    %112 = vector.extract_strided_slice %111 {offsets = [0, 0, 0], sizes = [1, 8, 8], strides = [1, 1, 1]} : vector<1x8x32xbf16> to vector<1x8x8xbf16>
    %113 = vector.extract_strided_slice %111 {offsets = [0, 0, 8], sizes = [1, 8, 8], strides = [1, 1, 1]} : vector<1x8x32xbf16> to vector<1x8x8xbf16>
    %114 = vector.extract_strided_slice %111 {offsets = [0, 0, 16], sizes = [1, 8, 8], strides = [1, 1, 1]} : vector<1x8x32xbf16> to vector<1x8x8xbf16>
    %115 = vector.extract_strided_slice %111 {offsets = [0, 0, 24], sizes = [1, 8, 8], strides = [1, 1, 1]} : vector<1x8x32xbf16> to vector<1x8x8xbf16>
    %116 = tpu.concatenate %112, %113, %114, %115 in 0 : vector<1x8x8xbf16>, vector<1x8x8xbf16>, vector<1x8x8xbf16>, vector<1x8x8xbf16> -> vector<4x8x8xbf16>
    "tpu.trace_start"() <{level = 10 : i32, message = "bqd,bkd->bqk"}> : () -> ()
    %cst_49 = arith.constant dense<0.000000e+00> : vector<4x8x8xf32>
    %117 = tpu.matmul %104, %110, %cst_49 {dimension_numbers = #tpu.dot_dimension_numbers<[2], [2], [1], [1], [0, 0, 0, 1, 1, 1], [0], [0]>} : vector<4x8x8xbf16>, vector<4x8x8xbf16>, vector<4x8x8xf32> -> vector<4x8x8xf32>
    "tpu.trace_stop"() : () -> ()
    %cst_50 = arith.constant dense<0xFF800000> : vector<4x8xf32>
    %118 = vector.multi_reduction <maximumf>, %117, %cst_50 [2] : vector<4x8x8xf32> to vector<4x8xf32>
    %119 = vector.shape_cast %118 : vector<4x8xf32> to vector<4x8x1xf32>
    %120 = vector.broadcast %119 : vector<4x8x1xf32> to vector<4x8x8xf32>
    %121 = arith.subf %117, %120 : vector<4x8x8xf32>
    %122 = math.exp %121 : vector<4x8x8xf32>
    %cst_51 = arith.constant dense<0.000000e+00> : vector<4x8xf32>
    %123 = vector.multi_reduction <add>, %122, %cst_51 [2] : vector<4x8x8xf32> to vector<4x8xf32>
    %124 = vector.shape_cast %123 : vector<4x8xf32> to vector<4x8x1xf32>
    %125 = vector.broadcast %124 : vector<4x8x1xf32> to vector<4x8x8xf32>
    %126 = arith.divf %122, %125 : vector<4x8x8xf32>
    %127 = arith.truncf %126 : vector<4x8x8xf32> to vector<4x8x8xbf16>
    "tpu.trace_start"() <{level = 10 : i32, message = "bqk,bkd->bqd"}> : () -> ()
    %cst_52 = arith.constant dense<0.000000e+00> : vector<4x8x8xf32>
    %128 = tpu.matmul %127, %116, %cst_52 {dimension_numbers = #tpu.dot_dimension_numbers<[2], [1], [1], [2], [0, 0, 0, 1, 1, 2], [0], [0]>} : vector<4x8x8xbf16>, vector<4x8x8xbf16>, vector<4x8x8xf32> -> vector<4x8x8xf32>
    "tpu.trace_stop"() : () -> ()
    %129 = vector.shape_cast %126 : vector<4x8x8xf32> to vector<4x1x8x8xf32>
    %cst_53 = arith.constant dense<0.000000e+00> : vector<1x8x8xf32>
    %130 = vector.multi_reduction <add>, %129, %cst_53 [0] : vector<4x1x8x8xf32> to vector<1x8x8xf32>
    %cst_54 = arith.constant 4.000000e+00 : f32
    %131 = vector.broadcast %cst_54 : f32 to vector<1x8x8xf32>
    %132 = arith.divf %130, %131 : vector<1x8x8xf32>
    %133 = arith.truncf %128 : vector<4x8x8xf32> to vector<4x8x8xbf16>
    %134 = vector.shape_cast %133 : vector<4x8x8xbf16> to vector<4x1x8x8xbf16>
    %135 = vector.extract_strided_slice %134 {offsets = [0, 0, 0, 0], sizes = [1, 1, 8, 8], strides = [1, 1, 1, 1]} : vector<4x1x8x8xbf16> to vector<1x1x8x8xbf16>
    %136 = vector.shape_cast %135 : vector<1x1x8x8xbf16> to vector<1x8x8xbf16>
    %137 = vector.extract_strided_slice %134 {offsets = [1, 0, 0, 0], sizes = [1, 1, 8, 8], strides = [1, 1, 1, 1]} : vector<4x1x8x8xbf16> to vector<1x1x8x8xbf16>
    %138 = vector.shape_cast %137 : vector<1x1x8x8xbf16> to vector<1x8x8xbf16>
    %139 = vector.extract_strided_slice %134 {offsets = [2, 0, 0, 0], sizes = [1, 1, 8, 8], strides = [1, 1, 1, 1]} : vector<4x1x8x8xbf16> to vector<1x1x8x8xbf16>
    %140 = vector.shape_cast %139 : vector<1x1x8x8xbf16> to vector<1x8x8xbf16>
    %141 = vector.extract_strided_slice %134 {offsets = [3, 0, 0, 0], sizes = [1, 1, 8, 8], strides = [1, 1, 1, 1]} : vector<4x1x8x8xbf16> to vector<1x1x8x8xbf16>
    %142 = vector.shape_cast %141 : vector<1x1x8x8xbf16> to vector<1x8x8xbf16>
    %143 = tpu.concatenate %136, %138, %140, %142 in 2 : vector<1x8x8xbf16>, vector<1x8x8xbf16>, vector<1x8x8xbf16>, vector<1x8x8xbf16> -> vector<1x8x32xbf16>
    %144 = vector.shape_cast %143 : vector<1x8x32xbf16> to vector<8x32xbf16>
    %c0_55 = arith.constant 0 : index
    %c0_56 = arith.constant 0 : index
    %145 = vector.load %arg16[%c0_55, %c0_56] : memref<32x32xbf16, #tpu.memory_space<vmem>>, vector<32x32xbf16>
    %cst_57 = arith.constant dense<0.000000e+00> : vector<8x32xf32>
    %146 = tpu.matmul %144, %145, %cst_57 {dimension_numbers = #tpu.dot_dimension_numbers<[1], [0], [0], [1], [0, 0, 1, 1], [], []>} : vector<8x32xbf16>, vector<32x32xbf16>, vector<8x32xf32> -> vector<8x32xf32>
    %c0_58 = arith.constant 0 : index
    %c0_59 = arith.constant 0 : index
    %147 = vector.load %arg17[%c0_58, %c0_59] : memref<1x32xf32, #tpu.memory_space<vmem>>, vector<1x32xf32>
    %148 = vector.broadcast %147 : vector<1x32xf32> to vector<8x32xf32>
    %149 = arith.addf %146, %148 : vector<8x32xf32>
    %c0_60 = arith.constant 0 : index
    %c0_61 = arith.constant 0 : index
    %150 = vector.load %arg18[%c0_60, %c0_61] : memref<1x32xf32, #tpu.memory_space<vmem>>, vector<1x32xf32>
    %c0_62 = arith.constant 0 : index
    %c0_63 = arith.constant 0 : index
    %151 = vector.load %arg19[%c0_62, %c0_63] : memref<1x32xf32, #tpu.memory_space<vmem>>, vector<1x32xf32>
    %cst_64 = arith.constant dense<0.000000e+00> : vector<8xf32>
    %152 = vector.multi_reduction <add>, %149, %cst_64 [1] : vector<8x32xf32> to vector<8xf32>
    %153 = vector.shape_cast %152 : vector<8xf32> to vector<8x1xf32>
    %cst_65 = arith.constant 3.200000e+01 : f32
    %154 = vector.broadcast %cst_65 : f32 to vector<8x1xf32>
    %155 = arith.divf %153, %154 : vector<8x1xf32>
    %156 = vector.broadcast %155 : vector<8x1xf32> to vector<8x32xf32>
    %157 = arith.subf %149, %156 : vector<8x32xf32>
    %158 = arith.mulf %157, %157 : vector<8x32xf32>
    %cst_66 = arith.constant dense<0.000000e+00> : vector<8xf32>
    %159 = vector.multi_reduction <add>, %158, %cst_66 [1] : vector<8x32xf32> to vector<8xf32>
    %160 = vector.shape_cast %159 : vector<8xf32> to vector<8x1xf32>
    %cst_67 = arith.constant 3.200000e+01 : f32
    %161 = vector.broadcast %cst_67 : f32 to vector<8x1xf32>
    %162 = arith.divf %160, %161 : vector<8x1xf32>
    %163 = vector.broadcast %155 : vector<8x1xf32> to vector<8x32xf32>
    %164 = arith.subf %149, %163 : vector<8x32xf32>
    %cst_68 = arith.constant 9.99999974E-6 : f32
    %165 = vector.broadcast %cst_68 : f32 to vector<8x1xf32>
    %166 = arith.addf %162, %165 : vector<8x1xf32>
    %167 = math.rsqrt %166 : vector<8x1xf32>
    %168 = vector.broadcast %167 : vector<8x1xf32> to vector<8x32xf32>
    %169 = arith.mulf %164, %168 : vector<8x32xf32>
    %170 = vector.broadcast %150 : vector<1x32xf32> to vector<8x32xf32>
    %171 = arith.mulf %169, %170 : vector<8x32xf32>
    %172 = vector.broadcast %151 : vector<1x32xf32> to vector<8x32xf32>
    %173 = arith.addf %171, %172 : vector<8x32xf32>
    %174 = arith.addf %29, %173 : vector<8x32xf32>
    %175 = arith.truncf %174 : vector<8x32xf32> to vector<8x32xbf16>
    %c0_69 = arith.constant 0 : index
    %c0_70 = arith.constant 0 : index
    %176 = vector.load %arg20[%c0_69, %c0_70] : memref<32x32xbf16, #tpu.memory_space<vmem>>, vector<32x32xbf16>
    %cst_71 = arith.constant dense<0.000000e+00> : vector<8x32xf32>
    %177 = tpu.matmul %175, %176, %cst_71 {dimension_numbers = #tpu.dot_dimension_numbers<[1], [0], [0], [1], [0, 0, 1, 1], [], []>} : vector<8x32xbf16>, vector<32x32xbf16>, vector<8x32xf32> -> vector<8x32xf32>
    %c0_72 = arith.constant 0 : index
    %c0_73 = arith.constant 0 : index
    %178 = vector.load %arg21[%c0_72, %c0_73] : memref<1x32xf32, #tpu.memory_space<vmem>>, vector<1x32xf32>
    %179 = vector.broadcast %178 : vector<1x32xf32> to vector<8x32xf32>
    %180 = arith.addf %177, %179 : vector<8x32xf32>
    %cst_74 = arith.constant 5.000000e-01 : f32
    %181 = vector.broadcast %cst_74 : f32 to vector<8x32xf32>
    %182 = arith.mulf %181, %180 : vector<8x32xf32>
    %183 = arith.mulf %180, %180 : vector<8x32xf32>
    %184 = arith.mulf %183, %180 : vector<8x32xf32>
    %cst_75 = arith.constant 4.471500e-02 : f32
    %185 = vector.broadcast %cst_75 : f32 to vector<8x32xf32>
    %186 = arith.mulf %185, %184 : vector<8x32xf32>
    %187 = arith.addf %180, %186 : vector<8x32xf32>
    %cst_76 = arith.constant 0.797884583 : f32
    %188 = vector.broadcast %cst_76 : f32 to vector<8x32xf32>
    %189 = arith.mulf %188, %187 : vector<8x32xf32>
    %190 = math.tanh %189 : vector<8x32xf32>
    %cst_77 = arith.constant 1.000000e+00 : f32
    %191 = vector.broadcast %cst_77 : f32 to vector<8x32xf32>
    %192 = arith.addf %191, %190 : vector<8x32xf32>
    %193 = arith.mulf %182, %192 : vector<8x32xf32>
    %194 = arith.addf %174, %193 : vector<8x32xf32>
    %195 = vector.shape_cast %194 : vector<8x32xf32> to vector<1x8x32xf32>
    %c0_78 = arith.constant 0 : index
    %c0_79 = arith.constant 0 : index
    %c0_80 = arith.constant 0 : index
    %196 = vector.load %arg22[%c0_78, %c0_79, %c0_80] : memref<1x8x32xf32, #tpu.memory_space<vmem>>, vector<1x8x32xf32>
    tpu.vector_store %arg22[%c0_78, %c0_79, %c0_80], %195 {strides = array<i32>} : memref<1x8x32xf32, #tpu.memory_space<vmem>>, vector<1x8x32xf32>,
    %c0_81 = arith.constant 0 : index
    %c0_82 = arith.constant 0 : index
    %c0_83 = arith.constant 0 : index
    %197 = vector.load %arg23[%c0_81, %c0_82, %c0_83] : memref<1x8x8xf32, #tpu.memory_space<vmem>>, vector<1x8x8xf32>
    tpu.vector_store %arg23[%c0_81, %c0_82, %c0_83], %132 {strides = array<i32>} : memref<1x8x8xf32, #tpu.memory_space<vmem>>, vector<1x8x8xf32>,
    return
  }
  func.func @transform_0(%arg0: i32) -> (i32, i32, i32) {
    %c0_i32 = arith.constant 0 : i32
    %c0_i32_0 = arith.constant 0 : i32
    %c0_i32_1 = arith.constant 0 : i32
    return %arg0, %c0_i32, %c0_i32_0 : i32, i32, i32
  }
  func.func @transform_1(%arg0: i32) -> (i32, i32, i32) {
    %c0_i32 = arith.constant 0 : i32
    %c0_i32_0 = arith.constant 0 : i32
    %c0_i32_1 = arith.constant 0 : i32
    return %arg0, %c0_i32, %c0_i32_0 : i32, i32, i32
  }
  func.func @transform_2(%arg0: i32) -> (i32, i32, i32) {
    %c0_i32 = arith.constant 0 : i32
    %c0_i32_0 = arith.constant 0 : i32
    %c0_i32_1 = arith.constant 0 : i32
    return %arg0, %c0_i32, %c0_i32_0 : i32, i32, i32
  }
  func.func @transform_3(%arg0: i32) -> (i32, i32) {
    %c0_i32 = arith.constant 0 : i32
    %c0_i32_0 = arith.constant 0 : i32
    %c0_i32_1 = arith.constant 0 : i32
    return %c0_i32, %c0_i32_0 : i32, i32
  }
  func.func @transform_4(%arg0: i32) -> (i32, i32) {
    %c0_i32 = arith.constant 0 : i32
    %c0_i32_0 = arith.constant 0 : i32
    %c0_i32_1 = arith.constant 0 : i32
    return %c0_i32, %c0_i32_0 : i32, i32
  }
  func.func @transform_5(%arg0: i32) -> (i32, i32) {
    %c0_i32 = arith.constant 0 : i32
    %c0_i32_0 = arith.constant 0 : i32
    %c0_i32_1 = arith.constant 0 : i32
    return %c0_i32, %c0_i32_0 : i32, i32
  }
  func.func @transform_6(%arg0: i32) -> (i32, i32) {
    %c0_i32 = arith.constant 0 : i32
    %c0_i32_0 = arith.constant 0 : i32
    %c0_i32_1 = arith.constant 0 : i32
    return %c0_i32, %c0_i32_0 : i32, i32
  }
  func.func @transform_7(%arg0: i32) -> (i32, i32) {
    %c0_i32 = arith.constant 0 : i32
    %c0_i32_0 = arith.constant 0 : i32
    %c0_i32_1 = arith.constant 0 : i32
    return %c0_i32, %c0_i32_0 : i32, i32
  }
  func.func @transform_8(%arg0: i32) -> (i32, i32) {
    %c0_i32 = arith.constant 0 : i32
    %c0_i32_0 = arith.constant 0 : i32
    %c0_i32_1 = arith.constant 0 : i32
    return %c0_i32, %c0_i32_0 : i32, i32
  }
  func.func @transform_9(%arg0: i32) -> (i32, i32) {
    %c0_i32 = arith.constant 0 : i32
    %c0_i32_0 = arith.constant 0 : i32
    %c0_i32_1 = arith.constant 0 : i32
    return %c0_i32, %c0_i32_0 : i32, i32
  }
  func.func @transform_10(%arg0: i32) -> (i32, i32) {
    %c0_i32 = arith.constant 0 : i32
    %c0_i32_0 = arith.constant 0 : i32
    %c0_i32_1 = arith.constant 0 : i32
    return %c0_i32, %c0_i32_0 : i32, i32
  }
  func.func @transform_11(%arg0: i32) -> (i32, i32) {
    %c0_i32 = arith.constant 0 : i32
    %c0_i32_0 = arith.constant 0 : i32
    %c0_i32_1 = arith.constant 0 : i32
    return %c0_i32, %c0_i32_0 : i32, i32
  }
  func.func @transform_12(%arg0: i32) -> (i32, i32) {
    %c0_i32 = arith.constant 0 : i32
    %c0_i32_0 = arith.constant 0 : i32
    %c0_i32_1 = arith.constant 0 : i32
    return %c0_i32, %c0_i32_0 : i32, i32
  }
  func.func @transform_13(%arg0: i32) -> (i32, i32) {
    %c0_i32 = arith.constant 0 : i32
    %c0_i32_0 = arith.constant 0 : i32
    %c0_i32_1 = arith.constant 0 : i32
    return %c0_i32, %c0_i32_0 : i32, i32
  }
  func.func @transform_14(%arg0: i32) -> (i32, i32) {
    %c0_i32 = arith.constant 0 : i32
    %c0_i32_0 = arith.constant 0 : i32
    %c0_i32_1 = arith.constant 0 : i32
    return %c0_i32, %c0_i32_0 : i32, i32
  }
  func.func @transform_15(%arg0: i32) -> (i32, i32) {
    %c0_i32 = arith.constant 0 : i32
    %c0_i32_0 = arith.constant 0 : i32
    %c0_i32_1 = arith.constant 0 : i32
    return %c0_i32, %c0_i32_0 : i32, i32
  }
  func.func @transform_16(%arg0: i32) -> (i32, i32) {
    %c0_i32 = arith.constant 0 : i32
    %c0_i32_0 = arith.constant 0 : i32
    %c0_i32_1 = arith.constant 0 : i32
    return %c0_i32, %c0_i32_0 : i32, i32
  }
  func.func @transform_17(%arg0: i32) -> (i32, i32) {
    %c0_i32 = arith.constant 0 : i32
    %c0_i32_0 = arith.constant 0 : i32
    %c0_i32_1 = arith.constant 0 : i32
    return %c0_i32, %c0_i32_0 : i32, i32
  }
  func.func @transform_18(%arg0: i32) -> (i32, i32) {
    %c0_i32 = arith.constant 0 : i32
    %c0_i32_0 = arith.constant 0 : i32
    %c0_i32_1 = arith.constant 0 : i32
    return %c0_i32, %c0_i32_0 : i32, i32
  }
  func.func @transform_19(%arg0: i32) -> (i32, i32) {
    %c0_i32 = arith.constant 0 : i32
    %c0_i32_0 = arith.constant 0 : i32
    %c0_i32_1 = arith.constant 0 : i32
    return %c0_i32, %c0_i32_0 : i32, i32
  }
  func.func @transform_20(%arg0: i32) -> (i32, i32) {
    %c0_i32 = arith.constant 0 : i32
    %c0_i32_0 = arith.constant 0 : i32
    %c0_i32_1 = arith.constant 0 : i32
    return %c0_i32, %c0_i32_0 : i32, i32
  }
  func.func @transform_21(%arg0: i32) -> (i32, i32, i32) {
    %c0_i32 = arith.constant 0 : i32
    %c0_i32_0 = arith.constant 0 : i32
    %c0_i32_1 = arith.constant 0 : i32
    return %arg0, %c0_i32, %c0_i32_0 : i32, i32, i32
  }
  func.func @transform_22(%arg0: i32) -> (i32, i32, i32) {
    %c0_i32 = arith.constant 0 : i32
    %c0_i32_0 = arith.constant 0 : i32
    %c0_i32_1 = arith.constant 0 : i32
    return %arg0, %c0_i32, %c0_i32_0 : i32, i32, i32
  }
}

module attributes {stable_mosaic.version = 11 : i64} {
  func.func @encoder_kernel(%arg0: i32, %arg1: memref<1x8x32xf32, #tpu.memory_space<vmem>>, %arg2: memref<1x8x32xf32, #tpu.memory_space<vmem>>, %arg3: memref<1x8x32xf32, #tpu.memory_space<vmem>>, %arg4: memref<1x32xf32, #tpu.memory_space<vmem>>, %arg5: memref<1x32xf32, #tpu.memory_space<vmem>>, %arg6: memref<1x32xf32, #tpu.memory_space<vmem>>, %arg7: memref<1x32xf32, #tpu.memory_space<vmem>>, %arg8: memref<1x32xf32, #tpu.memory_space<vmem>>, %arg9: memref<1x32xf32, #tpu.memory_space<vmem>>, %arg10: memref<32x32xbf16, #tpu.memory_space<vmem>>, %arg11: memref<32x32xbf16, #tpu.memory_space<vmem>>, %arg12: memref<32x32xbf16, #tpu.memory_space<vmem>>, %arg13: memref<1x32xf32, #tpu.memory_space<vmem>>, %arg14: memref<1x32xf32, #tpu.memory_space<vmem>>, %arg15: memref<1x32xf32, #tpu.memory_space<vmem>>, %arg16: memref<32x32xbf16, #tpu.memory_space<vmem>>, %arg17: memref<1x32xf32, #tpu.memory_space<vmem>>, %arg18: memref<1x32xf32, #tpu.memory_space<vmem>>, %arg19: memref<1x32xf32, #tpu.memory_space<vmem>>, %arg20: memref<32x32xbf16, #tpu.memory_space<vmem>>, %arg21: memref<1x32xf32, #tpu.memory_space<vmem>>, %arg22: memref<1x8x32xf32, #tpu.memory_space<vmem>>, %arg23: memref<1x8x8xf32, #tpu.memory_space<vmem>>) attributes {dimension_semantics = [#tpu.dimension_semantics<parallel>], iteration_bounds = array<i64: 2>, scalar_prefetch = 0 : i64, scratch_operands = 0 : i64, tpu.core_type = #tpu.core_type<tc>, window_params = [{transform_indices = @transform_0, window_bounds = array<i64: 1, 8, 32>}, {transform_indices = @transform_1, window_bounds = array<i64: 1, 8, 32>}, {transform_indices = @transform_2, window_bounds = array<i64: 1, 8, 32>}, {pipeline_mode = #tpu.pipeline_mode<synchronous>, transform_indices = @transform_3, window_bounds = array<i64: 1, 32>}, {pipeline_mode = #tpu.pipeline_mode<synchronous>, transform_indices = @transform_4, window_bounds = array<i64: 1, 32>}, {pipeline_mode = #tpu.pipeline_mode<synchronous>, transform_indices = @transform_5, window_bounds = array<i64: 1, 32>}, {pipeline_mode = #tpu.pipeline_mode<synchronous>, transform_indices = @transform_6, window_bounds = array<i64: 1, 32>}, {pipeline_mode = #tpu.pipeline_mode<synchronous>, transform_indices = @transform_7, window_bounds = array<i64: 1, 32>}, {pipeline_mode = #tpu.pipeline_mode<synchronous>, transform_indices = @transform_8, window_bounds = array<i64: 1, 32>}, {pipeline_mode = #tpu.pipeline_mode<synchronous>, transform_indices = @transform_9, window_bounds = array<i64: 32, 32>}, {pipeline_mode = #tpu.pipeline_mode<synchronous>, transform_indices = @transform_10, window_bounds = array<i64: 32, 32>}, {pipeline_mode = #tpu.pipeline_mode<synchronous>, transform_indices = @transform_11, window_bounds = array<i64: 32, 32>}, {pipeline_mode = #tpu.pipeline_mode<synchronous>, transform_indices = @transform_12, window_bounds = array<i64: 1, 32>}, {pipeline_mode = #tpu.pipeline_mode<synchronous>, transform_indices = @transform_13, window_bounds = array<i64: 1, 32>}, {pipeline_mode = #tpu.pipeline_mode<synchronous>, transform_indices = @transform_14, window_bounds = array<i64: 1, 32>}, {pipeline_mode = #tpu.pipeline_mode<synchronous>, transform_indices = @transform_15, window_bounds = array<i64: 32, 32>}, {pipeline_mode = #tpu.pipeline_mode<synchronous>, transform_indices = @transform_16, window_bounds = array<i64: 1, 32>}, {pipeline_mode = #tpu.pipeline_mode<synchronous>, transform_indices = @transform_17, window_bounds = array<i64: 1, 32>}, {pipeline_mode = #tpu.pipeline_mode<synchronous>, transform_indices = @transform_18, window_bounds = array<i64: 1, 32>}, {pipeline_mode = #tpu.pipeline_mode<synchronous>, transform_indices = @transform_19, window_bounds = array<i64: 32, 32>}, {pipeline_mode = #tpu.pipeline_mode<synchronous>, transform_indices = @transform_20, window_bounds = array<i64: 1, 32>}, {transform_indices = @transform_21, window_bounds = array<i64: 1, 8, 32>}, {transform_indices = @transform_22, window_bounds = array<i64: 1, 8, 8>}]} {
    %c0 = arith.constant 0 : index
    %c0_0 = arith.constant 0 : index
    %c0_1 = arith.constant 0 : index
    %0 = vector.load %arg1[%c0, %c0_0, %c0_1] : memref<1x8x32xf32, #tpu.memory_space<vmem>>, vector<1x8x32xf32>
    %1 = vector.shape_cast %0 : vector<1x8x32xf32> to vector<8x32xf32>
    %c0_2 = arith.constant 0 : index
    %c0_3 = arith.constant 0 : index
    %c0_4 = arith.constant 0 : index
    %2 = vector.load %arg2[%c0_2, %c0_3, %c0_4] : memref<1x8x32xf32, #tpu.memory_space<vmem>>, vector<1x8x32xf32>
    %3 = vector.shape_cast %2 : vector<1x8x32xf32> to vector<8x32xf32>
    %c0_5 = arith.constant 0 : index
    %c0_6 = arith.constant 0 : index
    %c0_7 = arith.constant 0 : index
    %4 = vector.load %arg3[%c0_5, %c0_6, %c0_7] : memref<1x8x32xf32, #tpu.memory_space<vmem>>, vector<1x8x32xf32>
    %5 = vector.shape_cast %4 : vector<1x8x32xf32> to vector<8x32xf32>
    %c0_8 = arith.constant 0 : index
    %c0_9 = arith.constant 0 : index
    %6 = vector.load %arg4[%c0_8, %c0_9] : memref<1x32xf32, #tpu.memory_space<vmem>>, vector<1x32xf32>
    %c0_10 = arith.constant 0 : index
    %c0_11 = arith.constant 0 : index
    %7 = vector.load %arg5[%c0_10, %c0_11] : memref<1x32xf32, #tpu.memory_space<vmem>>, vector<1x32xf32>
    %cst = arith.constant dense<0.000000e+00> : vector<8xf32>
    %8 = vector.multi_reduction <add>, %1, %cst [1] : vector<8x32xf32> to vector<8xf32>
    %9 = vector.shape_cast %8 : vector<8xf32> to vector<8x1xf32>
    %cst_12 = arith.constant 3.200000e+01 : f32
    %10 = vector.broadcast %cst_12 : f32 to vector<8x1xf32>
    %11 = arith.divf %9, %10 : vector<8x1xf32>
    %12 = vector.broadcast %11 : vector<8x1xf32> to vector<8x32xf32>
    %13 = arith.subf %1, %12 : vector<8x32xf32>
    %14 = arith.mulf %13, %13 : vector<8x32xf32>
    %cst_13 = arith.constant dense<0.000000e+00> : vector<8xf32>
    %15 = vector.multi_reduction <add>, %14, %cst_13 [1] : vector<8x32xf32> to vector<8xf32>
    %16 = vector.shape_cast %15 : vector<8xf32> to vector<8x1xf32>
    %cst_14 = arith.constant 3.200000e+01 : f32
    %17 = vector.broadcast %cst_14 : f32 to vector<8x1xf32>
    %18 = arith.divf %16, %17 : vector<8x1xf32>
    %19 = vector.broadcast %11 : vector<8x1xf32> to vector<8x32xf32>
    %20 = arith.subf %1, %19 : vector<8x32xf32>
    %cst_15 = arith.constant 9.99999974E-6 : f32
    %21 = vector.broadcast %cst_15 : f32 to vector<8x1xf32>
    %22 = arith.addf %18, %21 : vector<8x1xf32>
    %23 = math.rsqrt %22 : vector<8x1xf32>
    %24 = vector.broadcast %23 : vector<8x1xf32> to vector<8x32xf32>
    %25 = arith.mulf %20, %24 : vector<8x32xf32>
    %26 = vector.broadcast %6 : vector<1x32xf32> to vector<8x32xf32>
    %27 = arith.mulf %25, %26 : vector<8x32xf32>
    %28 = vector.broadcast %7 : vector<1x32xf32> to vector<8x32xf32>
    %29 = arith.addf %27, %28 : vector<8x32xf32>
    %c0_16 = arith.constant 0 : index
    %c0_17 = arith.constant 0 : index
    %30 = vector.load %arg6[%c0_16, %c0_17] : memref<1x32xf32, #tpu.memory_space<vmem>>, vector<1x32xf32>
    %c0_18 = arith.constant 0 : index
    %c0_19 = arith.constant 0 : index
    %31 = vector.load %arg7[%c0_18, %c0_19] : memref<1x32xf32, #tpu.memory_space<vmem>>, vector<1x32xf32>
    %cst_20 = arith.constant dense<0.000000e+00> : vector<8xf32>
    %32 = vector.multi_reduction <add>, %3, %cst_20 [1] : vector<8x32xf32> to vector<8xf32>
    %33 = vector.shape_cast %32 : vector<8xf32> to vector<8x1xf32>
    %cst_21 = arith.constant 3.200000e+01 : f32
    %34 = vector.broadcast %cst_21 : f32 to vector<8x1xf32>
    %35 = arith.divf %33, %34 : vector<8x1xf32>
    %36 = vector.broadcast %35 : vector<8x1xf32> to vector<8x32xf32>
    %37 = arith.subf %3, %36 : vector<8x32xf32>
    %38 = arith.mulf %37, %37 : vector<8x32xf32>
    %cst_22 = arith.constant dense<0.000000e+00> : vector<8xf32>
    %39 = vector.multi_reduction <add>, %38, %cst_22 [1] : vector<8x32xf32> to vector<8xf32>
    %40 = vector.shape_cast %39 : vector<8xf32> to vector<8x1xf32>
    %cst_23 = arith.constant 3.200000e+01 : f32
    %41 = vector.broadcast %cst_23 : f32 to vector<8x1xf32>
    %42 = arith.divf %40, %41 : vector<8x1xf32>
    %43 = vector.broadcast %35 : vector<8x1xf32> to vector<8x32xf32>
    %44 = arith.subf %3, %43 : vector<8x32xf32>
    %cst_24 = arith.constant 9.99999974E-6 : f32
    %45 = vector.broadcast %cst_24 : f32 to vector<8x1xf32>
    %46 = arith.addf %42, %45 : vector<8x1xf32>
    %47 = math.rsqrt %46 : vector<8x1xf32>
    %48 = vector.broadcast %47 : vector<8x1xf32> to vector<8x32xf32>
    %49 = arith.mulf %44, %48 : vector<8x32xf32>
    %50 = vector.broadcast %30 : vector<1x32xf32> to vector<8x32xf32>
    %51 = arith.mulf %49, %50 : vector<8x32xf32>
    %52 = vector.broadcast %31 : vector<1x32xf32> to vector<8x32xf32>
    %53 = arith.addf %51, %52 : vector<8x32xf32>
    %c0_25 = arith.constant 0 : index
    %c0_26 = arith.constant 0 : index
    %54 = vector.load %arg8[%c0_25, %c0_26] : memref<1x32xf32, #tpu.memory_space<vmem>>, vector<1x32xf32>
    %c0_27 = arith.constant 0 : index
    %c0_28 = arith.constant 0 : index
    %55 = vector.load %arg9[%c0_27, %c0_28] : memref<1x32xf32, #tpu.memory_space<vmem>>, vector<1x32xf32>
    %cst_29 = arith.constant dense<0.000000e+00> : vector<8xf32>
    %56 = vector.multi_reduction <add>, %5, %cst_29 [1] : vector<8x32xf32> to vector<8xf32>
    %57 = vector.shape_cast %56 : vector<8xf32> to vector<8x1xf32>
    %cst_30 = arith.constant 3.200000e+01 : f32
    %58 = vector.broadcast %cst_30 : f32 to vector<8x1xf32>
    %59 = arith.divf %57, %58 : vector<8x1xf32>
    %60 = vector.broadcast %59 : vector<8x1xf32> to vector<8x32xf32>
    %61 = arith.subf %5, %60 : vector<8x32xf32>
    %62 = arith.mulf %61, %61 : vector<8x32xf32>
    %cst_31 = arith.constant dense<0.000000e+00> : vector<8xf32>
    %63 = vector.multi_reduction <add>, %62, %cst_31 [1] : vector<8x32xf32> to vector<8xf32>
    %64 = vector.shape_cast %63 : vector<8xf32> to vector<8x1xf32>
    %cst_32 = arith.constant 3.200000e+01 : f32
    %65 = vector.broadcast %cst_32 : f32 to vector<8x1xf32>
    %66 = arith.divf %64, %65 : vector<8x1xf32>
    %67 = vector.broadcast %59 : vector<8x1xf32> to vector<8x32xf32>
    %68 = arith.subf %5, %67 : vector<8x32xf32>
    %cst_33 = arith.constant 9.99999974E-6 : f32
    %69 = vector.broadcast %cst_33 : f32 to vector<8x1xf32>
    %70 = arith.addf %66, %69 : vector<8x1xf32>
    %71 = math.rsqrt %70 : vector<8x1xf32>
    %72 = vector.broadcast %71 : vector<8x1xf32> to vector<8x32xf32>
    %73 = arith.mulf %68, %72 : vector<8x32xf32>
    %74 = vector.broadcast %54 : vector<1x32xf32> to vector<8x32xf32>
    %75 = arith.mulf %73, %74 : vector<8x32xf32>
    %76 = vector.broadcast %55 : vector<1x32xf32> to vector<8x32xf32>
    %77 = arith.addf %75, %76 : vector<8x32xf32>
    %78 = arith.truncf %29 : vector<8x32xf32> to vector<8x32xbf16>
    %c0_34 = arith.constant 0 : index
    %c0_35 = arith.constant 0 : index
    %79 = vector.load %arg10[%c0_34, %c0_35] : memref<32x32xbf16, #tpu.memory_space<vmem>>, vector<32x32xbf16>
    %cst_36 = arith.constant dense<0.000000e+00> : vector<8x32xf32>
    %80 = tpu.matmul %78, %79, %cst_36 {dimension_numbers = #tpu.dot_dimension_numbers<[1], [0], [0], [1], [0, 0, 1, 1], [], []>} : vector<8x32xbf16>, vector<32x32xbf16>, vector<8x32xf32> -> vector<8x32xf32>
    %c0_37 = arith.constant 0 : index
    %c0_38 = arith.constant 0 : index
    %81 = vector.load %arg13[%c0_37, %c0_38] : memref<1x32xf32, #tpu.memory_space<vmem>>, vector<1x32xf32>
    %82 = vector.broadcast %81 : vector<1x32xf32> to vector<8x32xf32>
    %83 = arith.addf %80, %82 : vector<8x32xf32>
    %84 = arith.truncf %83 : vector<8x32xf32> to vector<8x32xbf16>
    %85 = arith.truncf %53 : vector<8x32xf32> to vector<8x32xbf16>
    %c0_39 = arith.constant 0 : index
    %c0_40 = arith.constant 0 : index
    %86 = vector.load %arg11[%c0_39, %c0_40] : memref<32x32xbf16, #tpu.memory_space<vmem>>, vector<32x32xbf16>
    %cst_41 = arith.constant dense<0.000000e+00> : vector<8x32xf32>
    %87 = tpu.matmul %85, %86, %cst_41 {dimension_numbers = #tpu.dot_dimension_numbers<[1], [0], [0], [1], [0, 0, 1, 1], [], []>} : vector<8x32xbf16>, vector<32x32xbf16>, vector<8x32xf32> -> vector<8x32xf32>
    %c0_42 = arith.constant 0 : index
    %c0_43 = arith.constant 0 : index
    %88 = vector.load %arg14[%c0_42, %c0_43] : memref<1x32xf32, #tpu.memory_space<vmem>>, vector<1x32xf32>
    %89 = vector.broadcast %88 : vector<1x32xf32> to vector<8x32xf32>
    %90 = arith.addf %87, %89 : vector<8x32xf32>
    %91 = arith.truncf %90 : vector<8x32xf32> to vector<8x32xbf16>
    %92 = arith.truncf %77 : vector<8x32xf32> to vector<8x32xbf16>
    %c0_44 = arith.constant 0 : index
    %c0_45 = arith.constant 0 : index
    %93 = vector.load %arg12[%c0_44, %c0_45] : memref<32x32xbf16, #tpu.memory_space<vmem>>, vector<32x32xbf16>
    %cst_46 = arith.constant dense<0.000000e+00> : vector<8x32xf32>
    %94 = tpu.matmul %92, %93, %cst_46 {dimension_numbers = #tpu.dot_dimension_numbers<[1], [0], [0], [1], [0, 0, 1, 1], [], []>} : vector<8x32xbf16>, vector<32x32xbf16>, vector<8x32xf32> -> vector<8x32xf32>
    %c0_47 = arith.constant 0 : index
    %c0_48 = arith.constant 0 : index
    %95 = vector.load %arg15[%c0_47, %c0_48] : memref<1x32xf32, #tpu.memory_space<vmem>>, vector<1x32xf32>
    %96 = vector.broadcast %95 : vector<1x32xf32> to vector<8x32xf32>
    %97 = arith.addf %94, %96 : vector<8x32xf32>
    %98 = arith.truncf %97 : vector<8x32xf32> to vector<8x32xbf16>
    %99 = vector.shape_cast %84 : vector<8x32xbf16> to vector<1x8x32xbf16>
    %100 = vector.extract_strided_slice %99 {offsets = [0, 0, 0], sizes = [1, 8, 8], strides = [1, 1, 1]} : vector<1x8x32xbf16> to vector<1x8x8xbf16>
    %101 = vector.extract_strided_slice %99 {offsets = [0, 0, 8], sizes = [1, 8, 8], strides = [1, 1, 1]} : vector<1x8x32xbf16> to vector<1x8x8xbf16>
    %102 = vector.extract_strided_slice %99 {offsets = [0, 0, 16], sizes = [1, 8, 8], strides = [1, 1, 1]} : vector<1x8x32xbf16> to vector<1x8x8xbf16>
    %103 = vector.extract_strided_slice %99 {offsets = [0, 0, 24], sizes = [1, 8, 8], strides = [1, 1, 1]} : vector<1x8x32xbf16> to vector<1x8x8xbf16>
    %104 = tpu.concatenate %100, %101, %102, %103 in 0 : vector<1x8x8xbf16>, vector<1x8x8xbf16>, vector<1x8x8xbf16>, vector<1x8x8xbf16> -> vector<4x8x8xbf16>
    %105 = vector.shape_cast %91 : vector<8x32xbf16> to vector<1x8x32xbf16>
    %106 = vector.extract_strided_slice %105 {offsets = [0, 0, 0], sizes = [1, 8, 8], strides = [1, 1, 1]} : vector<1x8x32xbf16> to vector<1x8x8xbf16>
    %107 = vector.extract_strided_slice %105 {offsets = [0, 0, 8], sizes = [1, 8, 8], strides = [1, 1, 1]} : vector<1x8x32xbf16> to vector<1x8x8xbf16>
    %108 = vector.extract_strided_slice %105 {offsets = [0, 0, 16], sizes = [1, 8, 8], strides = [1, 1, 1]} : vector<1x8x32xbf16> to vector<1x8x8xbf16>
    %109 = vector.extract_strided_slice %105 {offsets = [0, 0, 24], sizes = [1, 8, 8], strides = [1, 1, 1]} : vector<1x8x32xbf16> to vector<1x8x8xbf16>
    %110 = tpu.concatenate %106, %107, %108, %109 in 0 : vector<1x8x8xbf16>, vector<1x8x8xbf16>, vector<1x8x8xbf16>, vector<1x8x8xbf16> -> vector<4x8x8xbf16>
    %111 = vector.shape_cast %98 : vector<8x32xbf16> to vector<1x8x32xbf16>
    %112 = vector.extract_strided_slice %111 {offsets = [0, 0, 0], sizes = [1, 8, 8], strides = [1, 1, 1]} : vector<1x8x32xbf16> to vector<1x8x8xbf16>
    %113 = vector.extract_strided_slice %111 {offsets = [0, 0, 8], sizes = [1, 8, 8], strides = [1, 1, 1]} : vector<1x8x32xbf16> to vector<1x8x8xbf16>
    %114 = vector.extract_strided_slice %111 {offsets = [0, 0, 16], sizes = [1, 8, 8], strides = [1, 1, 1]} : vector<1x8x32xbf16> to vector<1x8x8xbf16>
    %115 = vector.extract_strided_slice %111 {offsets = [0, 0, 24], sizes = [1, 8, 8], strides = [1, 1, 1]} : vector<1x8x32xbf16> to vector<1x8x8xbf16>
    %116 = tpu.concatenate %112, %113, %114, %115 in 0 : vector<1x8x8xbf16>, vector<1x8x8xbf16>, vector<1x8x8xbf16>, vector<1x8x8xbf16> -> vector<4x8x8xbf16>
    "tpu.trace_start"() <{level = 10 : i32, message = "bqd,bkd->bqk"}> : () -> ()
    %cst_49 = arith.constant dense<0.000000e+00> : vector<4x8x8xf32>
    %117 = tpu.matmul %104, %110, %cst_49 {dimension_numbers = #tpu.dot_dimension_numbers<[2], [2], [1], [1], [0, 0, 0, 1, 1, 1], [0], [0]>} : vector<4x8x8xbf16>, vector<4x8x8xbf16>, vector<4x8x8xf32> -> vector<4x8x8xf32>
    "tpu.trace_stop"() : () -> ()
    %cst_50 = arith.constant dense<0xFF800000> : vector<4x8xf32>
    %118 = vector.multi_reduction <maximumf>, %117, %cst_50 [2] : vector<4x8x8xf32> to vector<4x8xf32>
    %119 = vector.shape_cast %118 : vector<4x8xf32> to vector<4x8x1xf32>
    %120 = vector.broadcast %119 : vector<4x8x1xf32> to vector<4x8x8xf32>
    %121 = arith.subf %117, %120 : vector<4x8x8xf32>
    %122 = math.exp %121 : vector<4x8x8xf32>
    %cst_51 = arith.constant dense<0.000000e+00> : vector<4x8xf32>
    %123 = vector.multi_reduction <add>, %122, %cst_51 [2] : vector<4x8x8xf32> to vector<4x8xf32>
    %124 = vector.shape_cast %123 : vector<4x8xf32> to vector<4x8x1xf32>
    %125 = vector.broadcast %124 : vector<4x8x1xf32> to vector<4x8x8xf32>
    %126 = arith.divf %122, %125 : vector<4x8x8xf32>
    %127 = arith.truncf %126 : vector<4x8x8xf32> to vector<4x8x8xbf16>
    "tpu.trace_start"() <{level = 10 : i32, message = "bqk,bkd->bqd"}> : () -> ()
    %cst_52 = arith.constant dense<0.000000e+00> : vector<4x8x8xf32>
    %128 = tpu.matmul %127, %116, %cst_52 {dimension_numbers = #tpu.dot_dimension_numbers<[2], [1], [1], [2], [0, 0, 0, 1, 1, 2], [0], [0]>} : vector<4x8x8xbf16>, vector<4x8x8xbf16>, vector<4x8x8xf32> -> vector<4x8x8xf32>
    "tpu.trace_stop"() : () -> ()
    %129 = vector.shape_cast %126 : vector<4x8x8xf32> to vector<4x1x8x8xf32>
    %cst_53 = arith.constant dense<0.000000e+00> : vector<1x8x8xf32>
    %130 = vector.multi_reduction <add>, %129, %cst_53 [0] : vector<4x1x8x8xf32> to vector<1x8x8xf32>
    %cst_54 = arith.constant 4.000000e+00 : f32
    %131 = vector.broadcast %cst_54 : f32 to vector<1x8x8xf32>
    %132 = arith.divf %130, %131 : vector<1x8x8xf32>
    %133 = arith.truncf %128 : vector<4x8x8xf32> to vector<4x8x8xbf16>
    %134 = vector.shape_cast %133 : vector<4x8x8xbf16> to vector<4x1x8x8xbf16>
    %135 = vector.extract_strided_slice %134 {offsets = [0, 0, 0, 0], sizes = [1, 1, 8, 8], strides = [1, 1, 1, 1]} : vector<4x1x8x8xbf16> to vector<1x1x8x8xbf16>
    %136 = vector.shape_cast %135 : vector<1x1x8x8xbf16> to vector<1x8x8xbf16>
    %137 = vector.extract_strided_slice %134 {offsets = [1, 0, 0, 0], sizes = [1, 1, 8, 8], strides = [1, 1, 1, 1]} : vector<4x1x8x8xbf16> to vector<1x1x8x8xbf16>
    %138 = vector.shape_cast %137 : vector<1x1x8x8xbf16> to vector<1x8x8xbf16>
    %139 = vector.extract_strided_slice %134 {offsets = [2, 0, 0, 0], sizes = [1, 1, 8, 8], strides = [1, 1, 1, 1]} : vector<4x1x8x8xbf16> to vector<1x1x8x8xbf16>
    %140 = vector.shape_cast %139 : vector<1x1x8x8xbf16> to vector<1x8x8xbf16>
    %141 = vector.extract_strided_slice %134 {offsets = [3, 0, 0, 0], sizes = [1, 1, 8, 8], strides = [1, 1, 1, 1]} : vector<4x1x8x8xbf16> to vector<1x1x8x8xbf16>
    %142 = vector.shape_cast %141 : vector<1x1x8x8xbf16> to vector<1x8x8xbf16>
    %143 = tpu.concatenate %136, %138, %140, %142 in 2 : vector<1x8x8xbf16>, vector<1x8x8xbf16>, vector<1x8x8xbf16>, vector<1x8x8xbf16> -> vector<1x8x32xbf16>
    %144 = vector.shape_cast %143 : vector<1x8x32xbf16> to vector<8x32xbf16>
    %c0_55 = arith.constant 0 : index
    %c0_56 = arith.constant 0 : index
    %145 = vector.load %arg16[%c0_55, %c0_56] : memref<32x32xbf16, #tpu.memory_space<vmem>>, vector<32x32xbf16>
    %cst_57 = arith.constant dense<0.000000e+00> : vector<8x32xf32>
    %146 = tpu.matmul %144, %145, %cst_57 {dimension_numbers = #tpu.dot_dimension_numbers<[1], [0], [0], [1], [0, 0, 1, 1], [], []>} : vector<8x32xbf16>, vector<32x32xbf16>, vector<8x32xf32> -> vector<8x32xf32>
    %c0_58 = arith.constant 0 : index
    %c0_59 = arith.constant 0 : index
    %147 = vector.load %arg17[%c0_58, %c0_59] : memref<1x32xf32, #tpu.memory_space<vmem>>, vector<1x32xf32>
    %148 = vector.broadcast %147 : vector<1x32xf32> to vector<8x32xf32>
    %149 = arith.addf %146, %148 : vector<8x32xf32>
    %c0_60 = arith.constant 0 : index
    %c0_61 = arith.constant 0 : index
    %150 = vector.load %arg18[%c0_60, %c0_61] : memref<1x32xf32, #tpu.memory_space<vmem>>, vector<1x32xf32>
    %c0_62 = arith.constant 0 : index
    %c0_63 = arith.constant 0 : index
    %151 = vector.load %arg19[%c0_62, %c0_63] : memref<1x32xf32, #tpu.memory_space<vmem>>, vector<1x32xf32>
    %cst_64 = arith.constant dense<0.000000e+00> : vector<8xf32>
    %152 = vector.multi_reduction <add>, %149, %cst_64 [1] : vector<8x32xf32> to vector<8xf32>
    %153 = vector.shape_cast %152 : vector<8xf32> to vector<8x1xf32>
    %cst_65 = arith.constant 3.200000e+01 : f32
    %154 = vector.broadcast %cst_65 : f32 to vector<8x1xf32>
    %155 = arith.divf %153, %154 : vector<8x1xf32>
    %156 = vector.broadcast %155 : vector<8x1xf32> to vector<8x32xf32>
    %157 = arith.subf %149, %156 : vector<8x32xf32>
    %158 = arith.mulf %157, %157 : vector<8x32xf32>
    %cst_66 = arith.constant dense<0.000000e+00> : vector<8xf32>
    %159 = vector.multi_reduction <add>, %158, %cst_66 [1] : vector<8x32xf32> to vector<8xf32>
    %160 = vector.shape_cast %159 : vector<8xf32> to vector<8x1xf32>
    %cst_67 = arith.constant 3.200000e+01 : f32
    %161 = vector.broadcast %cst_67 : f32 to vector<8x1xf32>
    %162 = arith.divf %160, %161 : vector<8x1xf32>
    %163 = vector.broadcast %155 : vector<8x1xf32> to vector<8x32xf32>
    %164 = arith.subf %149, %163 : vector<8x32xf32>
    %cst_68 = arith.constant 9.99999974E-6 : f32
    %165 = vector.broadcast %cst_68 : f32 to vector<8x1xf32>
    %166 = arith.addf %162, %165 : vector<8x1xf32>
    %167 = math.rsqrt %166 : vector<8x1xf32>
    %168 = vector.broadcast %167 : vector<8x1xf32> to vector<8x32xf32>
    %169 = arith.mulf %164, %168 : vector<8x32xf32>
    %170 = vector.broadcast %150 : vector<1x32xf32> to vector<8x32xf32>
    %171 = arith.mulf %169, %170 : vector<8x32xf32>
    %172 = vector.broadcast %151 : vector<1x32xf32> to vector<8x32xf32>
    %173 = arith.addf %171, %172 : vector<8x32xf32>
    %174 = arith.addf %29, %173 : vector<8x32xf32>
    %175 = arith.truncf %174 : vector<8x32xf32> to vector<8x32xbf16>
    %c0_69 = arith.constant 0 : index
    %c0_70 = arith.constant 0 : index
    %176 = vector.load %arg20[%c0_69, %c0_70] : memref<32x32xbf16, #tpu.memory_space<vmem>>, vector<32x32xbf16>
    %cst_71 = arith.constant dense<0.000000e+00> : vector<8x32xf32>
    %177 = tpu.matmul %175, %176, %cst_71 {dimension_numbers = #tpu.dot_dimension_numbers<[1], [0], [0], [1], [0, 0, 1, 1], [], []>} : vector<8x32xbf16>, vector<32x32xbf16>, vector<8x32xf32> -> vector<8x32xf32>
    %c0_72 = arith.constant 0 : index
    %c0_73 = arith.constant 0 : index
    %178 = vector.load %arg21[%c0_72, %c0_73] : memref<1x32xf32, #tpu.memory_space<vmem>>, vector<1x32xf32>
    %179 = vector.broadcast %178 : vector<1x32xf32> to vector<8x32xf32>
    %180 = arith.addf %177, %179 : vector<8x32xf32>
    %cst_74 = arith.constant 5.000000e-01 : f32
    %181 = vector.broadcast %cst_74 : f32 to vector<8x32xf32>
    %182 = arith.mulf %181, %180 : vector<8x32xf32>
    %183 = arith.mulf %180, %180 : vector<8x32xf32>
    %184 = arith.mulf %183, %180 : vector<8x32xf32>
    %cst_75 = arith.constant 4.471500e-02 : f32
    %185 = vector.broadcast %cst_75 : f32 to vector<8x32xf32>
    %186 = arith.mulf %185, %184 : vector<8x32xf32>
    %187 = arith.addf %180, %186 : vector<8x32xf32>
    %cst_76 = arith.constant 0.797884583 : f32
    %188 = vector.broadcast %cst_76 : f32 to vector<8x32xf32>
    %189 = arith.mulf %188, %187 : vector<8x32xf32>
    %190 = math.tanh %189 : vector<8x32xf32>
    %cst_77 = arith.constant 1.000000e+00 : f32
    %191 = vector.broadcast %cst_77 : f32 to vector<8x32xf32>
    %192 = arith.addf %191, %190 : vector<8x32xf32>
    %193 = arith.mulf %182, %192 : vector<8x32xf32>
    %194 = arith.addf %174, %193 : vector<8x32xf32>
    %195 = vector.shape_cast %194 : vector<8x32xf32> to vector<1x8x32xf32>
    %c0_78 = arith.constant 0 : index
    %c0_79 = arith.constant 0 : index
    %c0_80 = arith.constant 0 : index
    %196 = vector.load %arg22[%c0_78, %c0_79, %c0_80] : memref<1x8x32xf32, #tpu.memory_space<vmem>>, vector<1x8x32xf32>
    tpu.vector_store %arg22[%c0_78, %c0_79, %c0_80], %195 {strides = array<i32>} : memref<1x8x32xf32, #tpu.memory_space<vmem>>, vector<1x8x32xf32>,
    %c0_81 = arith.constant 0 : index
    %c0_82 = arith.constant 0 : index
    %c0_83 = arith.constant 0 : index
    %197 = vector.load %arg23[%c0_81, %c0_82, %c0_83] : memref<1x8x8xf32, #tpu.memory_space<vmem>>, vector<1x8x8xf32>
    tpu.vector_store %arg23[%c0_81, %c0_82, %c0_83], %132 {strides = array<i32>} : memref<1x8x8xf32, #tpu.memory_space<vmem>>, vector<1x8x8xf32>,
    return
  }
  func.func @transform_0(%arg0: i32) -> (i32, i32, i32) {
    %c0_i32 = arith.constant 0 : i32
    %c0_i32_0 = arith.constant 0 : i32
    %c0_i32_1 = arith.constant 0 : i32
    return %arg0, %c0_i32, %c0_i32_0 : i32, i32, i32
  }
  func.func @transform_1(%arg0: i32) -> (i32, i32, i32) {
    %c0_i32 = arith.constant 0 : i32
    %c0_i32_0 = arith.constant 0 : i32
    %c0_i32_1 = arith.constant 0 : i32
    return %arg0, %c0_i32, %c0_i32_0 : i32, i32, i32
  }
  func.func @transform_2(%arg0: i32) -> (i32, i32, i32) {
    %c0_i32 = arith.constant 0 : i32
    %c0_i32_0 = arith.constant 0 : i32
    %c0_i32_1 = arith.constant 0 : i32
    return %arg0, %c0_i32, %c0_i32_0 : i32, i32, i32
  }
  func.func @transform_3(%arg0: i32) -> (i32, i32) {
    %c0_i32 = arith.constant 0 : i32
    %c0_i32_0 = arith.constant 0 : i32
    %c0_i32_1 = arith.constant 0 : i32
    return %c0_i32, %c0_i32_0 : i32, i32
  }
  func.func @transform_4(%arg0: i32) -> (i32, i32) {
    %c0_i32 = arith.constant 0 : i32
    %c0_i32_0 = arith.constant 0 : i32
    %c0_i32_1 = arith.constant 0 : i32
    return %c0_i32, %c0_i32_0 : i32, i32
  }
  func.func @transform_5(%arg0: i32) -> (i32, i32) {
    %c0_i32 = arith.constant 0 : i32
    %c0_i32_0 = arith.constant 0 : i32
    %c0_i32_1 = arith.constant 0 : i32
    return %c0_i32, %c0_i32_0 : i32, i32
  }
  func.func @transform_6(%arg0: i32) -> (i32, i32) {
    %c0_i32 = arith.constant 0 : i32
    %c0_i32_0 = arith.constant 0 : i32
    %c0_i32_1 = arith.constant 0 : i32
    return %c0_i32, %c0_i32_0 : i32, i32
  }
  func.func @transform_7(%arg0: i32) -> (i32, i32) {
    %c0_i32 = arith.constant 0 : i32
    %c0_i32_0 = arith.constant 0 : i32
    %c0_i32_1 = arith.constant 0 : i32
    return %c0_i32, %c0_i32_0 : i32, i32
  }
  func.func @transform_8(%arg0: i32) -> (i32, i32) {
    %c0_i32 = arith.constant 0 : i32
    %c0_i32_0 = arith.constant 0 : i32
    %c0_i32_1 = arith.constant 0 : i32
    return %c0_i32, %c0_i32_0 : i32, i32
  }
  func.func @transform_9(%arg0: i32) -> (i32, i32) {
    %c0_i32 = arith.constant 0 : i32
    %c0_i32_0 = arith.constant 0 : i32
    %c0_i32_1 = arith.constant 0 : i32
    return %c0_i32, %c0_i32_0 : i32, i32
  }
  func.func @transform_10(%arg0: i32) -> (i32, i32) {
    %c0_i32 = arith.constant 0 : i32
    %c0_i32_0 = arith.constant 0 : i32
    %c0_i32_1 = arith.constant 0 : i32
    return %c0_i32, %c0_i32_0 : i32, i32
  }
  func.func @transform_11(%arg0: i32) -> (i32, i32) {
    %c0_i32 = arith.constant 0 : i32
    %c0_i32_0 = arith.constant 0 : i32
    %c0_i32_1 = arith.constant 0 : i32
    return %c0_i32, %c0_i32_0 : i32, i32
  }
  func.func @transform_12(%arg0: i32) -> (i32, i32) {
    %c0_i32 = arith.constant 0 : i32
    %c0_i32_0 = arith.constant 0 : i32
    %c0_i32_1 = arith.constant 0 : i32
    return %c0_i32, %c0_i32_0 : i32, i32
  }
  func.func @transform_13(%arg0: i32) -> (i32, i32) {
    %c0_i32 = arith.constant 0 : i32
    %c0_i32_0 = arith.constant 0 : i32
    %c0_i32_1 = arith.constant 0 : i32
    return %c0_i32, %c0_i32_0 : i32, i32
  }
  func.func @transform_14(%arg0: i32) -> (i32, i32) {
    %c0_i32 = arith.constant 0 : i32
    %c0_i32_0 = arith.constant 0 : i32
    %c0_i32_1 = arith.constant 0 : i32
    return %c0_i32, %c0_i32_0 : i32, i32
  }
  func.func @transform_15(%arg0: i32) -> (i32, i32) {
    %c0_i32 = arith.constant 0 : i32
    %c0_i32_0 = arith.constant 0 : i32
    %c0_i32_1 = arith.constant 0 : i32
    return %c0_i32, %c0_i32_0 : i32, i32
  }
  func.func @transform_16(%arg0: i32) -> (i32, i32) {
    %c0_i32 = arith.constant 0 : i32
    %c0_i32_0 = arith.constant 0 : i32
    %c0_i32_1 = arith.constant 0 : i32
    return %c0_i32, %c0_i32_0 : i32, i32
  }
  func.func @transform_17(%arg0: i32) -> (i32, i32) {
    %c0_i32 = arith.constant 0 : i32
    %c0_i32_0 = arith.constant 0 : i32
    %c0_i32_1 = arith.constant 0 : i32
    return %c0_i32, %c0_i32_0 : i32, i32
  }
  func.func @transform_18(%arg0: i32) -> (i32, i32) {
    %c0_i32 = arith.constant 0 : i32
    %c0_i32_0 = arith.constant 0 : i32
    %c0_i32_1 = arith.constant 0 : i32
    return %c0_i32, %c0_i32_0 : i32, i32
  }
  func.func @transform_19(%arg0: i32) -> (i32, i32) {
    %c0_i32 = arith.constant 0 : i32
    %c0_i32_0 = arith.constant 0 : i32
    %c0_i32_1 = arith.constant 0 : i32
    return %c0_i32, %c0_i32_0 : i32, i32
  }
  func.func @transform_20(%arg0: i32) -> (i32, i32) {
    %c0_i32 = arith.constant 0 : i32
    %c0_i32_0 = arith.constant 0 : i32
    %c0_i32_1 = arith.constant 0 : i32
    return %c0_i32, %c0_i32_0 : i32, i32
  }
  func.func @transform_21(%arg0: i32) -> (i32, i32, i32) {
    %c0_i32 = arith.constant 0 : i32
    %c0_i32_0 = arith.constant 0 : i32
    %c0_i32_1 = arith.constant 0 : i32
    return %arg0, %c0_i32, %c0_i32_0 : i32, i32, i32
  }
  func.func @transform_22(%arg0: i32) -> (i32, i32, i32) {
    %c0_i32 = arith.constant 0 : i32
    %c0_i32_0 = arith.constant 0 : i32
    %c0_i32_1 = arith.constant 0 : i32
    return %arg0, %c0_i32, %c0_i32_0 : i32, i32, i32
  }
}

</mosaic_0001>

<llo_original>
// kernel: tpu_custom_call.1
$region0: #{tpu_custom_call.1}
  #allocation0 [shape = 'u32[]', space=smem, size = 0x4, offset = 0x4, fixed_abs, tag = 'smem constant byte address 0x4 - core index']
  #allocation1 [shape = 'u32[144,128]{1,0:T(1,128)}', space=vmem, size = 0x12000, scoped, tag = 'internal scratch']
  %s0 = inlined_call_operand.hbm [shape: f32[2,8,32], index: 0, kind: input, shape index: {}]
  %s1 = inlined_call_operand.hbm [shape: f32[2,8,32], index: 1, kind: input, shape index: {}]
  %s2 = inlined_call_operand.hbm [shape: f32[2,8,32], index: 2, kind: input, shape index: {}]
  %s3 = inlined_call_operand.hbm [shape: f32[1,32], index: 3, kind: input, shape index: {}]
  %s4 = inlined_call_operand.hbm [shape: f32[1,32], index: 4, kind: input, shape index: {}]
  %s5 = inlined_call_operand.hbm [shape: f32[1,32], index: 5, kind: input, shape index: {}]
  %s6 = inlined_call_operand.hbm [shape: f32[1,32], index: 6, kind: input, shape index: {}]
  %s7 = inlined_call_operand.hbm [shape: f32[1,32], index: 7, kind: input, shape index: {}]
  %s8 = inlined_call_operand.hbm [shape: f32[1,32], index: 8, kind: input, shape index: {}]
  %s9 = inlined_call_operand.vmem [shape: bf16[32,32], index: 9, kind: input, shape index: {}]
  %s10 = inlined_call_operand.vmem [shape: bf16[32,32], index: 10, kind: input, shape index: {}]
  %s11 = inlined_call_operand.hbm [shape: bf16[32,32], index: 11, kind: input, shape index: {}]
  %s12 = inlined_call_operand.hbm [shape: f32[1,32], index: 12, kind: input, shape index: {}]
  %s13 = inlined_call_operand.hbm [shape: f32[1,32], index: 13, kind: input, shape index: {}]
  %s14 = inlined_call_operand.hbm [shape: f32[1,32], index: 14, kind: input, shape index: {}]
  %s15 = inlined_call_operand.vmem [shape: bf16[32,32], index: 15, kind: input, shape index: {}]
  %s16 = inlined_call_operand.hbm [shape: f32[1,32], index: 16, kind: input, shape index: {}]
  %s17 = inlined_call_operand.hbm [shape: f32[1,32], index: 17, kind: input, shape index: {}]
  %s18 = inlined_call_operand.vmem [shape: f32[1,32], index: 18, kind: input, shape index: {}]
  %s19 = inlined_call_operand.vmem [shape: bf16[32,32], index: 19, kind: input, shape index: {}]
  %s20 = inlined_call_operand.vmem [shape: f32[1,32], index: 20, kind: input, shape index: {}]
  %s21 = inlined_call_operand.hbm [shape: f32[2,8,32], index: 21, kind: output, shape index: {0}]
  %s22 = inlined_call_operand.hbm [shape: f32[2,8,8], index: 22, kind: output, shape index: {1}]
  %23 = xla_tuple %s21, %s22
  %s24 = sld [smem:[#allocation0]]
  $region185: #{tpu_custom_call.1} parent=0
    _
  %s26 = ssub.s32 1, %s24
  %s27 = scalar_select 0, %s26, %s24
  $region1: #{tpu_custom_call.1} parent=0
    #allocation2 [shape = 'u8[8192]{0}', space=vmem, size = 0x2000, scoped, tag = 'input window, operand 0']
    #allocation3 [shape = 's32[2]{0}', space=sflag, size = 0x8, scoped, tag = 'scoped memory for tpu_custom_call.1']
    #allocation4 [shape = 's32[2]{0}', space=sflag, size = 0x8, scoped, tag = 'scoped memory for tpu_custom_call.1']
    #allocation5 [shape = 'u8[8192]{0}', space=vmem, size = 0x2000, scoped, tag = 'input window, operand 1']
    #allocation6 [shape = 's32[2]{0}', space=sflag, size = 0x8, scoped, tag = 'scoped memory for tpu_custom_call.1']
    #allocation7 [shape = 'u8[8192]{0}', space=vmem, size = 0x2000, scoped, tag = 'input window, operand 2']
    #allocation8 [shape = 'u8[512]{0}', space=vmem, size = 0x400, scoped, tag = 'input window, operand 3, single buffered']
    #allocation9 [shape = 's32[1]{0}', space=sflag, size = 0x4, scoped, tag = 'scoped memory for tpu_custom_call.1']
    #allocation10 [shape = 'u8[512]{0}', space=vmem, size = 0x400, scoped, tag = 'input window, operand 4, single buffered']
    #allocation11 [shape = 'u8[512]{0}', space=vmem, size = 0x400, scoped, tag = 'input window, operand 5, single buffered']
    #allocation12 [shape = 's32[1]{0}', space=sflag, size = 0x4, scoped, tag = 'scoped memory for tpu_custom_call.1']
    #allocation13 [shape = 'u8[512]{0}', space=vmem, size = 0x400, scoped, tag = 'input window, operand 6, single buffered']
    #allocation14 [shape = 'u8[512]{0}', space=vmem, size = 0x400, scoped, tag = 'input window, operand 7, single buffered']
    #allocation15 [shape = 's32[1]{0}', space=sflag, size = 0x4, scoped, tag = 'scoped memory for tpu_custom_call.1']
    #allocation16 [shape = 'u8[512]{0}', space=vmem, size = 0x400, scoped, tag = 'input window, operand 8, single buffered']
    #allocation17 [shape = 'u8[8192]{0}', space=vmem, size = 0x2000, scoped, tag = 'input window, operand 11, single buffered']
    #allocation18 [shape = 's32[1]{0}', space=sflag, size = 0x4, scoped, tag = 'scoped memory for tpu_custom_call.1']
    #allocation19 [shape = 'u8[512]{0}', space=vmem, size = 0x400, scoped, tag = 'input window, operand 12, single buffered']
    #allocation20 [shape = 'u8[512]{0}', space=vmem, size = 0x400, scoped, tag = 'input window, operand 13, single buffered']
    #allocation21 [shape = 's32[1]{0}', space=sflag, size = 0x4, scoped, tag = 'scoped memory for tpu_custom_call.1']
    #allocation22 [shape = 'u8[512]{0}', space=vmem, size = 0x400, scoped, tag = 'input window, operand 14, single buffered']
    #allocation23 [shape = 'u8[512]{0}', space=vmem, size = 0x400, scoped, tag = 'input window, operand 16, single buffered']
    #allocation24 [shape = 's32[1]{0}', space=sflag, size = 0x4, scoped, tag = 'scoped memory for tpu_custom_call.1']
    #allocation25 [shape = 'u8[512]{0}', space=vmem, size = 0x400, scoped, tag = 'input window, operand 17, single buffered']
    #allocation26 [shape = 'u8[8192]{0}', space=vmem, size = 0x2000, scoped, tag = 'output window, operand 0']
    #allocation27 [shape = 'u8[8192]{0}', space=vmem, size = 0x2000, scoped, tag = 'output window, operand 1']
    #allocation28 [shape = 's32[2]{0}', space=sflag, size = 0x8, scoped, tag = 'scoped memory for tpu_custom_call.1']
    %28 = vsyncpa [#allocation3], 0
    %s29 = scalar_lea.sflag [#allocation3], 1
    %30 = vsyncpa %s29, 0
    %31 = vsyncpa [#allocation6], 0
    %s32 = scalar_lea.sflag [#allocation6], 1
    %33 = vsyncpa %s32, 0
    %34 = vsyncpa [#allocation9], 0
    %35 = vsyncpa [#allocation12], 0
    %36 = vsyncpa [#allocation15], 0
    %37 = vsyncpa [#allocation18], 0
    %38 = vsyncpa [#allocation21], 0
    %39 = vsyncpa [#allocation24], 0
    %40 = vsyncpa [#allocation4], 0
    %s41 = scalar_lea.sflag [#allocation4], 1
    %42 = vsyncpa %s41, 0
    %43 = vsyncpa [#allocation28], 0
    %s44 = scalar_lea.sflag [#allocation28], 1
    %45 = vsyncpa %s44, 0
    loop: start=0, step=1, limit=4
    $region2: #{tpu_custom_call.1} parent=1 // loop_pre_header
      _
    $region3: #{tpu_custom_call.1} parent=1 // loop_header
      %s47 = sphi 0, %s51
      %p48 = scmp.ge.s32.totalorder %s47, 4
      %s57 = sphi 0, %s59
      %s60 = sphi 0, %s57
      %s61 = sphi 0, %s60
      %s77 = sphi 0, %s61
      %s83 = sphi 0, %s85
      %s86 = sphi 0, %s83
      %s87 = sphi 0, %s86
      %s103 = sphi 0, %s87
      %s109 = sphi 0, %s111
      %s112 = sphi 0, %s109
      %s113 = sphi 0, %s112
      %s129 = sphi 0, %s113
      %s133 = sphi 0, %s133
      %s135 = sphi 0, %s133
      %s136 = sphi 0, %s135
      %s150 = sphi 0, %s136
      %s154 = sphi 0, %s154
      %s156 = sphi 0, %s154
      %s157 = sphi 0, %s156
      %s171 = sphi 0, %s157
      %s175 = sphi 0, %s175
      %s177 = sphi 0, %s175
      %s178 = sphi 0, %s177
      %s192 = sphi 0, %s178
      %s196 = sphi 0, %s196
      %s198 = sphi 0, %s196
      %s199 = sphi 0, %s198
      %s213 = sphi 0, %s199
      %s217 = sphi 0, %s217
      %s219 = sphi 0, %s217
      %s220 = sphi 0, %s219
      %s234 = sphi 0, %s220
      %s238 = sphi 0, %s238
      %s240 = sphi 0, %s238
      %s241 = sphi 0, %s240
      %s255 = sphi 0, %s241
      %s259 = sphi 0, %s259
      %s261 = sphi 0, %s259
      %s262 = sphi 0, %s261
      %s276 = sphi 0, %s262
      %s280 = sphi 0, %s280
      %s282 = sphi 0, %s280
      %s283 = sphi 0, %s282
      %s297 = sphi 0, %s283
      %s301 = sphi 0, %s301
      %s303 = sphi 0, %s301
      %s304 = sphi 0, %s303
      %s318 = sphi 0, %s304
      %s322 = sphi 0, %s322
      %s324 = sphi 0, %s322
      %s325 = sphi 0, %s324
      %s339 = sphi 0, %s325
      %s343 = sphi 0, %s343
      %s345 = sphi 0, %s343
      %s346 = sphi 0, %s345
      %s360 = sphi 0, %s346
      %s364 = sphi 0, %s364
      %s366 = sphi 0, %s364
      %s367 = sphi 0, %s366
      %s381 = sphi 0, %s367
      %s385 = sphi 0, %s385
      %s387 = sphi 0, %s385
      %s388 = sphi 0, %s387
      %s402 = sphi 0, %s388
      %s406 = sphi 0, %s406
      %s408 = sphi 0, %s406
      %s409 = sphi 0, %s408
      %s423 = sphi 0, %s409
      %s427 = sphi 0, %s427
      %s429 = sphi 0, %s427
      %s430 = sphi 0, %s429
      %s444 = sphi 0, %s430
      %s448 = sphi 0, %s448
      %s450 = sphi 0, %s448
      %s451 = sphi 0, %s450
      %s465 = sphi 0, %s451
      %s469 = sphi 0, %s469
      %s471 = sphi 0, %s469
      %s472 = sphi 0, %s471
      %s486 = sphi 0, %s472
      %s490 = sphi 0, %s490
      %s492 = sphi 0, %s490
      %s493 = sphi 0, %s492
      %s507 = sphi 0, %s493
      %s513 = sphi 0, %s515
      %s516 = sphi 0, %s513
      %s517 = sphi 0, %s516
      %s533 = sphi 0, %s517
      %s539 = sphi 0, %s541
      %s542 = sphi 0, %s539
      %s543 = sphi 0, %s542
      %s559 = sphi 0, %s543
    $region4: #{tpu_custom_call.1} parent=1 // loop_header_branch
      %50 = sbr.rel (%p48) target = $region8
    $region5: #{tpu_custom_call.1} parent=1 // loop_body
      %s52 = ssub.s32 %s47, 1
      %s53 = ssub.s32 %s47, 2
      %s54 = sadd.s32 %s47, 1
      %s55 = ssub.s32 %s47, %s54
      %p56 = scmp.eq.s32.totalorder %s55, 0
      %s58 = sadd.s32 %s57, 1
      %s59 = scalar_select %p56, %s57, %s58
      %p62 = pneg %p56
      %p63 = scmp.eq.s32.totalorder %s47, 1
      %p64 = por %p62, %p63
      %p65 = scmp.ne.s32.totalorder %s57, %s60
      %p66 = scmp.eq.s32.totalorder %s47, 0
      %p67 = por %p65, %p66
      %p68 = scmp.ne.s32.totalorder %s57, %s60
      %p69 = scmp.eq.s32.totalorder %s52, 1
      %p70 = por %p68, %p69
      %p71 = scmp.ne.s32.totalorder %s60, %s61
      %p72 = scmp.eq.s32.totalorder %s52, 0
      %p73 = por %p71, %p72
      %p74 = scmp.ne.s32.totalorder %s60, %s61
      %p75 = scmp.eq.s32.totalorder %s53, 1
      %p76 = por %p74, %p75
      %p78 = scmp.ne.s32.totalorder %s61, %s77
      %p79 = scmp.eq.s32.totalorder %s53, 0
      %p80 = por %p78, %p79
      %s81 = ssub.s32 %s47, %s54
      %p82 = scmp.eq.s32.totalorder %s81, 0
      %s84 = sadd.s32 %s83, 1
      %s85 = scalar_select %p82, %s83, %s84
      %p88 = pneg %p82
      %p89 = scmp.eq.s32.totalorder %s47, 1
      %p90 = por %p88, %p89
      %p91 = scmp.ne.s32.totalorder %s83, %s86
      %p92 = scmp.eq.s32.totalorder %s47, 0
      %p93 = por %p91, %p92
      %p94 = scmp.ne.s32.totalorder %s83, %s86
      %p95 = scmp.eq.s32.totalorder %s52, 1
      %p96 = por %p94, %p95
      %p97 = scmp.ne.s32.totalorder %s86, %s87
      %p98 = scmp.eq.s32.totalorder %s52, 0
      %p99 = por %p97, %p98
      %p100 = scmp.ne.s32.totalorder %s86, %s87
      %p101 = scmp.eq.s32.totalorder %s53, 1
      %p102 = por %p100, %p101
      %p104 = scmp.ne.s32.totalorder %s87, %s103
      %p105 = scmp.eq.s32.totalorder %s53, 0
      %p106 = por %p104, %p105
      %s107 = ssub.s32 %s47, %s54
      %p108 = scmp.eq.s32.totalorder %s107, 0
      %s110 = sadd.s32 %s109, 1
      %s111 = scalar_select %p108, %s109, %s110
      %p114 = pneg %p108
      %p115 = scmp.eq.s32.totalorder %s47, 1
      %p116 = por %p114, %p115
      %p117 = scmp.ne.s32.totalorder %s109, %s112
      %p118 = scmp.eq.s32.totalorder %s47, 0
      %p119 = por %p117, %p118
      %p120 = scmp.ne.s32.totalorder %s109, %s112
      %p121 = scmp.eq.s32.totalorder %s52, 1
      %p122 = por %p120, %p121
      %p123 = scmp.ne.s32.totalorder %s112, %s113
      %p124 = scmp.eq.s32.totalorder %s52, 0
      %p125 = por %p123, %p124
      %p126 = scmp.ne.s32.totalorder %s112, %s113
      %p127 = scmp.eq.s32.totalorder %s53, 1
      %p128 = por %p126, %p127
      %p130 = scmp.ne.s32.totalorder %s113, %s129
      %p131 = scmp.eq.s32.totalorder %s53, 0
      %p132 = por %p130, %p131
      %s134 = sadd.s32 %s133, 1
      %p137 = scmp.eq.s32.totalorder %s47, 1
      %p138 = scmp.ne.s32.totalorder %s133, %s135
      %p139 = scmp.eq.s32.totalorder %s47, 0
      %p140 = por %p138, %p139
      %p141 = scmp.ne.s32.totalorder %s133, %s135
      %p142 = scmp.eq.s32.totalorder %s52, 1
      %p143 = por %p141, %p142
      %p144 = scmp.ne.s32.totalorder %s135, %s136
      %p145 = scmp.eq.s32.totalorder %s52, 0
      %p146 = por %p144, %p145
      %p147 = scmp.ne.s32.totalorder %s135, %s136
      %p148 = scmp.eq.s32.totalorder %s53, 1
      %p149 = por %p147, %p148
      %p151 = scmp.ne.s32.totalorder %s136, %s150
      %p152 = scmp.eq.s32.totalorder %s53, 0
      %p153 = por %p151, %p152
      %s155 = sadd.s32 %s154, 1
      %p158 = scmp.eq.s32.totalorder %s47, 1
      %p159 = scmp.ne.s32.totalorder %s154, %s156
      %p160 = scmp.eq.s32.totalorder %s47, 0
      %p161 = por %p159, %p160
      %p162 = scmp.ne.s32.totalorder %s154, %s156
      %p163 = scmp.eq.s32.totalorder %s52, 1
      %p164 = por %p162, %p163
      %p165 = scmp.ne.s32.totalorder %s156, %s157
      %p166 = scmp.eq.s32.totalorder %s52, 0
      %p167 = por %p165, %p166
      %p168 = scmp.ne.s32.totalorder %s156, %s157
      %p169 = scmp.eq.s32.totalorder %s53, 1
      %p170 = por %p168, %p169
      %p172 = scmp.ne.s32.totalorder %s157, %s171
      %p173 = scmp.eq.s32.totalorder %s53, 0
      %p174 = por %p172, %p173
      %s176 = sadd.s32 %s175, 1
      %p179 = scmp.eq.s32.totalorder %s47, 1
      %p180 = scmp.ne.s32.totalorder %s175, %s177
      %p181 = scmp.eq.s32.totalorder %s47, 0
      %p182 = por %p180, %p181
      %p183 = scmp.ne.s32.totalorder %s175, %s177
      %p184 = scmp.eq.s32.totalorder %s52, 1
      %p185 = por %p183, %p184
      %p186 = scmp.ne.s32.totalorder %s177, %s178
      %p187 = scmp.eq.s32.totalorder %s52, 0
      %p188 = por %p186, %p187
      %p189 = scmp.ne.s32.totalorder %s177, %s178
      %p190 = scmp.eq.s32.totalorder %s53, 1
      %p191 = por %p189, %p190
      %p193 = scmp.ne.s32.totalorder %s178, %s192
      %p194 = scmp.eq.s32.totalorder %s53, 0
      %p195 = por %p193, %p194
      %s197 = sadd.s32 %s196, 1
      %p200 = scmp.eq.s32.totalorder %s47, 1
      %p201 = scmp.ne.s32.totalorder %s196, %s198
      %p202 = scmp.eq.s32.totalorder %s47, 0
      %p203 = por %p201, %p202
      %p204 = scmp.ne.s32.totalorder %s196, %s198
      %p205 = scmp.eq.s32.totalorder %s52, 1
      %p206 = por %p204, %p205
      %p207 = scmp.ne.s32.totalorder %s198, %s199
      %p208 = scmp.eq.s32.totalorder %s52, 0
      %p209 = por %p207, %p208
      %p210 = scmp.ne.s32.totalorder %s198, %s199
      %p211 = scmp.eq.s32.totalorder %s53, 1
      %p212 = por %p210, %p211
      %p214 = scmp.ne.s32.totalorder %s199, %s213
      %p215 = scmp.eq.s32.totalorder %s53, 0
      %p216 = por %p214, %p215
      %s218 = sadd.s32 %s217, 1
      %p221 = scmp.eq.s32.totalorder %s47, 1
      %p222 = scmp.ne.s32.totalorder %s217, %s219
      %p223 = scmp.eq.s32.totalorder %s47, 0
      %p224 = por %p222, %p223
      %p225 = scmp.ne.s32.totalorder %s217, %s219
      %p226 = scmp.eq.s32.totalorder %s52, 1
      %p227 = por %p225, %p226
      %p228 = scmp.ne.s32.totalorder %s219, %s220
      %p229 = scmp.eq.s32.totalorder %s52, 0
      %p230 = por %p228, %p229
      %p231 = scmp.ne.s32.totalorder %s219, %s220
      %p232 = scmp.eq.s32.totalorder %s53, 1
      %p233 = por %p231, %p232
      %p235 = scmp.ne.s32.totalorder %s220, %s234
      %p236 = scmp.eq.s32.totalorder %s53, 0
      %p237 = por %p235, %p236
      %s239 = sadd.s32 %s238, 1
      %p242 = scmp.eq.s32.totalorder %s47, 1
      %p243 = scmp.ne.s32.totalorder %s238, %s240
      %p244 = scmp.eq.s32.totalorder %s47, 0
      %p245 = por %p243, %p244
      %p246 = scmp.ne.s32.totalorder %s238, %s240
      %p247 = scmp.eq.s32.totalorder %s52, 1
      %p248 = por %p246, %p247
      %p249 = scmp.ne.s32.totalorder %s240, %s241
      %p250 = scmp.eq.s32.totalorder %s52, 0
      %p251 = por %p249, %p250
      %p252 = scmp.ne.s32.totalorder %s240, %s241
      %p253 = scmp.eq.s32.totalorder %s53, 1
      %p254 = por %p252, %p253
      %p256 = scmp.ne.s32.totalorder %s241, %s255
      %p257 = scmp.eq.s32.totalorder %s53, 0
      %p258 = por %p256, %p257
      %s260 = sadd.s32 %s259, 1
      %p263 = scmp.eq.s32.totalorder %s47, 1
      %p264 = scmp.ne.s32.totalorder %s259, %s261
      %p265 = scmp.eq.s32.totalorder %s47, 0
      %p266 = por %p264, %p265
      %p267 = scmp.ne.s32.totalorder %s259, %s261
      %p268 = scmp.eq.s32.totalorder %s52, 1
      %p269 = por %p267, %p268
      %p270 = scmp.ne.s32.totalorder %s261, %s262
      %p271 = scmp.eq.s32.totalorder %s52, 0
      %p272 = por %p270, %p271
      %p273 = scmp.ne.s32.totalorder %s261, %s262
      %p274 = scmp.eq.s32.totalorder %s53, 1
      %p275 = por %p273, %p274
      %p277 = scmp.ne.s32.totalorder %s262, %s276
      %p278 = scmp.eq.s32.totalorder %s53, 0
      %p279 = por %p277, %p278
      %s281 = sadd.s32 %s280, 1
      %p284 = scmp.eq.s32.totalorder %s47, 1
      %p285 = scmp.ne.s32.totalorder %s280, %s282
      %p286 = scmp.eq.s32.totalorder %s47, 0
      %p287 = por %p285, %p286
      %p288 = scmp.ne.s32.totalorder %s280, %s282
      %p289 = scmp.eq.s32.totalorder %s52, 1
      %p290 = por %p288, %p289
      %p291 = scmp.ne.s32.totalorder %s282, %s283
      %p292 = scmp.eq.s32.totalorder %s52, 0
      %p293 = por %p291, %p292
      %p294 = scmp.ne.s32.totalorder %s282, %s283
      %p295 = scmp.eq.s32.totalorder %s53, 1
      %p296 = por %p294, %p295
      %p298 = scmp.ne.s32.totalorder %s283, %s297
      %p299 = scmp.eq.s32.totalorder %s53, 0
      %p300 = por %p298, %p299
      %s302 = sadd.s32 %s301, 1
      %p305 = scmp.eq.s32.totalorder %s47, 1
      %p306 = scmp.ne.s32.totalorder %s301, %s303
      %p307 = scmp.eq.s32.totalorder %s47, 0
      %p308 = por %p306, %p307
      %p309 = scmp.ne.s32.totalorder %s301, %s303
      %p310 = scmp.eq.s32.totalorder %s52, 1
      %p311 = por %p309, %p310
      %p312 = scmp.ne.s32.totalorder %s303, %s304
      %p313 = scmp.eq.s32.totalorder %s52, 0
      %p314 = por %p312, %p313
      %p315 = scmp.ne.s32.totalorder %s303, %s304
      %p316 = scmp.eq.s32.totalorder %s53, 1
      %p317 = por %p315, %p316
      %p319 = scmp.ne.s32.totalorder %s304, %s318
      %p320 = scmp.eq.s32.totalorder %s53, 0
      %p321 = por %p319, %p320
      %s323 = sadd.s32 %s322, 1
      %p326 = scmp.eq.s32.totalorder %s47, 1
      %p327 = scmp.ne.s32.totalorder %s322, %s324
      %p328 = scmp.eq.s32.totalorder %s47, 0
      %p329 = por %p327, %p328
      %p330 = scmp.ne.s32.totalorder %s322, %s324
      %p331 = scmp.eq.s32.totalorder %s52, 1
      %p332 = por %p330, %p331
      %p333 = scmp.ne.s32.totalorder %s324, %s325
      %p334 = scmp.eq.s32.totalorder %s52, 0
      %p335 = por %p333, %p334
      %p336 = scmp.ne.s32.totalorder %s324, %s325
      %p337 = scmp.eq.s32.totalorder %s53, 1
      %p338 = por %p336, %p337
      %p340 = scmp.ne.s32.totalorder %s325, %s339
      %p341 = scmp.eq.s32.totalorder %s53, 0
      %p342 = por %p340, %p341
      %s344 = sadd.s32 %s343, 1
      %p347 = scmp.eq.s32.totalorder %s47, 1
      %p348 = scmp.ne.s32.totalorder %s343, %s345
      %p349 = scmp.eq.s32.totalorder %s47, 0
      %p350 = por %p348, %p349
      %p351 = scmp.ne.s32.totalorder %s343, %s345
      %p352 = scmp.eq.s32.totalorder %s52, 1
      %p353 = por %p351, %p352
      %p354 = scmp.ne.s32.totalorder %s345, %s346
      %p355 = scmp.eq.s32.totalorder %s52, 0
      %p356 = por %p354, %p355
      %p357 = scmp.ne.s32.totalorder %s345, %s346
      %p358 = scmp.eq.s32.totalorder %s53, 1
      %p359 = por %p357, %p358
      %p361 = scmp.ne.s32.totalorder %s346, %s360
      %p362 = scmp.eq.s32.totalorder %s53, 0
      %p363 = por %p361, %p362
      %s365 = sadd.s32 %s364, 1
      %p368 = scmp.eq.s32.totalorder %s47, 1
      %p369 = scmp.ne.s32.totalorder %s364, %s366
      %p370 = scmp.eq.s32.totalorder %s47, 0
      %p371 = por %p369, %p370
      %p372 = scmp.ne.s32.totalorder %s364, %s366
      %p373 = scmp.eq.s32.totalorder %s52, 1
      %p374 = por %p372, %p373
      %p375 = scmp.ne.s32.totalorder %s366, %s367
      %p376 = scmp.eq.s32.totalorder %s52, 0
      %p377 = por %p375, %p376
      %p378 = scmp.ne.s32.totalorder %s366, %s367
      %p379 = scmp.eq.s32.totalorder %s53, 1
      %p380 = por %p378, %p379
      %p382 = scmp.ne.s32.totalorder %s367, %s381
      %p383 = scmp.eq.s32.totalorder %s53, 0
      %p384 = por %p382, %p383
      %s386 = sadd.s32 %s385, 1
      %p389 = scmp.eq.s32.totalorder %s47, 1
      %p390 = scmp.ne.s32.totalorder %s385, %s387
      %p391 = scmp.eq.s32.totalorder %s47, 0
      %p392 = por %p390, %p391
      %p393 = scmp.ne.s32.totalorder %s385, %s387
      %p394 = scmp.eq.s32.totalorder %s52, 1
      %p395 = por %p393, %p394
      %p396 = scmp.ne.s32.totalorder %s387, %s388
      %p397 = scmp.eq.s32.totalorder %s52, 0
      %p398 = por %p396, %p397
      %p399 = scmp.ne.s32.totalorder %s387, %s388
      %p400 = scmp.eq.s32.totalorder %s53, 1
      %p401 = por %p399, %p400
      %p403 = scmp.ne.s32.totalorder %s388, %s402
      %p404 = scmp.eq.s32.totalorder %s53, 0
      %p405 = por %p403, %p404
      %s407 = sadd.s32 %s406, 1
      %p410 = scmp.eq.s32.totalorder %s47, 1
      %p411 = scmp.ne.s32.totalorder %s406, %s408
      %p412 = scmp.eq.s32.totalorder %s47, 0
      %p413 = por %p411, %p412
      %p414 = scmp.ne.s32.totalorder %s406, %s408
      %p415 = scmp.eq.s32.totalorder %s52, 1
      %p416 = por %p414, %p415
      %p417 = scmp.ne.s32.totalorder %s408, %s409
      %p418 = scmp.eq.s32.totalorder %s52, 0
      %p419 = por %p417, %p418
      %p420 = scmp.ne.s32.totalorder %s408, %s409
      %p421 = scmp.eq.s32.totalorder %s53, 1
      %p422 = por %p420, %p421
      %p424 = scmp.ne.s32.totalorder %s409, %s423
      %p425 = scmp.eq.s32.totalorder %s53, 0
      %p426 = por %p424, %p425
      %s428 = sadd.s32 %s427, 1
      %p431 = scmp.eq.s32.totalorder %s47, 1
      %p432 = scmp.ne.s32.totalorder %s427, %s429
      %p433 = scmp.eq.s32.totalorder %s47, 0
      %p434 = por %p432, %p433
      %p435 = scmp.ne.s32.totalorder %s427, %s429
      %p436 = scmp.eq.s32.totalorder %s52, 1
      %p437 = por %p435, %p436
      %p438 = scmp.ne.s32.totalorder %s429, %s430
      %p439 = scmp.eq.s32.totalorder %s52, 0
      %p440 = por %p438, %p439
      %p441 = scmp.ne.s32.totalorder %s429, %s430
      %p442 = scmp.eq.s32.totalorder %s53, 1
      %p443 = por %p441, %p442
      %p445 = scmp.ne.s32.totalorder %s430, %s444
      %p446 = scmp.eq.s32.totalorder %s53, 0
      %p447 = por %p445, %p446
      %s449 = sadd.s32 %s448, 1
      %p452 = scmp.eq.s32.totalorder %s47, 1
      %p453 = scmp.ne.s32.totalorder %s448, %s450
      %p454 = scmp.eq.s32.totalorder %s47, 0
      %p455 = por %p453, %p454
      %p456 = scmp.ne.s32.totalorder %s448, %s450
      %p457 = scmp.eq.s32.totalorder %s52, 1
      %p458 = por %p456, %p457
      %p459 = scmp.ne.s32.totalorder %s450, %s451
      %p460 = scmp.eq.s32.totalorder %s52, 0
      %p461 = por %p459, %p460
      %p462 = scmp.ne.s32.totalorder %s450, %s451
      %p463 = scmp.eq.s32.totalorder %s53, 1
      %p464 = por %p462, %p463
      %p466 = scmp.ne.s32.totalorder %s451, %s465
      %p467 = scmp.eq.s32.totalorder %s53, 0
      %p468 = por %p466, %p467
      %s470 = sadd.s32 %s469, 1
      %p473 = scmp.eq.s32.totalorder %s47, 1
      %p474 = scmp.ne.s32.totalorder %s469, %s471
      %p475 = scmp.eq.s32.totalorder %s47, 0
      %p476 = por %p474, %p475
      %p477 = scmp.ne.s32.totalorder %s469, %s471
      %p478 = scmp.eq.s32.totalorder %s52, 1
      %p479 = por %p477, %p478
      %p480 = scmp.ne.s32.totalorder %s471, %s472
      %p481 = scmp.eq.s32.totalorder %s52, 0
      %p482 = por %p480, %p481
      %p483 = scmp.ne.s32.totalorder %s471, %s472
      %p484 = scmp.eq.s32.totalorder %s53, 1
      %p485 = por %p483, %p484
      %p487 = scmp.ne.s32.totalorder %s472, %s486
      %p488 = scmp.eq.s32.totalorder %s53, 0
      %p489 = por %p487, %p488
      %s491 = sadd.s32 %s490, 1
      %p494 = scmp.eq.s32.totalorder %s47, 1
      %p495 = scmp.ne.s32.totalorder %s490, %s492
      %p496 = scmp.eq.s32.totalorder %s47, 0
      %p497 = por %p495, %p496
      %p498 = scmp.ne.s32.totalorder %s490, %s492
      %p499 = scmp.eq.s32.totalorder %s52, 1
      %p500 = por %p498, %p499
      %p501 = scmp.ne.s32.totalorder %s492, %s493
      %p502 = scmp.eq.s32.totalorder %s52, 0
      %p503 = por %p501, %p502
      %p504 = scmp.ne.s32.totalorder %s492, %s493
      %p505 = scmp.eq.s32.totalorder %s53, 1
      %p506 = por %p504, %p505
      %p508 = scmp.ne.s32.totalorder %s493, %s507
      %p509 = scmp.eq.s32.totalorder %s53, 0
      %p510 = por %p508, %p509
      %s511 = ssub.s32 %s47, %s54
      %p512 = scmp.eq.s32.totalorder %s511, 0
      %s514 = sadd.s32 %s513, 1
      %s515 = scalar_select %p512, %s513, %s514
      %p518 = pneg %p512
      %p519 = scmp.eq.s32.totalorder %s47, 1
      %p520 = por %p518, %p519
      %p521 = scmp.ne.s32.totalorder %s513, %s516
      %p522 = scmp.eq.s32.totalorder %s47, 0
      %p523 = por %p521, %p522
      %p524 = scmp.ne.s32.totalorder %s513, %s516
      %p525 = scmp.eq.s32.totalorder %s52, 1
      %p526 = por %p524, %p525
      %p527 = scmp.ne.s32.totalorder %s516, %s517
      %p528 = scmp.eq.s32.totalorder %s52, 0
      %p529 = por %p527, %p528
      %p530 = scmp.ne.s32.totalorder %s516, %s517
      %p531 = scmp.eq.s32.totalorder %s53, 1
      %p532 = por %p530, %p531
      %p534 = scmp.ne.s32.totalorder %s517, %s533
      %p535 = scmp.eq.s32.totalorder %s53, 0
      %p536 = por %p534, %p535
      %s537 = ssub.s32 %s47, %s54
      %p538 = scmp.eq.s32.totalorder %s537, 0
      %s540 = sadd.s32 %s539, 1
      %s541 = scalar_select %p538, %s539, %s540
      %p544 = pneg %p538
      %p545 = scmp.eq.s32.totalorder %s47, 1
      %p546 = por %p544, %p545
      %p547 = scmp.ne.s32.totalorder %s539, %s542
      %p548 = scmp.eq.s32.totalorder %s47, 0
      %p549 = por %p547, %p548
      %p550 = scmp.ne.s32.totalorder %s539, %s542
      %p551 = scmp.eq.s32.totalorder %s52, 1
      %p552 = por %p550, %p551
      %p553 = scmp.ne.s32.totalorder %s542, %s543
      %p554 = scmp.eq.s32.totalorder %s52, 0
      %p555 = por %p553, %p554
      %p556 = scmp.ne.s32.totalorder %s542, %s543
      %p557 = scmp.eq.s32.totalorder %s53, 1
      %p558 = por %p556, %p557
      %p560 = scmp.ne.s32.totalorder %s543, %s559
      %p561 = scmp.eq.s32.totalorder %s53, 0
      %p562 = por %p560, %p561
      %p563 = scmp.le.s32.totalorder 1, %s47
      %p564 = scmp.lt.s32.totalorder %s47, 3
      %p565 = pnand %p563, %p564
      %p566 = pneg %p565
      // Predicated region
      $region9: #{tpu_custom_call.1} parent=5 // pred_check
        _
      $region10: #{tpu_custom_call.1} parent=5 // pred_check_branch
        %568 = sbr.rel (%p565) target = $region12
      $region11: #{tpu_custom_call.1} parent=5 // pred_region
        %s569 = ssub.s32 %s47, 1
        // Predicated region
        $region13: #{tpu_custom_call.1} parent=11 // pred_check
          %p570 = pneg %p146
        $region14: #{tpu_custom_call.1} parent=11 // pred_check_branch
          %572 = sbr.rel (%p570) target = $region16
        $region15: #{tpu_custom_call.1} parent=11 // pred_region
          %s574 = ssub.s32 16, 16
          %575 = vsyncadd [#allocation9], %s574
          %s577 = sshll.u32 [#allocation8], 4
          %s578 = int_to_ptr.vmem [resolvable:$true] %s577
          %580 = dma.hbm_to_vmem [thread:$0]  %s3, 16, %s578, [#allocation9]
        $region16: #{tpu_custom_call.1} parent=11 // pred_fallthru
          _
        // Predicated region
        $region17: #{tpu_custom_call.1} parent=11 // pred_check
          %p581 = pneg %p167
        $region18: #{tpu_custom_call.1} parent=11 // pred_check_branch
          %583 = sbr.rel (%p581) target = $region20
        $region19: #{tpu_custom_call.1} parent=11 // pred_region
          %s585 = ssub.s32 16, 16
          %586 = vsyncadd [#allocation9], %s585
          %s588 = sshll.u32 [#allocation10], 4
          %s589 = int_to_ptr.vmem [resolvable:$true] %s588
          %591 = dma.hbm_to_vmem [thread:$0]  %s4, 16, %s589, [#allocation9]
        $region20: #{tpu_custom_call.1} parent=11 // pred_fallthru
          _
        // Predicated region
        $region21: #{tpu_custom_call.1} parent=11 // pred_check
          %p592 = pneg %p188
        $region22: #{tpu_custom_call.1} parent=11 // pred_check_branch
          %594 = sbr.rel (%p592) target = $region24
        $region23: #{tpu_custom_call.1} parent=11 // pred_region
          %s596 = ssub.s32 16, 16
          %597 = vsyncadd [#allocation12], %s596
          %s599 = sshll.u32 [#allocation11], 4
          %s600 = int_to_ptr.vmem [resolvable:$true] %s599
          %602 = dma.hbm_to_vmem [thread:$0]  %s5, 16, %s600, [#allocation12]
        $region24: #{tpu_custom_call.1} parent=11 // pred_fallthru
          _
        // Predicated region
        $region25: #{tpu_custom_call.1} parent=11 // pred_check
          %p603 = pneg %p209
        $region26: #{tpu_custom_call.1} parent=11 // pred_check_branch
          %605 = sbr.rel (%p603) target = $region28
        $region27: #{tpu_custom_call.1} parent=11 // pred_region
          %s607 = ssub.s32 16, 16
          %608 = vsyncadd [#allocation12], %s607
          %s610 = sshll.u32 [#allocation13], 4
          %s611 = int_to_ptr.vmem [resolvable:$true] %s610
          %613 = dma.hbm_to_vmem [thread:$0]  %s6, 16, %s611, [#allocation12]
        $region28: #{tpu_custom_call.1} parent=11 // pred_fallthru
          _
        // Predicated region
        $region29: #{tpu_custom_call.1} parent=11 // pred_check
          %p614 = pneg %p230
        $region30: #{tpu_custom_call.1} parent=11 // pred_check_branch
          %616 = sbr.rel (%p614) target = $region32
        $region31: #{tpu_custom_call.1} parent=11 // pred_region
          %s618 = ssub.s32 16, 16
          %619 = vsyncadd [#allocation15], %s618
          %s621 = sshll.u32 [#allocation14], 4
          %s622 = int_to_ptr.vmem [resolvable:$true] %s621
          %624 = dma.hbm_to_vmem [thread:$0]  %s7, 16, %s622, [#allocation15]
        $region32: #{tpu_custom_call.1} parent=11 // pred_fallthru
          _
        // Predicated region
        $region33: #{tpu_custom_call.1} parent=11 // pred_check
          %p625 = pneg %p251
        $region34: #{tpu_custom_call.1} parent=11 // pred_check_branch
          %627 = sbr.rel (%p625) target = $region36
        $region35: #{tpu_custom_call.1} parent=11 // pred_region
          %s629 = ssub.s32 16, 16
          %630 = vsyncadd [#allocation15], %s629
          %s632 = sshll.u32 [#allocation16], 4
          %s633 = int_to_ptr.vmem [resolvable:$true] %s632
          %635 = dma.hbm_to_vmem [thread:$0]  %s8, 16, %s633, [#allocation15]
        $region36: #{tpu_custom_call.1} parent=11 // pred_fallthru
          _
        // Predicated region
        $region37: #{tpu_custom_call.1} parent=11 // pred_check
          %p636 = pneg %p272
        $region38: #{tpu_custom_call.1} parent=11 // pred_check_branch
          %638 = sbr.rel (%p636) target = $region40
        $region39: #{tpu_custom_call.1} parent=11 // pred_region
          _
        $region40: #{tpu_custom_call.1} parent=11 // pred_fallthru
          _
        // Predicated region
        $region41: #{tpu_custom_call.1} parent=11 // pred_check
          %p639 = pneg %p293
        $region42: #{tpu_custom_call.1} parent=11 // pred_check_branch
          %641 = sbr.rel (%p639) target = $region44
        $region43: #{tpu_custom_call.1} parent=11 // pred_region
          _
        $region44: #{tpu_custom_call.1} parent=11 // pred_fallthru
          _
        // Predicated region
        $region45: #{tpu_custom_call.1} parent=11 // pred_check
          %p642 = pneg %p314
        $region46: #{tpu_custom_call.1} parent=11 // pred_check_branch
          %644 = sbr.rel (%p642) target = $region48
        $region47: #{tpu_custom_call.1} parent=11 // pred_region
          %s646 = ssub.s32 256, 256
          %647 = vsyncadd [#allocation18], %s646
          %s648 = sshll.u32 [#allocation17], 4
          %s649 = int_to_ptr.vmem [resolvable:$true] %s648
          %654 = dma.hbm_to_vmem [thread:$0]  %s11, 256, %s649, [#allocation18], 64, 64, 4
        $region48: #{tpu_custom_call.1} parent=11 // pred_fallthru
          _
        // Predicated region
        $region49: #{tpu_custom_call.1} parent=11 // pred_check
          %p655 = pneg %p335
        $region50: #{tpu_custom_call.1} parent=11 // pred_check_branch
          %657 = sbr.rel (%p655) target = $region52
        $region51: #{tpu_custom_call.1} parent=11 // pred_region
          %s659 = ssub.s32 16, 16
          %660 = vsyncadd [#allocation18], %s659
          %s662 = sshll.u32 [#allocation19], 4
          %s663 = int_to_ptr.vmem [resolvable:$true] %s662
          %665 = dma.hbm_to_vmem [thread:$0]  %s12, 16, %s663, [#allocation18]
        $region52: #{tpu_custom_call.1} parent=11 // pred_fallthru
          _
        // Predicated region
        $region53: #{tpu_custom_call.1} parent=11 // pred_check
          %p666 = pneg %p356
        $region54: #{tpu_custom_call.1} parent=11 // pred_check_branch
          %668 = sbr.rel (%p666) target = $region56
        $region55: #{tpu_custom_call.1} parent=11 // pred_region
          %s670 = ssub.s32 16, 16
          %671 = vsyncadd [#allocation21], %s670
          %s673 = sshll.u32 [#allocation20], 4
          %s674 = int_to_ptr.vmem [resolvable:$true] %s673
          %676 = dma.hbm_to_vmem [thread:$0]  %s13, 16, %s674, [#allocation21]
        $region56: #{tpu_custom_call.1} parent=11 // pred_fallthru
          _
        // Predicated region
        $region57: #{tpu_custom_call.1} parent=11 // pred_check
          %p677 = pneg %p377
        $region58: #{tpu_custom_call.1} parent=11 // pred_check_branch
          %679 = sbr.rel (%p677) target = $region60
        $region59: #{tpu_custom_call.1} parent=11 // pred_region
          %s681 = ssub.s32 16, 16
          %682 = vsyncadd [#allocation21], %s681
          %s684 = sshll.u32 [#allocation22], 4
          %s685 = int_to_ptr.vmem [resolvable:$true] %s684
          %687 = dma.hbm_to_vmem [thread:$0]  %s14, 16, %s685, [#allocation21]
        $region60: #{tpu_custom_call.1} parent=11 // pred_fallthru
          _
        // Predicated region
        $region61: #{tpu_custom_call.1} parent=11 // pred_check
          %p688 = pneg %p398
        $region62: #{tpu_custom_call.1} parent=11 // pred_check_branch
          %690 = sbr.rel (%p688) target = $region64
        $region63: #{tpu_custom_call.1} parent=11 // pred_region
          _
        $region64: #{tpu_custom_call.1} parent=11 // pred_fallthru
          _
        // Predicated region
        $region65: #{tpu_custom_call.1} parent=11 // pred_check
          %p691 = pneg %p419
        $region66: #{tpu_custom_call.1} parent=11 // pred_check_branch
          %693 = sbr.rel (%p691) target = $region68
        $region67: #{tpu_custom_call.1} parent=11 // pred_region
          %s695 = ssub.s32 16, 16
          %696 = vsyncadd [#allocation24], %s695
          %s698 = sshll.u32 [#allocation23], 4
          %s699 = int_to_ptr.vmem [resolvable:$true] %s698
          %701 = dma.hbm_to_vmem [thread:$0]  %s16, 16, %s699, [#allocation24]
        $region68: #{tpu_custom_call.1} parent=11 // pred_fallthru
          _
        // Predicated region
        $region69: #{tpu_custom_call.1} parent=11 // pred_check
          %p702 = pneg %p440
        $region70: #{tpu_custom_call.1} parent=11 // pred_check_branch
          %704 = sbr.rel (%p702) target = $region72
        $region71: #{tpu_custom_call.1} parent=11 // pred_region
          %s706 = ssub.s32 16, 16
          %707 = vsyncadd [#allocation24], %s706
          %s709 = sshll.u32 [#allocation25], 4
          %s710 = int_to_ptr.vmem [resolvable:$true] %s709
          %712 = dma.hbm_to_vmem [thread:$0]  %s17, 16, %s710, [#allocation24]
        $region72: #{tpu_custom_call.1} parent=11 // pred_fallthru
          _
        // Predicated region
        $region73: #{tpu_custom_call.1} parent=11 // pred_check
          %p713 = pneg %p461
        $region74: #{tpu_custom_call.1} parent=11 // pred_check_branch
          %715 = sbr.rel (%p713) target = $region76
        $region75: #{tpu_custom_call.1} parent=11 // pred_region
          _
        $region76: #{tpu_custom_call.1} parent=11 // pred_fallthru
          _
        // Predicated region
        $region77: #{tpu_custom_call.1} parent=11 // pred_check
          %p716 = pneg %p482
        $region78: #{tpu_custom_call.1} parent=11 // pred_check_branch
          %718 = sbr.rel (%p716) target = $region80
        $region79: #{tpu_custom_call.1} parent=11 // pred_region
          _
        $region80: #{tpu_custom_call.1} parent=11 // pred_fallthru
          _
        // Predicated region
        $region81: #{tpu_custom_call.1} parent=11 // pred_check
          %p719 = pneg %p503
        $region82: #{tpu_custom_call.1} parent=11 // pred_check_branch
          %721 = sbr.rel (%p719) target = $region84
        $region83: #{tpu_custom_call.1} parent=11 // pred_region
          _
        $region84: #{tpu_custom_call.1} parent=11 // pred_fallthru
          _
      $region12: #{tpu_custom_call.1} parent=5 // pred_fallthru
        _
      %p722 = scmp.lt.s32.totalorder %s47, 2
      // Predicated region
      $region85: #{tpu_custom_call.1} parent=5 // pred_check
        %p723 = pneg %p722
      $region86: #{tpu_custom_call.1} parent=5 // pred_check_branch
        %725 = sbr.rel (%p723) target = $region88
      $region87: #{tpu_custom_call.1} parent=5 // pred_region
        // Predicated region
        $region89: #{tpu_custom_call.1} parent=87 // pred_check
          %p726 = pneg %p67
        $region90: #{tpu_custom_call.1} parent=87 // pred_check_branch
          %728 = sbr.rel (%p726) target = $region92
        $region91: #{tpu_custom_call.1} parent=87 // pred_region
          %s729 = sand.u32 %s57, 1
          %s730 = scalar_lea.sflag [#allocation3], %s729
          %s731 = sand.u32 %s57, 1
          %s732 = smul.addr %s731, 8
          %s733 = scalar_lea.vmem [#allocation2], %s732
          %s735 = ssub.s32 128, 128
          %736 = vsyncadd %s730, %s735
          %s737 = smul.addr %s47, 128
          %s738 = scalar_lea.hbm %s0, %s737
          %s740 = sshll.u32 %s733, 4
          %s741 = int_to_ptr.vmem [resolvable:$true] %s740
          %743 = dma.hbm_to_vmem [thread:$0]  %s738, 128, %s741, %s730
        $region92: #{tpu_custom_call.1} parent=87 // pred_fallthru
          _
        // Predicated region
        $region93: #{tpu_custom_call.1} parent=87 // pred_check
          %p744 = pneg %p93
        $region94: #{tpu_custom_call.1} parent=87 // pred_check_branch
          %746 = sbr.rel (%p744) target = $region96
        $region95: #{tpu_custom_call.1} parent=87 // pred_region
          %s747 = sand.u32 %s47, 1
          %s748 = scalar_lea.sflag [#allocation6], %s747
          %s749 = sand.u32 %s83, 1
          %s750 = smul.addr %s749, 8
          %s751 = scalar_lea.vmem [#allocation5], %s750
          %s753 = ssub.s32 128, 128
          %754 = vsyncadd %s748, %s753
          %s755 = smul.addr %s47, 128
          %s756 = scalar_lea.hbm %s1, %s755
          %s758 = sshll.u32 %s751, 4
          %s759 = int_to_ptr.vmem [resolvable:$true] %s758
          %761 = dma.hbm_to_vmem [thread:$0]  %s756, 128, %s759, %s748
        $region96: #{tpu_custom_call.1} parent=87 // pred_fallthru
          _
        // Predicated region
        $region97: #{tpu_custom_call.1} parent=87 // pred_check
          %p762 = pneg %p119
        $region98: #{tpu_custom_call.1} parent=87 // pred_check_branch
          %764 = sbr.rel (%p762) target = $region100
        $region99: #{tpu_custom_call.1} parent=87 // pred_region
          %s765 = sand.u32 %s47, 1
          %s766 = scalar_lea.sflag [#allocation6], %s765
          %s767 = sand.u32 %s109, 1
          %s768 = smul.addr %s767, 8
          %s769 = scalar_lea.vmem [#allocation7], %s768
          %s771 = ssub.s32 128, 128
          %772 = vsyncadd %s766, %s771
          %s773 = smul.addr %s47, 128
          %s774 = scalar_lea.hbm %s2, %s773
          %s776 = sshll.u32 %s769, 4
          %s777 = int_to_ptr.vmem [resolvable:$true] %s776
          %779 = dma.hbm_to_vmem [thread:$0]  %s774, 128, %s777, %s766
        $region100: #{tpu_custom_call.1} parent=87 // pred_fallthru
          _
      $region88: #{tpu_custom_call.1} parent=5 // pred_fallthru
        _
      %p780 = scmp.le.s32.totalorder 1, %s47
      %p781 = scmp.lt.s32.totalorder %s47, 3
      %p782 = pnand %p780, %p781
      %p783 = pneg %p782
      // Predicated region
      $region101: #{tpu_custom_call.1} parent=5 // pred_check
        _
      $region102: #{tpu_custom_call.1} parent=5 // pred_check_branch
        %785 = sbr.rel (%p782) target = $region104
      $region103: #{tpu_custom_call.1} parent=5 // pred_region
        %s786 = ssub.s32 %s47, 1
        %s787 = sand.u32 %s60, 1
        %s788 = scalar_lea.sflag [#allocation3], %s787
        %s789 = sand.u32 %s60, 1
        %s790 = smul.addr %s789, 8
        %s791 = scalar_lea.vmem [#allocation2], %s790
        // Predicated region
        $region105: #{tpu_custom_call.1} parent=103 // pred_check
          %p792 = pneg %p73
        $region106: #{tpu_custom_call.1} parent=103 // pred_check_branch
          %794 = sbr.rel (%p792) target = $region108
        $region107: #{tpu_custom_call.1} parent=103 // pred_region
          %795 = dma.done %s788, 128
        $region108: #{tpu_custom_call.1} parent=103 // pred_fallthru
          _
        %s796 = sand.u32 %s52, 1
        %s797 = scalar_lea.sflag [#allocation6], %s796
        %s798 = sand.u32 %s86, 1
        %s799 = smul.addr %s798, 8
        %s800 = scalar_lea.vmem [#allocation5], %s799
        // Predicated region
        $region109: #{tpu_custom_call.1} parent=103 // pred_check
          %p801 = pneg %p99
        $region110: #{tpu_custom_call.1} parent=103 // pred_check_branch
          %803 = sbr.rel (%p801) target = $region112
        $region111: #{tpu_custom_call.1} parent=103 // pred_region
          %804 = dma.done %s797, 128
        $region112: #{tpu_custom_call.1} parent=103 // pred_fallthru
          _
        %s805 = sand.u32 %s52, 1
        %s806 = scalar_lea.sflag [#allocation6], %s805
        %s807 = sand.u32 %s112, 1
        %s808 = smul.addr %s807, 8
        %s809 = scalar_lea.vmem [#allocation7], %s808
        // Predicated region
        $region113: #{tpu_custom_call.1} parent=103 // pred_check
          %p810 = pneg %p125
        $region114: #{tpu_custom_call.1} parent=103 // pred_check_branch
          %812 = sbr.rel (%p810) target = $region116
        $region115: #{tpu_custom_call.1} parent=103 // pred_region
          %813 = dma.done %s806, 128
        $region116: #{tpu_custom_call.1} parent=103 // pred_fallthru
          _
        // Predicated region
        $region117: #{tpu_custom_call.1} parent=103 // pred_check
          %p814 = pneg %p146
        $region118: #{tpu_custom_call.1} parent=103 // pred_check_branch
          %816 = sbr.rel (%p814) target = $region120
        $region119: #{tpu_custom_call.1} parent=103 // pred_region
          %817 = dma.done [#allocation9], 16
        $region120: #{tpu_custom_call.1} parent=103 // pred_fallthru
          _
        // Predicated region
        $region121: #{tpu_custom_call.1} parent=103 // pred_check
          %p818 = pneg %p167
        $region122: #{tpu_custom_call.1} parent=103 // pred_check_branch
          %820 = sbr.rel (%p818) target = $region124
        $region123: #{tpu_custom_call.1} parent=103 // pred_region
          %821 = dma.done [#allocation9], 16
        $region124: #{tpu_custom_call.1} parent=103 // pred_fallthru
          _
        // Predicated region
        $region125: #{tpu_custom_call.1} parent=103 // pred_check
          %p822 = pneg %p188
        $region126: #{tpu_custom_call.1} parent=103 // pred_check_branch
          %824 = sbr.rel (%p822) target = $region128
        $region127: #{tpu_custom_call.1} parent=103 // pred_region
          %825 = dma.done [#allocation12], 16
        $region128: #{tpu_custom_call.1} parent=103 // pred_fallthru
          _
        // Predicated region
        $region129: #{tpu_custom_call.1} parent=103 // pred_check
          %p826 = pneg %p209
        $region130: #{tpu_custom_call.1} parent=103 // pred_check_branch
          %828 = sbr.rel (%p826) target = $region132
        $region131: #{tpu_custom_call.1} parent=103 // pred_region
          %829 = dma.done [#allocation12], 16
        $region132: #{tpu_custom_call.1} parent=103 // pred_fallthru
          _
        // Predicated region
        $region133: #{tpu_custom_call.1} parent=103 // pred_check
          %p830 = pneg %p230
        $region134: #{tpu_custom_call.1} parent=103 // pred_check_branch
          %832 = sbr.rel (%p830) target = $region136
        $region135: #{tpu_custom_call.1} parent=103 // pred_region
          %833 = dma.done [#allocation15], 16
        $region136: #{tpu_custom_call.1} parent=103 // pred_fallthru
          _
        // Predicated region
        $region137: #{tpu_custom_call.1} parent=103 // pred_check
          %p834 = pneg %p251
        $region138: #{tpu_custom_call.1} parent=103 // pred_check_branch
          %836 = sbr.rel (%p834) target = $region140
        $region139: #{tpu_custom_call.1} parent=103 // pred_region
          %837 = dma.done [#allocation15], 16
        $region140: #{tpu_custom_call.1} parent=103 // pred_fallthru
          _
        // Predicated region
        $region141: #{tpu_custom_call.1} parent=103 // pred_check
          %p838 = pneg %p314
        $region142: #{tpu_custom_call.1} parent=103 // pred_check_branch
          %840 = sbr.rel (%p838) target = $region144
        $region143: #{tpu_custom_call.1} parent=103 // pred_region
          %841 = dma.done [#allocation18], 256
        $region144: #{tpu_custom_call.1} parent=103 // pred_fallthru
          _
        // Predicated region
        $region145: #{tpu_custom_call.1} parent=103 // pred_check
          %p842 = pneg %p335
        $region146: #{tpu_custom_call.1} parent=103 // pred_check_branch
          %844 = sbr.rel (%p842) target = $region148
        $region147: #{tpu_custom_call.1} parent=103 // pred_region
          %845 = dma.done [#allocation18], 16
        $region148: #{tpu_custom_call.1} parent=103 // pred_fallthru
          _
        // Predicated region
        $region149: #{tpu_custom_call.1} parent=103 // pred_check
          %p846 = pneg %p356
        $region150: #{tpu_custom_call.1} parent=103 // pred_check_branch
          %848 = sbr.rel (%p846) target = $region152
        $region151: #{tpu_custom_call.1} parent=103 // pred_region
          %849 = dma.done [#allocation21], 16
        $region152: #{tpu_custom_call.1} parent=103 // pred_fallthru
          _
        // Predicated region
        $region153: #{tpu_custom_call.1} parent=103 // pred_check
          %p850 = pneg %p377
        $region154: #{tpu_custom_call.1} parent=103 // pred_check_branch
          %852 = sbr.rel (%p850) target = $region156
        $region155: #{tpu_custom_call.1} parent=103 // pred_region
          %853 = dma.done [#allocation21], 16
        $region156: #{tpu_custom_call.1} parent=103 // pred_fallthru
          _
        // Predicated region
        $region157: #{tpu_custom_call.1} parent=103 // pred_check
          %p854 = pneg %p419
        $region158: #{tpu_custom_call.1} parent=103 // pred_check_branch
          %856 = sbr.rel (%p854) target = $region160
        $region159: #{tpu_custom_call.1} parent=103 // pred_region
          %857 = dma.done [#allocation24], 16
        $region160: #{tpu_custom_call.1} parent=103 // pred_fallthru
          _
        // Predicated region
        $region161: #{tpu_custom_call.1} parent=103 // pred_check
          %p858 = pneg %p440
        $region162: #{tpu_custom_call.1} parent=103 // pred_check_branch
          %860 = sbr.rel (%p858) target = $region164
        $region163: #{tpu_custom_call.1} parent=103 // pred_region
          %861 = dma.done [#allocation24], 16
        $region164: #{tpu_custom_call.1} parent=103 // pred_fallthru
          _
        %s862 = sand.u32 %s60, 1
        %s863 = scalar_lea.sflag [#allocation3], %s862
        %s864 = sand.u32 %s60, 1
        %s865 = smul.addr %s864, 8
        %s866 = scalar_lea.vmem [#allocation2], %s865
        %p867 = pneg %p73
        %p868 = pneg %p70
        %s869 = sand.u32 %s52, 1
        %s870 = scalar_lea.sflag [#allocation6], %s869
        %s871 = sand.u32 %s86, 1
        %s872 = smul.addr %s871, 8
        %s873 = scalar_lea.vmem [#allocation5], %s872
        %p874 = pneg %p99
        %p875 = pneg %p96
        %s876 = sand.u32 %s52, 1
        %s877 = scalar_lea.sflag [#allocation6], %s876
        %s878 = sand.u32 %s112, 1
        %s879 = smul.addr %s878, 8
        %s880 = scalar_lea.vmem [#allocation7], %s879
        %p881 = pneg %p125
        %p882 = pneg %p122
        %p883 = pneg %p146
        %p884 = pneg %p143
        %p885 = pneg %p167
        %p886 = pneg %p164
        %p887 = pneg %p188
        %p888 = pneg %p185
        %p889 = pneg %p209
        %p890 = pneg %p206
        %p891 = pneg %p230
        %p892 = pneg %p227
        %p893 = pneg %p251
        %p894 = pneg %p248
        %p895 = pneg %p272
        %p896 = pneg %p269
        %p897 = pneg %p293
        %p898 = pneg %p290
        %p899 = pneg %p314
        %p900 = pneg %p311
        %p901 = pneg %p335
        %p902 = pneg %p332
        %p903 = pneg %p356
        %p904 = pneg %p353
        %p905 = pneg %p377
        %p906 = pneg %p374
        %p907 = pneg %p398
        %p908 = pneg %p395
        %p909 = pneg %p419
        %p910 = pneg %p416
        %p911 = pneg %p440
        %p912 = pneg %p437
        %p913 = pneg %p461
        %p914 = pneg %p458
        %p915 = pneg %p482
        %p916 = pneg %p479
        %p917 = pneg %p503
        %p918 = pneg %p500
        %p919 = pneg %p529
        %p920 = pneg %p526
        %s921 = sand.u32 %s516, 1
        %s922 = scalar_lea.sflag [#allocation4], %s921
        %s923 = sand.u32 %s516, 1
        %s924 = smul.addr %s923, 8
        %s925 = scalar_lea.vmem [#allocation26], %s924
        %p926 = pneg %p555
        %p927 = pneg %p552
        %s928 = sand.u32 %s542, 1
        %s929 = scalar_lea.sflag [#allocation28], %s928
        %s930 = sand.u32 %s542, 1
        %s931 = smul.addr %s930, 8
        %s932 = scalar_lea.vmem [#allocation27], %s931
        %v934 = vld [vmem:[%s791] sm:$0xff]
        %v935 = vld [vmem:[%s800] sm:$0xff]
        %v936 = vld [vmem:[%s809] sm:$0xff]
        %v937 = vld [vmem:[#allocation8] sm:$0x1]
        %v938 = vld [vmem:[#allocation10] sm:$0x1]
        %vm939 = vcmask 261120
        %v940 = vsel %vm939, %v934, 0.0
        %941 = vadd.xlane.f32.xlu0 %v940
        %v942 = vpop.xlane.xlu0 %941
        %v943 = vrcp.pop 32.0
        %v944 = vmul.f32 %v942, %v943
        %v945 = vsub.f32 %v934, %v944
        %v946 = vmul.f32 %v945, %v945
        %v947 = vsel %vm939, %v946, 0.0
        %948 = vadd.xlane.f32.xlu0 %v947
        %v949 = vpop.xlane.xlu0 %948
        %v950 = vmul.f32 %v949, %v943
        %v951 = vadd.f32 %v950, 1e-05
        %v952 = vrsqrt.pop %v951
        %v953 = vmul.f32 %v945, %v952
        %v955 = vlaneseq
        %v956 = vshrl.u32 %v955, 7
        %v957 = vsub.s32 0, %v956
        %v958 = vrot.slane %v937, %v957
        %v960 = vmul.f32 %v953, %v958
        %v962 = vlaneseq
        %v963 = vshrl.u32 %v962, 7
        %v964 = vsub.s32 0, %v963
        %v965 = vrot.slane %v938, %v964
        %v967 = vadd.f32 %v960, %v965
        %v968 = vld [vmem:[#allocation11] sm:$0x1]
        %v969 = vld [vmem:[#allocation13] sm:$0x1]
        %v970 = vsel %vm939, %v935, 0.0
        %971 = vadd.xlane.f32.xlu0 %v970
        %v972 = vpop.xlane.xlu0 %971
        %v973 = vmul.f32 %v972, %v943
        %v974 = vsub.f32 %v935, %v973
        %v975 = vmul.f32 %v974, %v974
        %v976 = vsel %vm939, %v975, 0.0
        %977 = vadd.xlane.f32.xlu0 %v976
        %v978 = vpop.xlane.xlu0 %977
        %v979 = vmul.f32 %v978, %v943
        %v980 = vadd.f32 %v979, 1e-05
        %v981 = vrsqrt.pop %v980
        %v982 = vmul.f32 %v974, %v981
        %v984 = vlaneseq
        %v985 = vshrl.u32 %v984, 7
        %v986 = vsub.s32 0, %v985
        %v987 = vrot.slane %v968, %v986
        %v989 = vmul.f32 %v982, %v987
        %v991 = vlaneseq
        %v992 = vshrl.u32 %v991, 7
        %v993 = vsub.s32 0, %v992
        %v994 = vrot.slane %v969, %v993
        %v996 = vadd.f32 %v989, %v994
        %v997 = vld [vmem:[#allocation14] sm:$0x1]
        %v998 = vld [vmem:[#allocation16] sm:$0x1]
        %v999 = vsel %vm939, %v936, 0.0
        %1000 = vadd.xlane.f32.xlu0 %v999
        %v1001 = vpop.xlane.xlu0 %1000
        %v1002 = vmul.f32 %v1001, %v943
        %v1003 = vsub.f32 %v936, %v1002
        %v1004 = vmul.f32 %v1003, %v1003
        %v1005 = vsel %vm939, %v1004, 0.0
        %1006 = vadd.xlane.f32.xlu0 %v1005
        %v1007 = vpop.xlane.xlu0 %1006
        %v1008 = vmul.f32 %v1007, %v943
        %v1009 = vadd.f32 %v1008, 1e-05
        %v1010 = vrsqrt.pop %v1009
        %v1011 = vmul.f32 %v1003, %v1010
        %v1013 = vlaneseq
        %v1014 = vshrl.u32 %v1013, 7
        %v1015 = vsub.s32 0, %v1014
        %v1016 = vrot.slane %v997, %v1015
        %v1018 = vmul.f32 %v1011, %v1016
        %v1020 = vlaneseq
        %v1021 = vshrl.u32 %v1020, 7
        %v1022 = vsub.s32 0, %v1021
        %v1023 = vrot.slane %v998, %v1022
        %v1025 = vadd.f32 %v1018, %v1023
        %v1026 = vpack.c.bf16 %v967, %v967
        %v1027 = vld [vmem:[%s9] sm:$0xf]
        %v1028 = vld [vmem:[%s9 + $0x4] sm:$0xf]
        %v1029 = vld [vmem:[%s9 + $0x8] sm:$0xf]
        %v1030 = vld [vmem:[%s9 + $0xc] sm:$0xf]
        %v1031 = vld [vmem:[#allocation19] sm:$0x1]
        %v1033 = vlaneseq
        %v1034 = vshrl.u32 %v1033, 7
        %v1035 = vsub.s32 0, %v1034
        %v1036 = vrot.slane %v1031, %v1035
        %v1042 = vunpack.c.l.b16 %v1027
        %v1043 = vunpack.c.l.b16 %v1028
        %v1044 = vunpack.c.l.b16 %v1029
        %v1045 = vunpack.c.l.b16 %v1030
        %v1046 = vpack.c.b16 %v1043, %v1042
        %v1047 = vpack.c.b16 %v1045, %v1044
        %v1051 = vsel %vm939, %v1026, 0
        %1053 = vmatprep.subr.bf16.mxu0 0
        %1054 = vmatpush1.bf16.msra.mxu0 %v1046
        %1055 = vmatprep.subr.bf16.mxu0 0
        %1056 = vmatpush1.bf16.msra.mxu0 %v1047
        %1057 = vmatprep.subr.bf16.mxu0 0
        %1058 = vmatpush1.bf16.msra.mxu0 0
        %1059 = vmatprep.subr.bf16.mxu0 0
        %1060 = vmatpush1.bf16.msra.mxu0 0
        %1061 = vmatprep.subr.bf16.mxu0 0
        %1062 = vmatpush1.bf16.msra.mxu0 0
        %1063 = vmatprep.subr.bf16.mxu0 0
        %1064 = vmatpush1.bf16.msra.mxu0 0
        %1065 = vmatprep.subr.bf16.mxu0 0
        %1066 = vmatpush1.bf16.msra.mxu0 0
        %1067 = vmatprep.subr.bf16.mxu0 0
        %1068 = vmatpush1.bf16.msra.mxu0 0
        %1069 = vmatprep.subr.bf16.mxu0 0
        %1070 = vmatpush1.bf16.msra.mxu0 0
        %1071 = vmatprep.subr.bf16.mxu0 0
        %1072 = vmatpush1.bf16.msra.mxu0 0
        %1073 = vmatprep.subr.bf16.mxu0 0
        %1074 = vmatpush1.bf16.msra.mxu0 0
        %1075 = vmatprep.subr.bf16.mxu0 0
        %1076 = vmatpush1.bf16.msra.mxu0 0
        %1077 = vmatprep.subr.bf16.mxu0 0
        %1078 = vmatpush1.bf16.msra.mxu0 0
        %1079 = vmatprep.subr.bf16.mxu0 0
        %1080 = vmatpush1.bf16.msra.mxu0 0
        %1081 = vmatprep.subr.bf16.mxu0 0
        %1082 = vmatpush1.bf16.msra.mxu0 0
        %1083 = vmatprep.subr.bf16.mxu0 0
        %1084 = vmatpush1.bf16.msra.mxu0 0
        %1085 = vmatprep.mubr.bf16.mxu0 0
        %1086 = vmatmul.mubr.bf16.gmra.mrb[0].mxu0 %v1051
        %v1087 = vpop.f32.mrb[0].mxu0
        %v1088 = vadd.f32 %v1036, %v1087
        %v1089 = vpop.f32.mrb[0].mxu0
        %v1090 = vpop.f32.mrb[0].mxu0
        %v1091 = vpop.f32.mrb[0].mxu0
        %1092 = vdwg.mxu0
        %v1093 = vpack.c.bf16 %v1088, %v1088
        %v1094 = vpack.c.bf16 %v996, %v996
        %v1095 = vld [vmem:[%s10] sm:$0xf]
        %v1096 = vld [vmem:[%s10 + $0x4] sm:$0xf]
        %v1097 = vld [vmem:[%s10 + $0x8] sm:$0xf]
        %v1098 = vld [vmem:[%s10 + $0xc] sm:$0xf]
        %v1099 = vld [vmem:[#allocation20] sm:$0x1]
        %v1101 = vlaneseq
        %v1102 = vshrl.u32 %v1101, 7
        %v1103 = vsub.s32 0, %v1102
        %v1104 = vrot.slane %v1099, %v1103
        %v1110 = vunpack.c.l.b16 %v1095
        %v1111 = vunpack.c.l.b16 %v1096
        %v1112 = vunpack.c.l.b16 %v1097
        %v1113 = vunpack.c.l.b16 %v1098
        %v1114 = vpack.c.b16 %v1111, %v1110
        %v1115 = vpack.c.b16 %v1113, %v1112
        %v1119 = vsel %vm939, %v1094, 0
        %1121 = vmatprep.subr.bf16.mxu0 0
        %1122 = vmatpush1.bf16.msra.mxu0 %v1114
        %1123 = vmatprep.subr.bf16.mxu0 0
        %1124 = vmatpush1.bf16.msra.mxu0 %v1115
        %1125 = vmatprep.subr.bf16.mxu0 0
        %1126 = vmatpush1.bf16.msra.mxu0 0
        %1127 = vmatprep.subr.bf16.mxu0 0
        %1128 = vmatpush1.bf16.msra.mxu0 0
        %1129 = vmatprep.subr.bf16.mxu0 0
        %1130 = vmatpush1.bf16.msra.mxu0 0
        %1131 = vmatprep.subr.bf16.mxu0 0
        %1132 = vmatpush1.bf16.msra.mxu0 0
        %1133 = vmatprep.subr.bf16.mxu0 0
        %1134 = vmatpush1.bf16.msra.mxu0 0
        %1135 = vmatprep.subr.bf16.mxu0 0
        %1136 = vmatpush1.bf16.msra.mxu0 0
        %1137 = vmatprep.subr.bf16.mxu0 0
        %1138 = vmatpush1.bf16.msra.mxu0 0
        %1139 = vmatprep.subr.bf16.mxu0 0
        %1140 = vmatpush1.bf16.msra.mxu0 0
        %1141 = vmatprep.subr.bf16.mxu0 0
        %1142 = vmatpush1.bf16.msra.mxu0 0
        %1143 = vmatprep.subr.bf16.mxu0 0
        %1144 = vmatpush1.bf16.msra.mxu0 0
        %1145 = vmatprep.subr.bf16.mxu0 0
        %1146 = vmatpush1.bf16.msra.mxu0 0
        %1147 = vmatprep.subr.bf16.mxu0 0
        %1148 = vmatpush1.bf16.msra.mxu0 0
        %1149 = vmatprep.subr.bf16.mxu0 0
        %1150 = vmatpush1.bf16.msra.mxu0 0
        %1151 = vmatprep.subr.bf16.mxu0 0
        %1152 = vmatpush1.bf16.msra.mxu0 0
        %1153 = vmatprep.mubr.bf16.mxu0 0
        %1154 = vmatmul.mubr.bf16.gmra.mrb[0].mxu0 %v1119
        %v1155 = vpop.f32.mrb[0].mxu0
        %v1156 = vadd.f32 %v1104, %v1155
        %v1157 = vpop.f32.mrb[0].mxu0
        %v1158 = vpop.f32.mrb[0].mxu0
        %v1159 = vpop.f32.mrb[0].mxu0
        %1160 = vdwg.mxu0
        %v1161 = vpack.c.bf16 %v1156, %v1156
        %v1162 = vpack.c.bf16 %v1025, %v1025
        %v1163 = vld [vmem:[#allocation17] sm:$0xf]
        %v1164 = vld [vmem:[#allocation17 + $0x4] sm:$0xf]
        %v1165 = vld [vmem:[#allocation17 + $0x8] sm:$0xf]
        %v1166 = vld [vmem:[#allocation17 + $0xc] sm:$0xf]
        %v1167 = vld [vmem:[#allocation22] sm:$0x1]
        %v1169 = vlaneseq
        %v1170 = vshrl.u32 %v1169, 7
        %v1171 = vsub.s32 0, %v1170
        %v1172 = vrot.slane %v1167, %v1171
        %v1178 = vunpack.c.l.b16 %v1163
        %v1179 = vunpack.c.l.b16 %v1164
        %v1180 = vunpack.c.l.b16 %v1165
        %v1181 = vunpack.c.l.b16 %v1166
        %v1182 = vpack.c.b16 %v1179, %v1178
        %v1183 = vpack.c.b16 %v1181, %v1180
        %v1187 = vsel %vm939, %v1162, 0
        %1189 = vmatprep.subr.bf16.mxu0 0
        %1190 = vmatpush1.bf16.msra.mxu0 %v1182
        %1191 = vmatprep.subr.bf16.mxu0 0
        %1192 = vmatpush1.bf16.msra.mxu0 %v1183
        %1193 = vmatprep.subr.bf16.mxu0 0
        %1194 = vmatpush1.bf16.msra.mxu0 0
        %1195 = vmatprep.subr.bf16.mxu0 0
        %1196 = vmatpush1.bf16.msra.mxu0 0
        %1197 = vmatprep.subr.bf16.mxu0 0
        %1198 = vmatpush1.bf16.msra.mxu0 0
        %1199 = vmatprep.subr.bf16.mxu0 0
        %1200 = vmatpush1.bf16.msra.mxu0 0
        %1201 = vmatprep.subr.bf16.mxu0 0
        %1202 = vmatpush1.bf16.msra.mxu0 0
        %1203 = vmatprep.subr.bf16.mxu0 0
        %1204 = vmatpush1.bf16.msra.mxu0 0
        %1205 = vmatprep.subr.bf16.mxu0 0
        %1206 = vmatpush1.bf16.msra.mxu0 0
        %1207 = vmatprep.subr.bf16.mxu0 0
        %1208 = vmatpush1.bf16.msra.mxu0 0
        %1209 = vmatprep.subr.bf16.mxu0 0
        %1210 = vmatpush1.bf16.msra.mxu0 0
        %1211 = vmatprep.subr.bf16.mxu0 0
        %1212 = vmatpush1.bf16.msra.mxu0 0
        %1213 = vmatprep.subr.bf16.mxu0 0
        %1214 = vmatpush1.bf16.msra.mxu0 0
        %1215 = vmatprep.subr.bf16.mxu0 0
        %1216 = vmatpush1.bf16.msra.mxu0 0
        %1217 = vmatprep.subr.bf16.mxu0 0
        %1218 = vmatpush1.bf16.msra.mxu0 0
        %1219 = vmatprep.subr.bf16.mxu0 0
        %1220 = vmatpush1.bf16.msra.mxu0 0
        %1221 = vmatprep.mubr.bf16.mxu0 0
        %1222 = vmatmul.mubr.bf16.gmra.mrb[0].mxu0 %v1187
        %v1223 = vpop.f32.mrb[0].mxu0
        %v1224 = vadd.f32 %v1172, %v1223
        %v1225 = vpop.f32.mrb[0].mxu0
        %v1226 = vpop.f32.mrb[0].mxu0
        %v1227 = vpop.f32.mrb[0].mxu0
        %1228 = vdwg.mxu0
        %v1229 = vpack.c.bf16 %v1224, %v1224
        %1231 = vrot.lane.b32.xlu0 %v1093, 120
        %v1232 = vpop.permute.xlu0 %1231
        %1233 = vrot.lane.b32.xlu0 %v1093, 112
        %v1234 = vpop.permute.xlu0 %1233
        %1235 = vrot.lane.b32.xlu0 %v1093, 104
        %v1236 = vpop.permute.xlu0 %1235
        %1238 = vrot.lane.b32.xlu0 %v1161, 120
        %v1239 = vpop.permute.xlu0 %1238
        %1240 = vrot.lane.b32.xlu0 %v1161, 112
        %v1241 = vpop.permute.xlu0 %1240
        %1242 = vrot.lane.b32.xlu0 %v1161, 104
        %v1243 = vpop.permute.xlu0 %1242
        %1245 = vrot.lane.b32.xlu0 %v1229, 120
        %v1246 = vpop.permute.xlu0 %1245
        %1247 = vrot.lane.b32.xlu0 %v1229, 112
        %v1248 = vpop.permute.xlu0 %1247
        %1249 = vrot.lane.b32.xlu0 %v1229, 104
        %v1250 = vpop.permute.xlu0 %1249
        %vm1251 = vcmask 64512
        %v1253 = vsel %vm1251, %v1093, 0
        %v1256 = vsel %vm1251, %v1161, 0
        %1258 = vmatprep.subr.bf16.mxu0 0
        %1259 = vmatpush1.bf16.xpose.msra.mxu0 %v1256
        %1260 = vmatprep.subr.bf16.mxu0 0
        %1261 = vmatpush1.bf16.xpose.msra.mxu0 0
        %1262 = vmatprep.subr.bf16.mxu0 0
        %1263 = vmatpush1.bf16.xpose.msra.mxu0 0
        %1264 = vmatprep.subr.bf16.mxu0 0
        %1265 = vmatpush1.bf16.xpose.msra.mxu0 0
        %1266 = vmatprep.subr.bf16.mxu0 0
        %1267 = vmatpush1.bf16.xpose.msra.mxu0 0
        %1268 = vmatprep.subr.bf16.mxu0 0
        %1269 = vmatpush1.bf16.xpose.msra.mxu0 0
        %1270 = vmatprep.subr.bf16.mxu0 0
        %1271 = vmatpush1.bf16.xpose.msra.mxu0 0
        %1272 = vmatprep.subr.bf16.mxu0 0
        %1273 = vmatpush1.bf16.xpose.msra.mxu0 0
        %1274 = vmatprep.subr.bf16.mxu0 0
        %1275 = vmatpush1.bf16.xpose.msra.mxu0 0
        %1276 = vmatprep.subr.bf16.mxu0 0
        %1277 = vmatpush1.bf16.xpose.msra.mxu0 0
        %1278 = vmatprep.subr.bf16.mxu0 0
        %1279 = vmatpush1.bf16.xpose.msra.mxu0 0
        %1280 = vmatprep.subr.bf16.mxu0 0
        %1281 = vmatpush1.bf16.xpose.msra.mxu0 0
        %1282 = vmatprep.subr.bf16.mxu0 0
        %1283 = vmatpush1.bf16.xpose.msra.mxu0 0
        %1284 = vmatprep.subr.bf16.mxu0 0
        %1285 = vmatpush1.bf16.xpose.msra.mxu0 0
        %1286 = vmatprep.subr.bf16.mxu0 0
        %1287 = vmatpush1.bf16.xpose.msra.mxu0 0
        %1288 = vmatprep.subr.bf16.mxu0 0
        %1289 = vmatpush1.bf16.xpose.msra.mxu0 0
        %1290 = vmatprep.mubr.bf16.mxu0 0
        %1291 = vmatmul.mubr.bf16.gmra.mrb[0].mxu0 %v1253
        %v1292 = vpop.f32.mrb[0].mxu0
        %v1293 = vadd.f32 0.0, %v1292
        %v1294 = vpop.f32.mrb[0].mxu0
        %v1295 = vpop.f32.mrb[0].mxu0
        %v1296 = vpop.f32.mrb[0].mxu0
        %1297 = vdwg.mxu0
        %v1299 = vsel %vm1251, %v1232, 0
        %v1302 = vsel %vm1251, %v1239, 0
        %1304 = vmatprep.subr.bf16.mxu0 0
        %1305 = vmatpush1.bf16.xpose.msra.mxu0 %v1302
        %1306 = vmatprep.subr.bf16.mxu0 0
        %1307 = vmatpush1.bf16.xpose.msra.mxu0 0
        %1308 = vmatprep.subr.bf16.mxu0 0
        %1309 = vmatpush1.bf16.xpose.msra.mxu0 0
        %1310 = vmatprep.subr.bf16.mxu0 0
        %1311 = vmatpush1.bf16.xpose.msra.mxu0 0
        %1312 = vmatprep.subr.bf16.mxu0 0
        %1313 = vmatpush1.bf16.xpose.msra.mxu0 0
        %1314 = vmatprep.subr.bf16.mxu0 0
        %1315 = vmatpush1.bf16.xpose.msra.mxu0 0
        %1316 = vmatprep.subr.bf16.mxu0 0
        %1317 = vmatpush1.bf16.xpose.msra.mxu0 0
        %1318 = vmatprep.subr.bf16.mxu0 0
        %1319 = vmatpush1.bf16.xpose.msra.mxu0 0
        %1320 = vmatprep.subr.bf16.mxu0 0
        %1321 = vmatpush1.bf16.xpose.msra.mxu0 0
        %1322 = vmatprep.subr.bf16.mxu0 0
        %1323 = vmatpush1.bf16.xpose.msra.mxu0 0
        %1324 = vmatprep.subr.bf16.mxu0 0
        %1325 = vmatpush1.bf16.xpose.msra.mxu0 0
        %1326 = vmatprep.subr.bf16.mxu0 0
        %1327 = vmatpush1.bf16.xpose.msra.mxu0 0
        %1328 = vmatprep.subr.bf16.mxu0 0
        %1329 = vmatpush1.bf16.xpose.msra.mxu0 0
        %1330 = vmatprep.subr.bf16.mxu0 0
        %1331 = vmatpush1.bf16.xpose.msra.mxu0 0
        %1332 = vmatprep.subr.bf16.mxu0 0
        %1333 = vmatpush1.bf16.xpose.msra.mxu0 0
        %1334 = vmatprep.subr.bf16.mxu0 0
        %1335 = vmatpush1.bf16.xpose.msra.mxu0 0
        %1336 = vmatprep.mubr.bf16.mxu0 0
        %1337 = vmatmul.mubr.bf16.gmra.mrb[0].mxu0 %v1299
        %v1338 = vpop.f32.mrb[0].mxu0
        %v1339 = vadd.f32 0.0, %v1338
        %v1340 = vpop.f32.mrb[0].mxu0
        %v1341 = vpop.f32.mrb[0].mxu0
        %v1342 = vpop.f32.mrb[0].mxu0
        %1343 = vdwg.mxu0
        %v1345 = vsel %vm1251, %v1234, 0
        %v1348 = vsel %vm1251, %v1241, 0
        %1350 = vmatprep.subr.bf16.mxu0 0
        %1351 = vmatpush1.bf16.xpose.msra.mxu0 %v1348
        %1352 = vmatprep.subr.bf16.mxu0 0
        %1353 = vmatpush1.bf16.xpose.msra.mxu0 0
        %1354 = vmatprep.subr.bf16.mxu0 0
        %1355 = vmatpush1.bf16.xpose.msra.mxu0 0
        %1356 = vmatprep.subr.bf16.mxu0 0
        %1357 = vmatpush1.bf16.xpose.msra.mxu0 0
        %1358 = vmatprep.subr.bf16.mxu0 0
        %1359 = vmatpush1.bf16.xpose.msra.mxu0 0
        %1360 = vmatprep.subr.bf16.mxu0 0
        %1361 = vmatpush1.bf16.xpose.msra.mxu0 0
        %1362 = vmatprep.subr.bf16.mxu0 0
        %1363 = vmatpush1.bf16.xpose.msra.mxu0 0
        %1364 = vmatprep.subr.bf16.mxu0 0
        %1365 = vmatpush1.bf16.xpose.msra.mxu0 0
        %1366 = vmatprep.subr.bf16.mxu0 0
        %1367 = vmatpush1.bf16.xpose.msra.mxu0 0
        %1368 = vmatprep.subr.bf16.mxu0 0
        %1369 = vmatpush1.bf16.xpose.msra.mxu0 0
        %1370 = vmatprep.subr.bf16.mxu0 0
        %1371 = vmatpush1.bf16.xpose.msra.mxu0 0
        %1372 = vmatprep.subr.bf16.mxu0 0
        %1373 = vmatpush1.bf16.xpose.msra.mxu0 0
        %1374 = vmatprep.subr.bf16.mxu0 0
        %1375 = vmatpush1.bf16.xpose.msra.mxu0 0
        %1376 = vmatprep.subr.bf16.mxu0 0
        %1377 = vmatpush1.bf16.xpose.msra.mxu0 0
        %1378 = vmatprep.subr.bf16.mxu0 0
        %1379 = vmatpush1.bf16.xpose.msra.mxu0 0
        %1380 = vmatprep.subr.bf16.mxu0 0
        %1381 = vmatpush1.bf16.xpose.msra.mxu0 0
        %1382 = vmatprep.mubr.bf16.mxu0 0
        %1383 = vmatmul.mubr.bf16.gmra.mrb[0].mxu0 %v1345
        %v1384 = vpop.f32.mrb[0].mxu0
        %v1385 = vadd.f32 0.0, %v1384
        %v1386 = vpop.f32.mrb[0].mxu0
        %v1387 = vpop.f32.mrb[0].mxu0
        %v1388 = vpop.f32.mrb[0].mxu0
        %1389 = vdwg.mxu0
        %v1391 = vsel %vm1251, %v1236, 0
        %v1394 = vsel %vm1251, %v1243, 0
        %1396 = vmatprep.subr.bf16.mxu0 0
        %1397 = vmatpush1.bf16.xpose.msra.mxu0 %v1394
        %1398 = vmatprep.subr.bf16.mxu0 0
        %1399 = vmatpush1.bf16.xpose.msra.mxu0 0
        %1400 = vmatprep.subr.bf16.mxu0 0
        %1401 = vmatpush1.bf16.xpose.msra.mxu0 0
        %1402 = vmatprep.subr.bf16.mxu0 0
        %1403 = vmatpush1.bf16.xpose.msra.mxu0 0
        %1404 = vmatprep.subr.bf16.mxu0 0
        %1405 = vmatpush1.bf16.xpose.msra.mxu0 0
        %1406 = vmatprep.subr.bf16.mxu0 0
        %1407 = vmatpush1.bf16.xpose.msra.mxu0 0
        %1408 = vmatprep.subr.bf16.mxu0 0
        %1409 = vmatpush1.bf16.xpose.msra.mxu0 0
        %1410 = vmatprep.subr.bf16.mxu0 0
        %1411 = vmatpush1.bf16.xpose.msra.mxu0 0
        %1412 = vmatprep.subr.bf16.mxu0 0
        %1413 = vmatpush1.bf16.xpose.msra.mxu0 0
        %1414 = vmatprep.subr.bf16.mxu0 0
        %1415 = vmatpush1.bf16.xpose.msra.mxu0 0
        %1416 = vmatprep.subr.bf16.mxu0 0
        %1417 = vmatpush1.bf16.xpose.msra.mxu0 0
        %1418 = vmatprep.subr.bf16.mxu0 0
        %1419 = vmatpush1.bf16.xpose.msra.mxu0 0
        %1420 = vmatprep.subr.bf16.mxu0 0
        %1421 = vmatpush1.bf16.xpose.msra.mxu0 0
        %1422 = vmatprep.subr.bf16.mxu0 0
        %1423 = vmatpush1.bf16.xpose.msra.mxu0 0
        %1424 = vmatprep.subr.bf16.mxu0 0
        %1425 = vmatpush1.bf16.xpose.msra.mxu0 0
        %1426 = vmatprep.subr.bf16.mxu0 0
        %1427 = vmatpush1.bf16.xpose.msra.mxu0 0
        %1428 = vmatprep.mubr.bf16.mxu0 0
        %1429 = vmatmul.mubr.bf16.gmra.mrb[0].mxu0 %v1391
        %v1430 = vpop.f32.mrb[0].mxu0
        %v1431 = vadd.f32 0.0, %v1430
        %v1432 = vpop.f32.mrb[0].mxu0
        %v1433 = vpop.f32.mrb[0].mxu0
        %v1434 = vpop.f32.mrb[0].mxu0
        %1435 = vdwg.mxu0
        %v1436 = vsel %vm1251, %v1293, -inf
        %1437 = vmax.xlane.f32.xlu0 %v1436
        %v1438 = vpop.xlane.xlu0 %1437
        %v1439 = vsel %vm1251, %v1339, -inf
        %1440 = vmax.xlane.f32.xlu0 %v1439
        %v1441 = vpop.xlane.xlu0 %1440
        %v1442 = vsel %vm1251, %v1385, -inf
        %1443 = vmax.xlane.f32.xlu0 %v1442
        %v1444 = vpop.xlane.xlu0 %1443
        %v1445 = vsel %vm1251, %v1431, -inf
        %1446 = vmax.xlane.f32.xlu0 %v1445
        %v1447 = vpop.xlane.xlu0 %1446
        %v1448 = vsub.f32 %v1293, %v1438
        %v1449 = vsub.f32 %v1339, %v1441
        %v1450 = vsub.f32 %v1385, %v1444
        %v1451 = vsub.f32 %v1431, %v1447
        %v1452 = vmul.f32 %v1448, 1.442695
        %v1453 = vpow.pop %v1452
        %v1454 = vmul.f32 %v1449, 1.442695
        %v1455 = vpow.pop %v1454
        %v1456 = vmul.f32 %v1450, 1.442695
        %v1457 = vpow.pop %v1456
        %v1458 = vmul.f32 %v1451, 1.442695
        %v1459 = vpow.pop %v1458
        %v1460 = vsel %vm1251, %v1453, 0.0
        %1461 = vadd.xlane.f32.xlu0 %v1460
        %v1462 = vpop.xlane.xlu0 %1461
        %v1463 = vsel %vm1251, %v1455, 0.0
        %1464 = vadd.xlane.f32.xlu0 %v1463
        %v1465 = vpop.xlane.xlu0 %1464
        %v1466 = vsel %vm1251, %v1457, 0.0
        %1467 = vadd.xlane.f32.xlu0 %v1466
        %v1468 = vpop.xlane.xlu0 %1467
        %v1469 = vsel %vm1251, %v1459, 0.0
        %1470 = vadd.xlane.f32.xlu0 %v1469
        %v1471 = vpop.xlane.xlu0 %1470
        %v1472 = vrcp.pop %v1462
        %v1473 = vmul.f32 %v1453, %v1472
        %v1474 = vrcp.pop %v1465
        %v1475 = vmul.f32 %v1455, %v1474
        %v1476 = vrcp.pop %v1468
        %v1477 = vmul.f32 %v1457, %v1476
        %v1478 = vrcp.pop %v1471
        %v1479 = vmul.f32 %v1459, %v1478
        %v1480 = vpack.c.bf16 %v1473, %v1473
        %v1481 = vpack.c.bf16 %v1475, %v1475
        %v1482 = vpack.c.bf16 %v1477, %v1477
        %v1483 = vpack.c.bf16 %v1479, %v1479
        %v1485 = vsel %vm1251, %v1480, 0
        %vm1487 = vcmask 1043456
        %v1489 = vsel %vm1487, %v1229, 0
        %1491 = vmatprep.subr.bf16.mxu0 0
        %1492 = vmatpush1.bf16.msra.mxu0 %v1489
        %1493 = vmatprep.subr.bf16.mxu0 0
        %1494 = vmatpush1.bf16.msra.mxu0 0
        %1495 = vmatprep.subr.bf16.mxu0 0
        %1496 = vmatpush1.bf16.msra.mxu0 0
        %1497 = vmatprep.subr.bf16.mxu0 0
        %1498 = vmatpush1.bf16.msra.mxu0 0
        %1499 = vmatprep.subr.bf16.mxu0 0
        %1500 = vmatpush1.bf16.msra.mxu0 0
        %1501 = vmatprep.subr.bf16.mxu0 0
        %1502 = vmatpush1.bf16.msra.mxu0 0
        %1503 = vmatprep.subr.bf16.mxu0 0
        %1504 = vmatpush1.bf16.msra.mxu0 0
        %1505 = vmatprep.subr.bf16.mxu0 0
        %1506 = vmatpush1.bf16.msra.mxu0 0
        %1507 = vmatprep.subr.bf16.mxu0 0
        %1508 = vmatpush1.bf16.msra.mxu0 0
        %1509 = vmatprep.subr.bf16.mxu0 0
        %1510 = vmatpush1.bf16.msra.mxu0 0
        %1511 = vmatprep.subr.bf16.mxu0 0
        %1512 = vmatpush1.bf16.msra.mxu0 0
        %1513 = vmatprep.subr.bf16.mxu0 0
        %1514 = vmatpush1.bf16.msra.mxu0 0
        %1515 = vmatprep.subr.bf16.mxu0 0
        %1516 = vmatpush1.bf16.msra.mxu0 0
        %1517 = vmatprep.subr.bf16.mxu0 0
        %1518 = vmatpush1.bf16.msra.mxu0 0
        %1519 = vmatprep.subr.bf16.mxu0 0
        %1520 = vmatpush1.bf16.msra.mxu0 0
        %1521 = vmatprep.subr.bf16.mxu0 0
        %1522 = vmatpush1.bf16.msra.mxu0 0
        %1523 = vmatprep.mubr.bf16.mxu0 0
        %1524 = vmatmul.mubr.bf16.gmra.mrb[0].mxu0 %v1485
        %v1525 = vpop.f32.mrb[0].mxu0
        %v1526 = vadd.f32 0.0, %v1525
        %v1527 = vpop.f32.mrb[0].mxu0
        %v1528 = vpop.f32.mrb[0].mxu0
        %v1529 = vpop.f32.mrb[0].mxu0
        %1530 = vdwg.mxu0
        %v1532 = vsel %vm1251, %v1481, 0
        %v1535 = vsel %vm1487, %v1246, 0
        %1537 = vmatprep.subr.bf16.mxu0 0
        %1538 = vmatpush1.bf16.msra.mxu0 %v1535
        %1539 = vmatprep.subr.bf16.mxu0 0
        %1540 = vmatpush1.bf16.msra.mxu0 0
        %1541 = vmatprep.subr.bf16.mxu0 0
        %1542 = vmatpush1.bf16.msra.mxu0 0
        %1543 = vmatprep.subr.bf16.mxu0 0
        %1544 = vmatpush1.bf16.msra.mxu0 0
        %1545 = vmatprep.subr.bf16.mxu0 0
        %1546 = vmatpush1.bf16.msra.mxu0 0
        %1547 = vmatprep.subr.bf16.mxu0 0
        %1548 = vmatpush1.bf16.msra.mxu0 0
        %1549 = vmatprep.subr.bf16.mxu0 0
        %1550 = vmatpush1.bf16.msra.mxu0 0
        %1551 = vmatprep.subr.bf16.mxu0 0
        %1552 = vmatpush1.bf16.msra.mxu0 0
        %1553 = vmatprep.subr.bf16.mxu0 0
        %1554 = vmatpush1.bf16.msra.mxu0 0
        %1555 = vmatprep.subr.bf16.mxu0 0
        %1556 = vmatpush1.bf16.msra.mxu0 0
        %1557 = vmatprep.subr.bf16.mxu0 0
        %1558 = vmatpush1.bf16.msra.mxu0 0
        %1559 = vmatprep.subr.bf16.mxu0 0
        %1560 = vmatpush1.bf16.msra.mxu0 0
        %1561 = vmatprep.subr.bf16.mxu0 0
        %1562 = vmatpush1.bf16.msra.mxu0 0
        %1563 = vmatprep.subr.bf16.mxu0 0
        %1564 = vmatpush1.bf16.msra.mxu0 0
        %1565 = vmatprep.subr.bf16.mxu0 0
        %1566 = vmatpush1.bf16.msra.mxu0 0
        %1567 = vmatprep.subr.bf16.mxu0 0
        %1568 = vmatpush1.bf16.msra.mxu0 0
        %1569 = vmatprep.mubr.bf16.mxu0 0
        %1570 = vmatmul.mubr.bf16.gmra.mrb[0].mxu0 %v1532
        %v1571 = vpop.f32.mrb[0].mxu0
        %v1572 = vadd.f32 0.0, %v1571
        %v1573 = vpop.f32.mrb[0].mxu0
        %v1574 = vpop.f32.mrb[0].mxu0
        %v1575 = vpop.f32.mrb[0].mxu0
        %1576 = vdwg.mxu0
        %v1578 = vsel %vm1251, %v1482, 0
        %v1581 = vsel %vm1487, %v1248, 0
        %1583 = vmatprep.subr.bf16.mxu0 0
        %1584 = vmatpush1.bf16.msra.mxu0 %v1581
        %1585 = vmatprep.subr.bf16.mxu0 0
        %1586 = vmatpush1.bf16.msra.mxu0 0
        %1587 = vmatprep.subr.bf16.mxu0 0
        %1588 = vmatpush1.bf16.msra.mxu0 0
        %1589 = vmatprep.subr.bf16.mxu0 0
        %1590 = vmatpush1.bf16.msra.mxu0 0
        %1591 = vmatprep.subr.bf16.mxu0 0
        %1592 = vmatpush1.bf16.msra.mxu0 0
        %1593 = vmatprep.subr.bf16.mxu0 0
        %1594 = vmatpush1.bf16.msra.mxu0 0
        %1595 = vmatprep.subr.bf16.mxu0 0
        %1596 = vmatpush1.bf16.msra.mxu0 0
        %1597 = vmatprep.subr.bf16.mxu0 0
        %1598 = vmatpush1.bf16.msra.mxu0 0
        %1599 = vmatprep.subr.bf16.mxu0 0
        %1600 = vmatpush1.bf16.msra.mxu0 0
        %1601 = vmatprep.subr.bf16.mxu0 0
        %1602 = vmatpush1.bf16.msra.mxu0 0
        %1603 = vmatprep.subr.bf16.mxu0 0
        %1604 = vmatpush1.bf16.msra.mxu0 0
        %1605 = vmatprep.subr.bf16.mxu0 0
        %1606 = vmatpush1.bf16.msra.mxu0 0
        %1607 = vmatprep.subr.bf16.mxu0 0
        %1608 = vmatpush1.bf16.msra.mxu0 0
        %1609 = vmatprep.subr.bf16.mxu0 0
        %1610 = vmatpush1.bf16.msra.mxu0 0
        %1611 = vmatprep.subr.bf16.mxu0 0
        %1612 = vmatpush1.bf16.msra.mxu0 0
        %1613 = vmatprep.subr.bf16.mxu0 0
        %1614 = vmatpush1.bf16.msra.mxu0 0
        %1615 = vmatprep.mubr.bf16.mxu0 0
        %1616 = vmatmul.mubr.bf16.gmra.mrb[0].mxu0 %v1578
        %v1617 = vpop.f32.mrb[0].mxu0
        %v1618 = vadd.f32 0.0, %v1617
        %v1619 = vpop.f32.mrb[0].mxu0
        %v1620 = vpop.f32.mrb[0].mxu0
        %v1621 = vpop.f32.mrb[0].mxu0
        %1622 = vdwg.mxu0
        %v1624 = vsel %vm1251, %v1483, 0
        %v1627 = vsel %vm1487, %v1250, 0
        %1629 = vmatprep.subr.bf16.mxu0 0
        %1630 = vmatpush1.bf16.msra.mxu0 %v1627
        %1631 = vmatprep.subr.bf16.mxu0 0
        %1632 = vmatpush1.bf16.msra.mxu0 0
        %1633 = vmatprep.subr.bf16.mxu0 0
        %1634 = vmatpush1.bf16.msra.mxu0 0
        %1635 = vmatprep.subr.bf16.mxu0 0
        %1636 = vmatpush1.bf16.msra.mxu0 0
        %1637 = vmatprep.subr.bf16.mxu0 0
        %1638 = vmatpush1.bf16.msra.mxu0 0
        %1639 = vmatprep.subr.bf16.mxu0 0
        %1640 = vmatpush1.bf16.msra.mxu0 0
        %1641 = vmatprep.subr.bf16.mxu0 0
        %1642 = vmatpush1.bf16.msra.mxu0 0
        %1643 = vmatprep.subr.bf16.mxu0 0
        %1644 = vmatpush1.bf16.msra.mxu0 0
        %1645 = vmatprep.subr.bf16.mxu0 0
        %1646 = vmatpush1.bf16.msra.mxu0 0
        %1647 = vmatprep.subr.bf16.mxu0 0
        %1648 = vmatpush1.bf16.msra.mxu0 0
        %1649 = vmatprep.subr.bf16.mxu0 0
        %1650 = vmatpush1.bf16.msra.mxu0 0
        %1651 = vmatprep.subr.bf16.mxu0 0
        %1652 = vmatpush1.bf16.msra.mxu0 0
        %1653 = vmatprep.subr.bf16.mxu0 0
        %1654 = vmatpush1.bf16.msra.mxu0 0
        %1655 = vmatprep.subr.bf16.mxu0 0
        %1656 = vmatpush1.bf16.msra.mxu0 0
        %1657 = vmatprep.subr.bf16.mxu0 0
        %1658 = vmatpush1.bf16.msra.mxu0 0
        %1659 = vmatprep.subr.bf16.mxu0 0
        %1660 = vmatpush1.bf16.msra.mxu0 0
        %1661 = vmatprep.mubr.bf16.mxu0 0
        %1662 = vmatmul.mubr.bf16.gmra.mrb[0].mxu0 %v1624
        %v1663 = vpop.f32.mrb[0].mxu0
        %v1664 = vadd.f32 0.0, %v1663
        %v1665 = vpop.f32.mrb[0].mxu0
        %v1666 = vpop.f32.mrb[0].mxu0
        %v1667 = vpop.f32.mrb[0].mxu0
        %1668 = vdwg.mxu0
        %v1669 = vsel %vm1251, %v1473, 0.0
        %v1670 = vsel %vm1251, %v1475, 0.0
        %v1671 = vadd.f32 %v1669, %v1670
        %v1672 = vsel %vm1251, %v1477, 0.0
        %v1673 = vadd.f32 %v1671, %v1672
        %v1674 = vsel %vm1251, %v1479, 0.0
        %v1675 = vadd.f32 %v1673, %v1674
        %v1676 = vrcp.pop 4.0
        %v1677 = vmul.f32 %v1675, %v1676
        %v1678 = vpack.c.bf16 %v1526, %v1526
        %v1679 = vpack.c.bf16 %v1572, %v1572
        %v1680 = vpack.c.bf16 %v1618, %v1618
        %v1681 = vpack.c.bf16 %v1664, %v1664
        %1683 = vrot.lane.b32.xlu0 %v1679, 8
        %v1684 = vpop.permute.xlu0 %1683
        %1686 = vrot.lane.b32.xlu0 %v1680, 16
        %v1687 = vpop.permute.xlu0 %1686
        %1689 = vrot.lane.b32.xlu0 %v1681, 24
        %v1690 = vpop.permute.xlu0 %1689
        %v1693 = vsel %vm1251, %v1678, %v1684
        %vm1694 = vcmask 130048
        %v1696 = vsel %vm1694, %v1693, %v1687
        %vm1697 = vcmask 195584
        %v1699 = vsel %vm1697, %v1696, %v1690
        %v1700 = vld [vmem:[%s15] sm:$0xf]
        %v1701 = vld [vmem:[%s15 + $0x4] sm:$0xf]
        %v1702 = vld [vmem:[%s15 + $0x8] sm:$0xf]
        %v1703 = vld [vmem:[%s15 + $0xc] sm:$0xf]
        %v1704 = vld [vmem:[#allocation23] sm:$0x1]
        %v1706 = vlaneseq
        %v1707 = vshrl.u32 %v1706, 7
        %v1708 = vsub.s32 0, %v1707
        %v1709 = vrot.slane %v1704, %v1708
        %v1715 = vunpack.c.l.b16 %v1700
        %v1716 = vunpack.c.l.b16 %v1701
        %v1717 = vunpack.c.l.b16 %v1702
        %v1718 = vunpack.c.l.b16 %v1703
        %v1719 = vpack.c.b16 %v1716, %v1715
        %v1720 = vpack.c.b16 %v1718, %v1717
        %v1723 = vsel %vm939, %v1699, 0
        %1725 = vmatprep.subr.bf16.mxu0 0
        %1726 = vmatpush1.bf16.msra.mxu0 %v1719
        %1727 = vmatprep.subr.bf16.mxu0 0
        %1728 = vmatpush1.bf16.msra.mxu0 %v1720
        %1729 = vmatprep.subr.bf16.mxu0 0
        %1730 = vmatpush1.bf16.msra.mxu0 0
        %1731 = vmatprep.subr.bf16.mxu0 0
        %1732 = vmatpush1.bf16.msra.mxu0 0
        %1733 = vmatprep.subr.bf16.mxu0 0
        %1734 = vmatpush1.bf16.msra.mxu0 0
        %1735 = vmatprep.subr.bf16.mxu0 0
        %1736 = vmatpush1.bf16.msra.mxu0 0
        %1737 = vmatprep.subr.bf16.mxu0 0
        %1738 = vmatpush1.bf16.msra.mxu0 0
        %1739 = vmatprep.subr.bf16.mxu0 0
        %1740 = vmatpush1.bf16.msra.mxu0 0
        %1741 = vmatprep.subr.bf16.mxu0 0
        %1742 = vmatpush1.bf16.msra.mxu0 0
        %1743 = vmatprep.subr.bf16.mxu0 0
        %1744 = vmatpush1.bf16.msra.mxu0 0
        %1745 = vmatprep.subr.bf16.mxu0 0
        %1746 = vmatpush1.bf16.msra.mxu0 0
        %1747 = vmatprep.subr.bf16.mxu0 0
        %1748 = vmatpush1.bf16.msra.mxu0 0
        %1749 = vmatprep.subr.bf16.mxu0 0
        %1750 = vmatpush1.bf16.msra.mxu0 0
        %1751 = vmatprep.subr.bf16.mxu0 0
        %1752 = vmatpush1.bf16.msra.mxu0 0
        %1753 = vmatprep.subr.bf16.mxu0 0
        %1754 = vmatpush1.bf16.msra.mxu0 0
        %1755 = vmatprep.subr.bf16.mxu0 0
        %1756 = vmatpush1.bf16.msra.mxu0 0
        %1757 = vmatprep.mubr.bf16.mxu0 0
        %1758 = vmatmul.mubr.bf16.gmra.mrb[0].mxu0 %v1723
        %v1759 = vpop.f32.mrb[0].mxu0
        %v1760 = vadd.f32 %v1709, %v1759
        %v1761 = vpop.f32.mrb[0].mxu0
        %v1762 = vpop.f32.mrb[0].mxu0
        %v1763 = vpop.f32.mrb[0].mxu0
        %1764 = vdwg.mxu0
        %v1765 = vld [vmem:[#allocation25] sm:$0x1]
        %v1766 = vld [vmem:[%s18] sm:$0x1]
        %v1767 = vsel %vm939, %v1760, 0.0
        %1768 = vadd.xlane.f32.xlu0 %v1767
        %v1769 = vpop.xlane.xlu0 %1768
        %v1770 = vmul.f32 %v1769, %v943
        %v1771 = vsub.f32 %v1760, %v1770
        %v1772 = vmul.f32 %v1771, %v1771
        %v1773 = vsel %vm939, %v1772, 0.0
        %1774 = vadd.xlane.f32.xlu0 %v1773
        %v1775 = vpop.xlane.xlu0 %1774
        %v1776 = vmul.f32 %v1775, %v943
        %v1777 = vadd.f32 %v1776, 1e-05
        %v1778 = vrsqrt.pop %v1777
        %v1779 = vmul.f32 %v1771, %v1778
        %v1781 = vlaneseq
        %v1782 = vshrl.u32 %v1781, 7
        %v1783 = vsub.s32 0, %v1782
        %v1784 = vrot.slane %v1765, %v1783
        %v1786 = vmul.f32 %v1779, %v1784
        %v1788 = vlaneseq
        %v1789 = vshrl.u32 %v1788, 7
        %v1790 = vsub.s32 0, %v1789
        %v1791 = vrot.slane %v1766, %v1790
        %v1793 = vadd.f32 %v1786, %v1791
        %v1794 = vadd.f32 %v967, %v1793
        %v1795 = vpack.c.bf16 %v1794, %v1794
        %v1796 = vld [vmem:[%s19] sm:$0xf]
        %v1797 = vld [vmem:[%s19 + $0x4] sm:$0xf]
        %v1798 = vld [vmem:[%s19 + $0x8] sm:$0xf]
        %v1799 = vld [vmem:[%s19 + $0xc] sm:$0xf]
        %v1800 = vld [vmem:[%s20] sm:$0x1]
        %v1802 = vlaneseq
        %v1803 = vshrl.u32 %v1802, 7
        %v1804 = vsub.s32 0, %v1803
        %v1805 = vrot.slane %v1800, %v1804
        %v1811 = vunpack.c.l.b16 %v1796
        %v1812 = vunpack.c.l.b16 %v1797
        %v1813 = vunpack.c.l.b16 %v1798
        %v1814 = vunpack.c.l.b16 %v1799
        %v1815 = vpack.c.b16 %v1812, %v1811
        %v1816 = vpack.c.b16 %v1814, %v1813
        %v1820 = vsel %vm939, %v1795, 0
        %1822 = vmatprep.subr.bf16.mxu0 0
        %1823 = vmatpush1.bf16.msra.mxu0 %v1815
        %1824 = vmatprep.subr.bf16.mxu0 0
        %1825 = vmatpush1.bf16.msra.mxu0 %v1816
        %1826 = vmatprep.subr.bf16.mxu0 0
        %1827 = vmatpush1.bf16.msra.mxu0 0
        %1828 = vmatprep.subr.bf16.mxu0 0
        %1829 = vmatpush1.bf16.msra.mxu0 0
        %1830 = vmatprep.subr.bf16.mxu0 0
        %1831 = vmatpush1.bf16.msra.mxu0 0
        %1832 = vmatprep.subr.bf16.mxu0 0
        %1833 = vmatpush1.bf16.msra.mxu0 0
        %1834 = vmatprep.subr.bf16.mxu0 0
        %1835 = vmatpush1.bf16.msra.mxu0 0
        %1836 = vmatprep.subr.bf16.mxu0 0
        %1837 = vmatpush1.bf16.msra.mxu0 0
        %1838 = vmatprep.subr.bf16.mxu0 0
        %1839 = vmatpush1.bf16.msra.mxu0 0
        %1840 = vmatprep.subr.bf16.mxu0 0
        %1841 = vmatpush1.bf16.msra.mxu0 0
        %1842 = vmatprep.subr.bf16.mxu0 0
        %1843 = vmatpush1.bf16.msra.mxu0 0
        %1844 = vmatprep.subr.bf16.mxu0 0
        %1845 = vmatpush1.bf16.msra.mxu0 0
        %1846 = vmatprep.subr.bf16.mxu0 0
        %1847 = vmatpush1.bf16.msra.mxu0 0
        %1848 = vmatprep.subr.bf16.mxu0 0
        %1849 = vmatpush1.bf16.msra.mxu0 0
        %1850 = vmatprep.subr.bf16.mxu0 0
        %1851 = vmatpush1.bf16.msra.mxu0 0
        %1852 = vmatprep.subr.bf16.mxu0 0
        %1853 = vmatpush1.bf16.msra.mxu0 0
        %1854 = vmatprep.mubr.bf16.mxu0 0
        %1855 = vmatmul.mubr.bf16.gmra.mrb[0].mxu0 %v1820
        %v1856 = vpop.f32.mrb[0].mxu0
        %v1857 = vadd.f32 %v1805, %v1856
        %v1858 = vpop.f32.mrb[0].mxu0
        %v1859 = vpop.f32.mrb[0].mxu0
        %v1860 = vpop.f32.mrb[0].mxu0
        %1861 = vdwg.mxu0
        %v1862 = vmul.f32 %v1857, 0.5
        %v1863 = vmul.f32 %v1857, %v1857
        %v1864 = vmul.f32 %v1863, %v1857
        %v1865 = vmul.f32 %v1864, 0.044715
        %v1866 = vadd.f32 %v1857, %v1865
        %v1867 = vmul.f32 %v1866, 0.7978846
        %v1868 = vtanh.pop %v1867
        %v1869 = vadd.f32 %v1868, 1.0
        %v1870 = vmul.f32 %v1862, %v1869
        %v1871 = vadd.f32 %v1794, %v1870
        %1872 = vst.msk [vmem:[%s925] sm:$0xff] %vm939, %v1871
        %1873 = vst.msk [vmem:[%s932] sm:$0xff] %vm1251, %v1677
        %s1874 = sand.u32 %s516, 1
        %s1875 = scalar_lea.sflag [#allocation4], %s1874
        %s1876 = sand.u32 %s516, 1
        %s1877 = smul.addr %s1876, 8
        %s1878 = scalar_lea.vmem [#allocation26], %s1877
        %s1879 = sand.u32 %s542, 1
        %s1880 = scalar_lea.sflag [#allocation28], %s1879
        %s1881 = sand.u32 %s542, 1
        %s1882 = smul.addr %s1881, 8
        %s1883 = scalar_lea.vmem [#allocation27], %s1882
        // Predicated region
        $region165: #{tpu_custom_call.1} parent=103 // pred_check
          %p1884 = pneg %p526
        $region166: #{tpu_custom_call.1} parent=103 // pred_check_branch
          %1886 = sbr.rel (%p1884) target = $region168
        $region167: #{tpu_custom_call.1} parent=103 // pred_region
          %s1888 = ssub.s32 128, 128
          %1889 = vsyncadd %s1875, %s1888
          %s1890 = smul.addr %s52, 128
          %s1891 = scalar_lea.hbm %s21, %s1890
          %s1893 = sshll.u32 %s1878, 4
          %s1894 = int_to_ptr.vmem [resolvable:$true] %s1893
          %1896 = dma.vmem_to_hbm [thread:$0]  %s1894, 128, %s1891, %s1875
        $region168: #{tpu_custom_call.1} parent=103 // pred_fallthru
          _
        // Predicated region
        $region169: #{tpu_custom_call.1} parent=103 // pred_check
          %p1897 = pneg %p552
        $region170: #{tpu_custom_call.1} parent=103 // pred_check_branch
          %1899 = sbr.rel (%p1897) target = $region172
        $region171: #{tpu_custom_call.1} parent=103 // pred_region
          %s1901 = ssub.s32 128, 128
          %1902 = vsyncadd %s1880, %s1901
          %s1903 = smul.addr %s52, 128
          %s1904 = scalar_lea.hbm %s22, %s1903
          %s1906 = sshll.u32 %s1883, 4
          %s1907 = int_to_ptr.vmem [resolvable:$true] %s1906
          %1909 = dma.vmem_to_hbm [thread:$0]  %s1907, 128, %s1904, %s1880
        $region172: #{tpu_custom_call.1} parent=103 // pred_fallthru
          _
      $region104: #{tpu_custom_call.1} parent=5 // pred_fallthru
        _
      %p1910 = scmp.le.s32.totalorder 2, %s47
      // Predicated region
      $region173: #{tpu_custom_call.1} parent=5 // pred_check
        %p1911 = pneg %p1910
      $region174: #{tpu_custom_call.1} parent=5 // pred_check_branch
        %1913 = sbr.rel (%p1911) target = $region176
      $region175: #{tpu_custom_call.1} parent=5 // pred_region
        %s1914 = ssub.s32 %s47, 2
        // Predicated region
        $region177: #{tpu_custom_call.1} parent=175 // pred_check
          %p1915 = pneg %p532
        $region178: #{tpu_custom_call.1} parent=175 // pred_check_branch
          %1917 = sbr.rel (%p1915) target = $region180
        $region179: #{tpu_custom_call.1} parent=175 // pred_region
          %s1918 = sand.u32 %s517, 1
          %s1919 = scalar_lea.sflag [#allocation4], %s1918
          %s1920 = sand.u32 %s517, 1
          %s1921 = smul.addr %s1920, 8
          %s1922 = scalar_lea.vmem [#allocation26], %s1921
          %1923 = dma.done %s1919, 128
        $region180: #{tpu_custom_call.1} parent=175 // pred_fallthru
          _
        // Predicated region
        $region181: #{tpu_custom_call.1} parent=175 // pred_check
          %p1924 = pneg %p558
        $region182: #{tpu_custom_call.1} parent=175 // pred_check_branch
          %1926 = sbr.rel (%p1924) target = $region184
        $region183: #{tpu_custom_call.1} parent=175 // pred_region
          %s1927 = sand.u32 %s543, 1
          %s1928 = scalar_lea.sflag [#allocation28], %s1927
          %s1929 = sand.u32 %s543, 1
          %s1930 = smul.addr %s1929, 8
          %s1931 = scalar_lea.vmem [#allocation27], %s1930
          %1932 = dma.done %s1928, 128
        $region184: #{tpu_custom_call.1} parent=175 // pred_fallthru
          _
      $region176: #{tpu_custom_call.1} parent=5 // pred_fallthru
        _
    $region6: #{tpu_custom_call.1} parent=1 // loop_footer
      %s51 = sadd.s32 1, %s47
    $region7: #{tpu_custom_call.1} parent=1 // loop_footer_branch
      %46 = sbr.rel target = $region3
    $region8: #{tpu_custom_call.1} parent=1 // loop_exit
      _
    %1933 = vsyncpa [#allocation3], 1
    %s1934 = scalar_lea.sflag [#allocation3], 1
    %1935 = vsyncpa %s1934, 1
    %1936 = vsyncpa [#allocation6], 1
    %s1937 = scalar_lea.sflag [#allocation6], 1
    %1938 = vsyncpa %s1937, 1
    %1939 = vsyncpa [#allocation9], 1
    %1940 = vsyncpa [#allocation12], 1
    %1941 = vsyncpa [#allocation15], 1
    %1942 = vsyncpa [#allocation18], 1
    %1943 = vsyncpa [#allocation21], 1
    %1944 = vsyncpa [#allocation24], 1
    %1945 = vsyncpa [#allocation4], 1
    %s1946 = scalar_lea.sflag [#allocation4], 1
    %1947 = vsyncpa %s1946, 1
    %1948 = vsyncpa [#allocation28], 1
    %s1949 = scalar_lea.sflag [#allocation28], 1
    %1950 = vsyncpa %s1949, 1

// kernel: tpu_custom_call.1
$region0: #{tpu_custom_call.1}
  #allocation0 [shape = 'u32[]', space=smem, size = 0x4, offset = 0x4, fixed_abs, tag = 'smem constant byte address 0x4 - core index']
  #allocation1 [shape = 'u32[144,128]{1,0:T(1,128)}', space=vmem, size = 0x12000, scoped, tag = 'internal scratch']
  %s0 = inlined_call_operand.hbm [shape: f32[2,8,32], index: 0, kind: input, shape index: {}]
  %s1 = inlined_call_operand.hbm [shape: f32[2,8,32], index: 1, kind: input, shape index: {}]
  %s2 = inlined_call_operand.hbm [shape: f32[2,8,32], index: 2, kind: input, shape index: {}]
  %s3 = inlined_call_operand.hbm [shape: f32[1,32], index: 3, kind: input, shape index: {}]
  %s4 = inlined_call_operand.hbm [shape: f32[1,32], index: 4, kind: input, shape index: {}]
  %s5 = inlined_call_operand.hbm [shape: f32[1,32], index: 5, kind: input, shape index: {}]
  %s6 = inlined_call_operand.hbm [shape: f32[1,32], index: 6, kind: input, shape index: {}]
  %s7 = inlined_call_operand.hbm [shape: f32[1,32], index: 7, kind: input, shape index: {}]
  %s8 = inlined_call_operand.hbm [shape: f32[1,32], index: 8, kind: input, shape index: {}]
  %s9 = inlined_call_operand.vmem [shape: bf16[32,32], index: 9, kind: input, shape index: {}]
  %s10 = inlined_call_operand.vmem [shape: bf16[32,32], index: 10, kind: input, shape index: {}]
  %s11 = inlined_call_operand.hbm [shape: bf16[32,32], index: 11, kind: input, shape index: {}]
  %s12 = inlined_call_operand.hbm [shape: f32[1,32], index: 12, kind: input, shape index: {}]
  %s13 = inlined_call_operand.hbm [shape: f32[1,32], index: 13, kind: input, shape index: {}]
  %s14 = inlined_call_operand.hbm [shape: f32[1,32], index: 14, kind: input, shape index: {}]
  %s15 = inlined_call_operand.vmem [shape: bf16[32,32], index: 15, kind: input, shape index: {}]
  %s16 = inlined_call_operand.hbm [shape: f32[1,32], index: 16, kind: input, shape index: {}]
  %s17 = inlined_call_operand.hbm [shape: f32[1,32], index: 17, kind: input, shape index: {}]
  %s18 = inlined_call_operand.vmem [shape: f32[1,32], index: 18, kind: input, shape index: {}]
  %s19 = inlined_call_operand.vmem [shape: bf16[32,32], index: 19, kind: input, shape index: {}]
  %s20 = inlined_call_operand.vmem [shape: f32[1,32], index: 20, kind: input, shape index: {}]
  %s21 = inlined_call_operand.hbm [shape: f32[2,8,32], index: 21, kind: output, shape index: {0}]
  %s22 = inlined_call_operand.hbm [shape: f32[2,8,8], index: 22, kind: output, shape index: {1}]
  %23 = xla_tuple %s21, %s22
  %s24 = sld [smem:[#allocation0]]
  $region185: #{tpu_custom_call.1} parent=0
    _
  %s26 = ssub.s32 1, %s24
  %s27 = scalar_select 0, %s26, %s24
  $region1: #{tpu_custom_call.1} parent=0
    #allocation2 [shape = 'u8[8192]{0}', space=vmem, size = 0x2000, scoped, tag = 'input window, operand 0']
    #allocation3 [shape = 's32[2]{0}', space=sflag, size = 0x8, scoped, tag = 'scoped memory for tpu_custom_call.1']
    #allocation4 [shape = 's32[2]{0}', space=sflag, size = 0x8, scoped, tag = 'scoped memory for tpu_custom_call.1']
    #allocation5 [shape = 'u8[8192]{0}', space=vmem, size = 0x2000, scoped, tag = 'input window, operand 1']
    #allocation6 [shape = 's32[2]{0}', space=sflag, size = 0x8, scoped, tag = 'scoped memory for tpu_custom_call.1']
    #allocation7 [shape = 'u8[8192]{0}', space=vmem, size = 0x2000, scoped, tag = 'input window, operand 2']
    #allocation8 [shape = 'u8[512]{0}', space=vmem, size = 0x400, scoped, tag = 'input window, operand 3, single buffered']
    #allocation9 [shape = 's32[1]{0}', space=sflag, size = 0x4, scoped, tag = 'scoped memory for tpu_custom_call.1']
    #allocation10 [shape = 'u8[512]{0}', space=vmem, size = 0x400, scoped, tag = 'input window, operand 4, single buffered']
    #allocation11 [shape = 'u8[512]{0}', space=vmem, size = 0x400, scoped, tag = 'input window, operand 5, single buffered']
    #allocation12 [shape = 's32[1]{0}', space=sflag, size = 0x4, scoped, tag = 'scoped memory for tpu_custom_call.1']
    #allocation13 [shape = 'u8[512]{0}', space=vmem, size = 0x400, scoped, tag = 'input window, operand 6, single buffered']
    #allocation14 [shape = 'u8[512]{0}', space=vmem, size = 0x400, scoped, tag = 'input window, operand 7, single buffered']
    #allocation15 [shape = 's32[1]{0}', space=sflag, size = 0x4, scoped, tag = 'scoped memory for tpu_custom_call.1']
    #allocation16 [shape = 'u8[512]{0}', space=vmem, size = 0x400, scoped, tag = 'input window, operand 8, single buffered']
    #allocation17 [shape = 'u8[8192]{0}', space=vmem, size = 0x2000, scoped, tag = 'input window, operand 11, single buffered']
    #allocation18 [shape = 's32[1]{0}', space=sflag, size = 0x4, scoped, tag = 'scoped memory for tpu_custom_call.1']
    #allocation19 [shape = 'u8[512]{0}', space=vmem, size = 0x400, scoped, tag = 'input window, operand 12, single buffered']
    #allocation20 [shape = 'u8[512]{0}', space=vmem, size = 0x400, scoped, tag = 'input window, operand 13, single buffered']
    #allocation21 [shape = 's32[1]{0}', space=sflag, size = 0x4, scoped, tag = 'scoped memory for tpu_custom_call.1']
    #allocation22 [shape = 'u8[512]{0}', space=vmem, size = 0x400, scoped, tag = 'input window, operand 14, single buffered']
    #allocation23 [shape = 'u8[512]{0}', space=vmem, size = 0x400, scoped, tag = 'input window, operand 16, single buffered']
    #allocation24 [shape = 's32[1]{0}', space=sflag, size = 0x4, scoped, tag = 'scoped memory for tpu_custom_call.1']
    #allocation25 [shape = 'u8[512]{0}', space=vmem, size = 0x400, scoped, tag = 'input window, operand 17, single buffered']
    #allocation26 [shape = 'u8[8192]{0}', space=vmem, size = 0x2000, scoped, tag = 'output window, operand 0']
    #allocation27 [shape = 'u8[8192]{0}', space=vmem, size = 0x2000, scoped, tag = 'output window, operand 1']
    #allocation28 [shape = 's32[2]{0}', space=sflag, size = 0x8, scoped, tag = 'scoped memory for tpu_custom_call.1']
    %28 = vsyncpa [#allocation3], 0
    %s29 = scalar_lea.sflag [#allocation3], 1
    %30 = vsyncpa %s29, 0
    %31 = vsyncpa [#allocation6], 0
    %s32 = scalar_lea.sflag [#allocation6], 1
    %33 = vsyncpa %s32, 0
    %34 = vsyncpa [#allocation9], 0
    %35 = vsyncpa [#allocation12], 0
    %36 = vsyncpa [#allocation15], 0
    %37 = vsyncpa [#allocation18], 0
    %38 = vsyncpa [#allocation21], 0
    %39 = vsyncpa [#allocation24], 0
    %40 = vsyncpa [#allocation4], 0
    %s41 = scalar_lea.sflag [#allocation4], 1
    %42 = vsyncpa %s41, 0
    %43 = vsyncpa [#allocation28], 0
    %s44 = scalar_lea.sflag [#allocation28], 1
    %45 = vsyncpa %s44, 0
    loop: start=0, step=1, limit=4
    $region2: #{tpu_custom_call.1} parent=1 // loop_pre_header
      _
    $region3: #{tpu_custom_call.1} parent=1 // loop_header
      %s47 = sphi 0, %s51
      %p48 = scmp.ge.s32.totalorder %s47, 4
      %s57 = sphi 0, %s59
      %s60 = sphi 0, %s57
      %s61 = sphi 0, %s60
      %s77 = sphi 0, %s61
      %s83 = sphi 0, %s85
      %s86 = sphi 0, %s83
      %s87 = sphi 0, %s86
      %s103 = sphi 0, %s87
      %s109 = sphi 0, %s111
      %s112 = sphi 0, %s109
      %s113 = sphi 0, %s112
      %s129 = sphi 0, %s113
      %s133 = sphi 0, %s133
      %s135 = sphi 0, %s133
      %s136 = sphi 0, %s135
      %s150 = sphi 0, %s136
      %s154 = sphi 0, %s154
      %s156 = sphi 0, %s154
      %s157 = sphi 0, %s156
      %s171 = sphi 0, %s157
      %s175 = sphi 0, %s175
      %s177 = sphi 0, %s175
      %s178 = sphi 0, %s177
      %s192 = sphi 0, %s178
      %s196 = sphi 0, %s196
      %s198 = sphi 0, %s196
      %s199 = sphi 0, %s198
      %s213 = sphi 0, %s199
      %s217 = sphi 0, %s217
      %s219 = sphi 0, %s217
      %s220 = sphi 0, %s219
      %s234 = sphi 0, %s220
      %s238 = sphi 0, %s238
      %s240 = sphi 0, %s238
      %s241 = sphi 0, %s240
      %s255 = sphi 0, %s241
      %s259 = sphi 0, %s259
      %s261 = sphi 0, %s259
      %s262 = sphi 0, %s261
      %s276 = sphi 0, %s262
      %s280 = sphi 0, %s280
      %s282 = sphi 0, %s280
      %s283 = sphi 0, %s282
      %s297 = sphi 0, %s283
      %s301 = sphi 0, %s301
      %s303 = sphi 0, %s301
      %s304 = sphi 0, %s303
      %s318 = sphi 0, %s304
      %s322 = sphi 0, %s322
      %s324 = sphi 0, %s322
      %s325 = sphi 0, %s324
      %s339 = sphi 0, %s325
      %s343 = sphi 0, %s343
      %s345 = sphi 0, %s343
      %s346 = sphi 0, %s345
      %s360 = sphi 0, %s346
      %s364 = sphi 0, %s364
      %s366 = sphi 0, %s364
      %s367 = sphi 0, %s366
      %s381 = sphi 0, %s367
      %s385 = sphi 0, %s385
      %s387 = sphi 0, %s385
      %s388 = sphi 0, %s387
      %s402 = sphi 0, %s388
      %s406 = sphi 0, %s406
      %s408 = sphi 0, %s406
      %s409 = sphi 0, %s408
      %s423 = sphi 0, %s409
      %s427 = sphi 0, %s427
      %s429 = sphi 0, %s427
      %s430 = sphi 0, %s429
      %s444 = sphi 0, %s430
      %s448 = sphi 0, %s448
      %s450 = sphi 0, %s448
      %s451 = sphi 0, %s450
      %s465 = sphi 0, %s451
      %s469 = sphi 0, %s469
      %s471 = sphi 0, %s469
      %s472 = sphi 0, %s471
      %s486 = sphi 0, %s472
      %s490 = sphi 0, %s490
      %s492 = sphi 0, %s490
      %s493 = sphi 0, %s492
      %s507 = sphi 0, %s493
      %s513 = sphi 0, %s515
      %s516 = sphi 0, %s513
      %s517 = sphi 0, %s516
      %s533 = sphi 0, %s517
      %s539 = sphi 0, %s541
      %s542 = sphi 0, %s539
      %s543 = sphi 0, %s542
      %s559 = sphi 0, %s543
    $region4: #{tpu_custom_call.1} parent=1 // loop_header_branch
      %50 = sbr.rel (%p48) target = $region8
    $region5: #{tpu_custom_call.1} parent=1 // loop_body
      %s52 = ssub.s32 %s47, 1
      %s53 = ssub.s32 %s47, 2
      %s54 = sadd.s32 %s47, 1
      %s55 = ssub.s32 %s47, %s54
      %p56 = scmp.eq.s32.totalorder %s55, 0
      %s58 = sadd.s32 %s57, 1
      %s59 = scalar_select %p56, %s57, %s58
      %p62 = pneg %p56
      %p63 = scmp.eq.s32.totalorder %s47, 1
      %p64 = por %p62, %p63
      %p65 = scmp.ne.s32.totalorder %s57, %s60
      %p66 = scmp.eq.s32.totalorder %s47, 0
      %p67 = por %p65, %p66
      %p68 = scmp.ne.s32.totalorder %s57, %s60
      %p69 = scmp.eq.s32.totalorder %s52, 1
      %p70 = por %p68, %p69
      %p71 = scmp.ne.s32.totalorder %s60, %s61
      %p72 = scmp.eq.s32.totalorder %s52, 0
      %p73 = por %p71, %p72
      %p74 = scmp.ne.s32.totalorder %s60, %s61
      %p75 = scmp.eq.s32.totalorder %s53, 1
      %p76 = por %p74, %p75
      %p78 = scmp.ne.s32.totalorder %s61, %s77
      %p79 = scmp.eq.s32.totalorder %s53, 0
      %p80 = por %p78, %p79
      %s81 = ssub.s32 %s47, %s54
      %p82 = scmp.eq.s32.totalorder %s81, 0
      %s84 = sadd.s32 %s83, 1
      %s85 = scalar_select %p82, %s83, %s84
      %p88 = pneg %p82
      %p89 = scmp.eq.s32.totalorder %s47, 1
      %p90 = por %p88, %p89
      %p91 = scmp.ne.s32.totalorder %s83, %s86
      %p92 = scmp.eq.s32.totalorder %s47, 0
      %p93 = por %p91, %p92
      %p94 = scmp.ne.s32.totalorder %s83, %s86
      %p95 = scmp.eq.s32.totalorder %s52, 1
      %p96 = por %p94, %p95
      %p97 = scmp.ne.s32.totalorder %s86, %s87
      %p98 = scmp.eq.s32.totalorder %s52, 0
      %p99 = por %p97, %p98
      %p100 = scmp.ne.s32.totalorder %s86, %s87
      %p101 = scmp.eq.s32.totalorder %s53, 1
      %p102 = por %p100, %p101
      %p104 = scmp.ne.s32.totalorder %s87, %s103
      %p105 = scmp.eq.s32.totalorder %s53, 0
      %p106 = por %p104, %p105
      %s107 = ssub.s32 %s47, %s54
      %p108 = scmp.eq.s32.totalorder %s107, 0
      %s110 = sadd.s32 %s109, 1
      %s111 = scalar_select %p108, %s109, %s110
      %p114 = pneg %p108
      %p115 = scmp.eq.s32.totalorder %s47, 1
      %p116 = por %p114, %p115
      %p117 = scmp.ne.s32.totalorder %s109, %s112
      %p118 = scmp.eq.s32.totalorder %s47, 0
      %p119 = por %p117, %p118
      %p120 = scmp.ne.s32.totalorder %s109, %s112
      %p121 = scmp.eq.s32.totalorder %s52, 1
      %p122 = por %p120, %p121
      %p123 = scmp.ne.s32.totalorder %s112, %s113
      %p124 = scmp.eq.s32.totalorder %s52, 0
      %p125 = por %p123, %p124
      %p126 = scmp.ne.s32.totalorder %s112, %s113
      %p127 = scmp.eq.s32.totalorder %s53, 1
      %p128 = por %p126, %p127
      %p130 = scmp.ne.s32.totalorder %s113, %s129
      %p131 = scmp.eq.s32.totalorder %s53, 0
      %p132 = por %p130, %p131
      %s134 = sadd.s32 %s133, 1
      %p137 = scmp.eq.s32.totalorder %s47, 1
      %p138 = scmp.ne.s32.totalorder %s133, %s135
      %p139 = scmp.eq.s32.totalorder %s47, 0
      %p140 = por %p138, %p139
      %p141 = scmp.ne.s32.totalorder %s133, %s135
      %p142 = scmp.eq.s32.totalorder %s52, 1
      %p143 = por %p141, %p142
      %p144 = scmp.ne.s32.totalorder %s135, %s136
      %p145 = scmp.eq.s32.totalorder %s52, 0
      %p146 = por %p144, %p145
      %p147 = scmp.ne.s32.totalorder %s135, %s136
      %p148 = scmp.eq.s32.totalorder %s53, 1
      %p149 = por %p147, %p148
      %p151 = scmp.ne.s32.totalorder %s136, %s150
      %p152 = scmp.eq.s32.totalorder %s53, 0
      %p153 = por %p151, %p152
      %s155 = sadd.s32 %s154, 1
      %p158 = scmp.eq.s32.totalorder %s47, 1
      %p159 = scmp.ne.s32.totalorder %s154, %s156
      %p160 = scmp.eq.s32.totalorder %s47, 0
      %p161 = por %p159, %p160
      %p162 = scmp.ne.s32.totalorder %s154, %s156
      %p163 = scmp.eq.s32.totalorder %s52, 1
      %p164 = por %p162, %p163
      %p165 = scmp.ne.s32.totalorder %s156, %s157
      %p166 = scmp.eq.s32.totalorder %s52, 0
      %p167 = por %p165, %p166
      %p168 = scmp.ne.s32.totalorder %s156, %s157
      %p169 = scmp.eq.s32.totalorder %s53, 1
      %p170 = por %p168, %p169
      %p172 = scmp.ne.s32.totalorder %s157, %s171
      %p173 = scmp.eq.s32.totalorder %s53, 0
      %p174 = por %p172, %p173
      %s176 = sadd.s32 %s175, 1
      %p179 = scmp.eq.s32.totalorder %s47, 1
      %p180 = scmp.ne.s32.totalorder %s175, %s177
      %p181 = scmp.eq.s32.totalorder %s47, 0
      %p182 = por %p180, %p181
      %p183 = scmp.ne.s32.totalorder %s175, %s177
      %p184 = scmp.eq.s32.totalorder %s52, 1
      %p185 = por %p183, %p184
      %p186 = scmp.ne.s32.totalorder %s177, %s178
      %p187 = scmp.eq.s32.totalorder %s52, 0
      %p188 = por %p186, %p187
      %p189 = scmp.ne.s32.totalorder %s177, %s178
      %p190 = scmp.eq.s32.totalorder %s53, 1
      %p191 = por %p189, %p190
      %p193 = scmp.ne.s32.totalorder %s178, %s192
      %p194 = scmp.eq.s32.totalorder %s53, 0
      %p195 = por %p193, %p194
      %s197 = sadd.s32 %s196, 1
      %p200 = scmp.eq.s32.totalorder %s47, 1
      %p201 = scmp.ne.s32.totalorder %s196, %s198
      %p202 = scmp.eq.s32.totalorder %s47, 0
      %p203 = por %p201, %p202
      %p204 = scmp.ne.s32.totalorder %s196, %s198
      %p205 = scmp.eq.s32.totalorder %s52, 1
      %p206 = por %p204, %p205
      %p207 = scmp.ne.s32.totalorder %s198, %s199
      %p208 = scmp.eq.s32.totalorder %s52, 0
      %p209 = por %p207, %p208
      %p210 = scmp.ne.s32.totalorder %s198, %s199
      %p211 = scmp.eq.s32.totalorder %s53, 1
      %p212 = por %p210, %p211
      %p214 = scmp.ne.s32.totalorder %s199, %s213
      %p215 = scmp.eq.s32.totalorder %s53, 0
      %p216 = por %p214, %p215
      %s218 = sadd.s32 %s217, 1
      %p221 = scmp.eq.s32.totalorder %s47, 1
      %p222 = scmp.ne.s32.totalorder %s217, %s219
      %p223 = scmp.eq.s32.totalorder %s47, 0
      %p224 = por %p222, %p223
      %p225 = scmp.ne.s32.totalorder %s217, %s219
      %p226 = scmp.eq.s32.totalorder %s52, 1
      %p227 = por %p225, %p226
      %p228 = scmp.ne.s32.totalorder %s219, %s220
      %p229 = scmp.eq.s32.totalorder %s52, 0
      %p230 = por %p228, %p229
      %p231 = scmp.ne.s32.totalorder %s219, %s220
      %p232 = scmp.eq.s32.totalorder %s53, 1
      %p233 = por %p231, %p232
      %p235 = scmp.ne.s32.totalorder %s220, %s234
      %p236 = scmp.eq.s32.totalorder %s53, 0
      %p237 = por %p235, %p236
      %s239 = sadd.s32 %s238, 1
      %p242 = scmp.eq.s32.totalorder %s47, 1
      %p243 = scmp.ne.s32.totalorder %s238, %s240
      %p244 = scmp.eq.s32.totalorder %s47, 0
      %p245 = por %p243, %p244
      %p246 = scmp.ne.s32.totalorder %s238, %s240
      %p247 = scmp.eq.s32.totalorder %s52, 1
      %p248 = por %p246, %p247
      %p249 = scmp.ne.s32.totalorder %s240, %s241
      %p250 = scmp.eq.s32.totalorder %s52, 0
      %p251 = por %p249, %p250
      %p252 = scmp.ne.s32.totalorder %s240, %s241
      %p253 = scmp.eq.s32.totalorder %s53, 1
      %p254 = por %p252, %p253
      %p256 = scmp.ne.s32.totalorder %s241, %s255
      %p257 = scmp.eq.s32.totalorder %s53, 0
      %p258 = por %p256, %p257
      %s260 = sadd.s32 %s259, 1
      %p263 = scmp.eq.s32.totalorder %s47, 1
      %p264 = scmp.ne.s32.totalorder %s259, %s261
      %p265 = scmp.eq.s32.totalorder %s47, 0
      %p266 = por %p264, %p265
      %p267 = scmp.ne.s32.totalorder %s259, %s261
      %p268 = scmp.eq.s32.totalorder %s52, 1
      %p269 = por %p267, %p268
      %p270 = scmp.ne.s32.totalorder %s261, %s262
      %p271 = scmp.eq.s32.totalorder %s52, 0
      %p272 = por %p270, %p271
      %p273 = scmp.ne.s32.totalorder %s261, %s262
      %p274 = scmp.eq.s32.totalorder %s53, 1
      %p275 = por %p273, %p274
      %p277 = scmp.ne.s32.totalorder %s262, %s276
      %p278 = scmp.eq.s32.totalorder %s53, 0
      %p279 = por %p277, %p278
      %s281 = sadd.s32 %s280, 1
      %p284 = scmp.eq.s32.totalorder %s47, 1
      %p285 = scmp.ne.s32.totalorder %s280, %s282
      %p286 = scmp.eq.s32.totalorder %s47, 0
      %p287 = por %p285, %p286
      %p288 = scmp.ne.s32.totalorder %s280, %s282
      %p289 = scmp.eq.s32.totalorder %s52, 1
      %p290 = por %p288, %p289
      %p291 = scmp.ne.s32.totalorder %s282, %s283
      %p292 = scmp.eq.s32.totalorder %s52, 0
      %p293 = por %p291, %p292
      %p294 = scmp.ne.s32.totalorder %s282, %s283
      %p295 = scmp.eq.s32.totalorder %s53, 1
      %p296 = por %p294, %p295
      %p298 = scmp.ne.s32.totalorder %s283, %s297
      %p299 = scmp.eq.s32.totalorder %s53, 0
      %p300 = por %p298, %p299
      %s302 = sadd.s32 %s301, 1
      %p305 = scmp.eq.s32.totalorder %s47, 1
      %p306 = scmp.ne.s32.totalorder %s301, %s303
      %p307 = scmp.eq.s32.totalorder %s47, 0
      %p308 = por %p306, %p307
      %p309 = scmp.ne.s32.totalorder %s301, %s303
      %p310 = scmp.eq.s32.totalorder %s52, 1
      %p311 = por %p309, %p310
      %p312 = scmp.ne.s32.totalorder %s303, %s304
      %p313 = scmp.eq.s32.totalorder %s52, 0
      %p314 = por %p312, %p313
      %p315 = scmp.ne.s32.totalorder %s303, %s304
      %p316 = scmp.eq.s32.totalorder %s53, 1
      %p317 = por %p315, %p316
      %p319 = scmp.ne.s32.totalorder %s304, %s318
      %p320 = scmp.eq.s32.totalorder %s53, 0
      %p321 = por %p319, %p320
      %s323 = sadd.s32 %s322, 1
      %p326 = scmp.eq.s32.totalorder %s47, 1
      %p327 = scmp.ne.s32.totalorder %s322, %s324
      %p328 = scmp.eq.s32.totalorder %s47, 0
      %p329 = por %p327, %p328
      %p330 = scmp.ne.s32.totalorder %s322, %s324
      %p331 = scmp.eq.s32.totalorder %s52, 1
      %p332 = por %p330, %p331
      %p333 = scmp.ne.s32.totalorder %s324, %s325
      %p334 = scmp.eq.s32.totalorder %s52, 0
      %p335 = por %p333, %p334
      %p336 = scmp.ne.s32.totalorder %s324, %s325
      %p337 = scmp.eq.s32.totalorder %s53, 1
      %p338 = por %p336, %p337
      %p340 = scmp.ne.s32.totalorder %s325, %s339
      %p341 = scmp.eq.s32.totalorder %s53, 0
      %p342 = por %p340, %p341
      %s344 = sadd.s32 %s343, 1
      %p347 = scmp.eq.s32.totalorder %s47, 1
      %p348 = scmp.ne.s32.totalorder %s343, %s345
      %p349 = scmp.eq.s32.totalorder %s47, 0
      %p350 = por %p348, %p349
      %p351 = scmp.ne.s32.totalorder %s343, %s345
      %p352 = scmp.eq.s32.totalorder %s52, 1
      %p353 = por %p351, %p352
      %p354 = scmp.ne.s32.totalorder %s345, %s346
      %p355 = scmp.eq.s32.totalorder %s52, 0
      %p356 = por %p354, %p355
      %p357 = scmp.ne.s32.totalorder %s345, %s346
      %p358 = scmp.eq.s32.totalorder %s53, 1
      %p359 = por %p357, %p358
      %p361 = scmp.ne.s32.totalorder %s346, %s360
      %p362 = scmp.eq.s32.totalorder %s53, 0
      %p363 = por %p361, %p362
      %s365 = sadd.s32 %s364, 1
      %p368 = scmp.eq.s32.totalorder %s47, 1
      %p369 = scmp.ne.s32.totalorder %s364, %s366
      %p370 = scmp.eq.s32.totalorder %s47, 0
      %p371 = por %p369, %p370
      %p372 = scmp.ne.s32.totalorder %s364, %s366
      %p373 = scmp.eq.s32.totalorder %s52, 1
      %p374 = por %p372, %p373
      %p375 = scmp.ne.s32.totalorder %s366, %s367
      %p376 = scmp.eq.s32.totalorder %s52, 0
      %p377 = por %p375, %p376
      %p378 = scmp.ne.s32.totalorder %s366, %s367
      %p379 = scmp.eq.s32.totalorder %s53, 1
      %p380 = por %p378, %p379
      %p382 = scmp.ne.s32.totalorder %s367, %s381
      %p383 = scmp.eq.s32.totalorder %s53, 0
      %p384 = por %p382, %p383
      %s386 = sadd.s32 %s385, 1
      %p389 = scmp.eq.s32.totalorder %s47, 1
      %p390 = scmp.ne.s32.totalorder %s385, %s387
      %p391 = scmp.eq.s32.totalorder %s47, 0
      %p392 = por %p390, %p391
      %p393 = scmp.ne.s32.totalorder %s385, %s387
      %p394 = scmp.eq.s32.totalorder %s52, 1
      %p395 = por %p393, %p394
      %p396 = scmp.ne.s32.totalorder %s387, %s388
      %p397 = scmp.eq.s32.totalorder %s52, 0
      %p398 = por %p396, %p397
      %p399 = scmp.ne.s32.totalorder %s387, %s388
      %p400 = scmp.eq.s32.totalorder %s53, 1
      %p401 = por %p399, %p400
      %p403 = scmp.ne.s32.totalorder %s388, %s402
      %p404 = scmp.eq.s32.totalorder %s53, 0
      %p405 = por %p403, %p404
      %s407 = sadd.s32 %s406, 1
      %p410 = scmp.eq.s32.totalorder %s47, 1
      %p411 = scmp.ne.s32.totalorder %s406, %s408
      %p412 = scmp.eq.s32.totalorder %s47, 0
      %p413 = por %p411, %p412
      %p414 = scmp.ne.s32.totalorder %s406, %s408
      %p415 = scmp.eq.s32.totalorder %s52, 1
      %p416 = por %p414, %p415
      %p417 = scmp.ne.s32.totalorder %s408, %s409
      %p418 = scmp.eq.s32.totalorder %s52, 0
      %p419 = por %p417, %p418
      %p420 = scmp.ne.s32.totalorder %s408, %s409
      %p421 = scmp.eq.s32.totalorder %s53, 1
      %p422 = por %p420, %p421
      %p424 = scmp.ne.s32.totalorder %s409, %s423
      %p425 = scmp.eq.s32.totalorder %s53, 0
      %p426 = por %p424, %p425
      %s428 = sadd.s32 %s427, 1
      %p431 = scmp.eq.s32.totalorder %s47, 1
      %p432 = scmp.ne.s32.totalorder %s427, %s429
      %p433 = scmp.eq.s32.totalorder %s47, 0
      %p434 = por %p432, %p433
      %p435 = scmp.ne.s32.totalorder %s427, %s429
      %p436 = scmp.eq.s32.totalorder %s52, 1
      %p437 = por %p435, %p436
      %p438 = scmp.ne.s32.totalorder %s429, %s430
      %p439 = scmp.eq.s32.totalorder %s52, 0
      %p440 = por %p438, %p439
      %p441 = scmp.ne.s32.totalorder %s429, %s430
      %p442 = scmp.eq.s32.totalorder %s53, 1
      %p443 = por %p441, %p442
      %p445 = scmp.ne.s32.totalorder %s430, %s444
      %p446 = scmp.eq.s32.totalorder %s53, 0
      %p447 = por %p445, %p446
      %s449 = sadd.s32 %s448, 1
      %p452 = scmp.eq.s32.totalorder %s47, 1
      %p453 = scmp.ne.s32.totalorder %s448, %s450
      %p454 = scmp.eq.s32.totalorder %s47, 0
      %p455 = por %p453, %p454
      %p456 = scmp.ne.s32.totalorder %s448, %s450
      %p457 = scmp.eq.s32.totalorder %s52, 1
      %p458 = por %p456, %p457
      %p459 = scmp.ne.s32.totalorder %s450, %s451
      %p460 = scmp.eq.s32.totalorder %s52, 0
      %p461 = por %p459, %p460
      %p462 = scmp.ne.s32.totalorder %s450, %s451
      %p463 = scmp.eq.s32.totalorder %s53, 1
      %p464 = por %p462, %p463
      %p466 = scmp.ne.s32.totalorder %s451, %s465
      %p467 = scmp.eq.s32.totalorder %s53, 0
      %p468 = por %p466, %p467
      %s470 = sadd.s32 %s469, 1
      %p473 = scmp.eq.s32.totalorder %s47, 1
      %p474 = scmp.ne.s32.totalorder %s469, %s471
      %p475 = scmp.eq.s32.totalorder %s47, 0
      %p476 = por %p474, %p475
      %p477 = scmp.ne.s32.totalorder %s469, %s471
      %p478 = scmp.eq.s32.totalorder %s52, 1
      %p479 = por %p477, %p478
      %p480 = scmp.ne.s32.totalorder %s471, %s472
      %p481 = scmp.eq.s32.totalorder %s52, 0
      %p482 = por %p480, %p481
      %p483 = scmp.ne.s32.totalorder %s471, %s472
      %p484 = scmp.eq.s32.totalorder %s53, 1
      %p485 = por %p483, %p484
      %p487 = scmp.ne.s32.totalorder %s472, %s486
      %p488 = scmp.eq.s32.totalorder %s53, 0
      %p489 = por %p487, %p488
      %s491 = sadd.s32 %s490, 1
      %p494 = scmp.eq.s32.totalorder %s47, 1
      %p495 = scmp.ne.s32.totalorder %s490, %s492
      %p496 = scmp.eq.s32.totalorder %s47, 0
      %p497 = por %p495, %p496
      %p498 = scmp.ne.s32.totalorder %s490, %s492
      %p499 = scmp.eq.s32.totalorder %s52, 1
      %p500 = por %p498, %p499
      %p501 = scmp.ne.s32.totalorder %s492, %s493
      %p502 = scmp.eq.s32.totalorder %s52, 0
      %p503 = por %p501, %p502
      %p504 = scmp.ne.s32.totalorder %s492, %s493
      %p505 = scmp.eq.s32.totalorder %s53, 1
      %p506 = por %p504, %p505
      %p508 = scmp.ne.s32.totalorder %s493, %s507
      %p509 = scmp.eq.s32.totalorder %s53, 0
      %p510 = por %p508, %p509
      %s511 = ssub.s32 %s47, %s54
      %p512 = scmp.eq.s32.totalorder %s511, 0
      %s514 = sadd.s32 %s513, 1
      %s515 = scalar_select %p512, %s513, %s514
      %p518 = pneg %p512
      %p519 = scmp.eq.s32.totalorder %s47, 1
      %p520 = por %p518, %p519
      %p521 = scmp.ne.s32.totalorder %s513, %s516
      %p522 = scmp.eq.s32.totalorder %s47, 0
      %p523 = por %p521, %p522
      %p524 = scmp.ne.s32.totalorder %s513, %s516
      %p525 = scmp.eq.s32.totalorder %s52, 1
      %p526 = por %p524, %p525
      %p527 = scmp.ne.s32.totalorder %s516, %s517
      %p528 = scmp.eq.s32.totalorder %s52, 0
      %p529 = por %p527, %p528
      %p530 = scmp.ne.s32.totalorder %s516, %s517
      %p531 = scmp.eq.s32.totalorder %s53, 1
      %p532 = por %p530, %p531
      %p534 = scmp.ne.s32.totalorder %s517, %s533
      %p535 = scmp.eq.s32.totalorder %s53, 0
      %p536 = por %p534, %p535
      %s537 = ssub.s32 %s47, %s54
      %p538 = scmp.eq.s32.totalorder %s537, 0
      %s540 = sadd.s32 %s539, 1
      %s541 = scalar_select %p538, %s539, %s540
      %p544 = pneg %p538
      %p545 = scmp.eq.s32.totalorder %s47, 1
      %p546 = por %p544, %p545
      %p547 = scmp.ne.s32.totalorder %s539, %s542
      %p548 = scmp.eq.s32.totalorder %s47, 0
      %p549 = por %p547, %p548
      %p550 = scmp.ne.s32.totalorder %s539, %s542
      %p551 = scmp.eq.s32.totalorder %s52, 1
      %p552 = por %p550, %p551
      %p553 = scmp.ne.s32.totalorder %s542, %s543
      %p554 = scmp.eq.s32.totalorder %s52, 0
      %p555 = por %p553, %p554
      %p556 = scmp.ne.s32.totalorder %s542, %s543
      %p557 = scmp.eq.s32.totalorder %s53, 1
      %p558 = por %p556, %p557
      %p560 = scmp.ne.s32.totalorder %s543, %s559
      %p561 = scmp.eq.s32.totalorder %s53, 0
      %p562 = por %p560, %p561
      %p563 = scmp.le.s32.totalorder 1, %s47
      %p564 = scmp.lt.s32.totalorder %s47, 3
      %p565 = pnand %p563, %p564
      %p566 = pneg %p565
      // Predicated region
      $region9: #{tpu_custom_call.1} parent=5 // pred_check
        _
      $region10: #{tpu_custom_call.1} parent=5 // pred_check_branch
        %568 = sbr.rel (%p565) target = $region12
      $region11: #{tpu_custom_call.1} parent=5 // pred_region
        %s569 = ssub.s32 %s47, 1
        // Predicated region
        $region13: #{tpu_custom_call.1} parent=11 // pred_check
          %p570 = pneg %p146
        $region14: #{tpu_custom_call.1} parent=11 // pred_check_branch
          %572 = sbr.rel (%p570) target = $region16
        $region15: #{tpu_custom_call.1} parent=11 // pred_region
          %s574 = ssub.s32 16, 16
          %575 = vsyncadd [#allocation9], %s574
          %s577 = sshll.u32 [#allocation8], 4
          %s578 = int_to_ptr.vmem [resolvable:$true] %s577
          %580 = dma.hbm_to_vmem [thread:$0]  %s3, 16, %s578, [#allocation9]
        $region16: #{tpu_custom_call.1} parent=11 // pred_fallthru
          _
        // Predicated region
        $region17: #{tpu_custom_call.1} parent=11 // pred_check
          %p581 = pneg %p167
        $region18: #{tpu_custom_call.1} parent=11 // pred_check_branch
          %583 = sbr.rel (%p581) target = $region20
        $region19: #{tpu_custom_call.1} parent=11 // pred_region
          %s585 = ssub.s32 16, 16
          %586 = vsyncadd [#allocation9], %s585
          %s588 = sshll.u32 [#allocation10], 4
          %s589 = int_to_ptr.vmem [resolvable:$true] %s588
          %591 = dma.hbm_to_vmem [thread:$0]  %s4, 16, %s589, [#allocation9]
        $region20: #{tpu_custom_call.1} parent=11 // pred_fallthru
          _
        // Predicated region
        $region21: #{tpu_custom_call.1} parent=11 // pred_check
          %p592 = pneg %p188
        $region22: #{tpu_custom_call.1} parent=11 // pred_check_branch
          %594 = sbr.rel (%p592) target = $region24
        $region23: #{tpu_custom_call.1} parent=11 // pred_region
          %s596 = ssub.s32 16, 16
          %597 = vsyncadd [#allocation12], %s596
          %s599 = sshll.u32 [#allocation11], 4
          %s600 = int_to_ptr.vmem [resolvable:$true] %s599
          %602 = dma.hbm_to_vmem [thread:$0]  %s5, 16, %s600, [#allocation12]
        $region24: #{tpu_custom_call.1} parent=11 // pred_fallthru
          _
        // Predicated region
        $region25: #{tpu_custom_call.1} parent=11 // pred_check
          %p603 = pneg %p209
        $region26: #{tpu_custom_call.1} parent=11 // pred_check_branch
          %605 = sbr.rel (%p603) target = $region28
        $region27: #{tpu_custom_call.1} parent=11 // pred_region
          %s607 = ssub.s32 16, 16
          %608 = vsyncadd [#allocation12], %s607
          %s610 = sshll.u32 [#allocation13], 4
          %s611 = int_to_ptr.vmem [resolvable:$true] %s610
          %613 = dma.hbm_to_vmem [thread:$0]  %s6, 16, %s611, [#allocation12]
        $region28: #{tpu_custom_call.1} parent=11 // pred_fallthru
          _
        // Predicated region
        $region29: #{tpu_custom_call.1} parent=11 // pred_check
          %p614 = pneg %p230
        $region30: #{tpu_custom_call.1} parent=11 // pred_check_branch
          %616 = sbr.rel (%p614) target = $region32
        $region31: #{tpu_custom_call.1} parent=11 // pred_region
          %s618 = ssub.s32 16, 16
          %619 = vsyncadd [#allocation15], %s618
          %s621 = sshll.u32 [#allocation14], 4
          %s622 = int_to_ptr.vmem [resolvable:$true] %s621
          %624 = dma.hbm_to_vmem [thread:$0]  %s7, 16, %s622, [#allocation15]
        $region32: #{tpu_custom_call.1} parent=11 // pred_fallthru
          _
        // Predicated region
        $region33: #{tpu_custom_call.1} parent=11 // pred_check
          %p625 = pneg %p251
        $region34: #{tpu_custom_call.1} parent=11 // pred_check_branch
          %627 = sbr.rel (%p625) target = $region36
        $region35: #{tpu_custom_call.1} parent=11 // pred_region
          %s629 = ssub.s32 16, 16
          %630 = vsyncadd [#allocation15], %s629
          %s632 = sshll.u32 [#allocation16], 4
          %s633 = int_to_ptr.vmem [resolvable:$true] %s632
          %635 = dma.hbm_to_vmem [thread:$0]  %s8, 16, %s633, [#allocation15]
        $region36: #{tpu_custom_call.1} parent=11 // pred_fallthru
          _
        // Predicated region
        $region37: #{tpu_custom_call.1} parent=11 // pred_check
          %p636 = pneg %p272
        $region38: #{tpu_custom_call.1} parent=11 // pred_check_branch
          %638 = sbr.rel (%p636) target = $region40
        $region39: #{tpu_custom_call.1} parent=11 // pred_region
          _
        $region40: #{tpu_custom_call.1} parent=11 // pred_fallthru
          _
        // Predicated region
        $region41: #{tpu_custom_call.1} parent=11 // pred_check
          %p639 = pneg %p293
        $region42: #{tpu_custom_call.1} parent=11 // pred_check_branch
          %641 = sbr.rel (%p639) target = $region44
        $region43: #{tpu_custom_call.1} parent=11 // pred_region
          _
        $region44: #{tpu_custom_call.1} parent=11 // pred_fallthru
          _
        // Predicated region
        $region45: #{tpu_custom_call.1} parent=11 // pred_check
          %p642 = pneg %p314
        $region46: #{tpu_custom_call.1} parent=11 // pred_check_branch
          %644 = sbr.rel (%p642) target = $region48
        $region47: #{tpu_custom_call.1} parent=11 // pred_region
          %s646 = ssub.s32 256, 256
          %647 = vsyncadd [#allocation18], %s646
          %s648 = sshll.u32 [#allocation17], 4
          %s649 = int_to_ptr.vmem [resolvable:$true] %s648
          %654 = dma.hbm_to_vmem [thread:$0]  %s11, 256, %s649, [#allocation18], 64, 64, 4
        $region48: #{tpu_custom_call.1} parent=11 // pred_fallthru
          _
        // Predicated region
        $region49: #{tpu_custom_call.1} parent=11 // pred_check
          %p655 = pneg %p335
        $region50: #{tpu_custom_call.1} parent=11 // pred_check_branch
          %657 = sbr.rel (%p655) target = $region52
        $region51: #{tpu_custom_call.1} parent=11 // pred_region
          %s659 = ssub.s32 16, 16
          %660 = vsyncadd [#allocation18], %s659
          %s662 = sshll.u32 [#allocation19], 4
          %s663 = int_to_ptr.vmem [resolvable:$true] %s662
          %665 = dma.hbm_to_vmem [thread:$0]  %s12, 16, %s663, [#allocation18]
        $region52: #{tpu_custom_call.1} parent=11 // pred_fallthru
          _
        // Predicated region
        $region53: #{tpu_custom_call.1} parent=11 // pred_check
          %p666 = pneg %p356
        $region54: #{tpu_custom_call.1} parent=11 // pred_check_branch
          %668 = sbr.rel (%p666) target = $region56
        $region55: #{tpu_custom_call.1} parent=11 // pred_region
          %s670 = ssub.s32 16, 16
          %671 = vsyncadd [#allocation21], %s670
          %s673 = sshll.u32 [#allocation20], 4
          %s674 = int_to_ptr.vmem [resolvable:$true] %s673
          %676 = dma.hbm_to_vmem [thread:$0]  %s13, 16, %s674, [#allocation21]
        $region56: #{tpu_custom_call.1} parent=11 // pred_fallthru
          _
        // Predicated region
        $region57: #{tpu_custom_call.1} parent=11 // pred_check
          %p677 = pneg %p377
        $region58: #{tpu_custom_call.1} parent=11 // pred_check_branch
          %679 = sbr.rel (%p677) target = $region60
        $region59: #{tpu_custom_call.1} parent=11 // pred_region
          %s681 = ssub.s32 16, 16
          %682 = vsyncadd [#allocation21], %s681
          %s684 = sshll.u32 [#allocation22], 4
          %s685 = int_to_ptr.vmem [resolvable:$true] %s684
          %687 = dma.hbm_to_vmem [thread:$0]  %s14, 16, %s685, [#allocation21]
        $region60: #{tpu_custom_call.1} parent=11 // pred_fallthru
          _
        // Predicated region
        $region61: #{tpu_custom_call.1} parent=11 // pred_check
          %p688 = pneg %p398
        $region62: #{tpu_custom_call.1} parent=11 // pred_check_branch
          %690 = sbr.rel (%p688) target = $region64
        $region63: #{tpu_custom_call.1} parent=11 // pred_region
          _
        $region64: #{tpu_custom_call.1} parent=11 // pred_fallthru
          _
        // Predicated region
        $region65: #{tpu_custom_call.1} parent=11 // pred_check
          %p691 = pneg %p419
        $region66: #{tpu_custom_call.1} parent=11 // pred_check_branch
          %693 = sbr.rel (%p691) target = $region68
        $region67: #{tpu_custom_call.1} parent=11 // pred_region
          %s695 = ssub.s32 16, 16
          %696 = vsyncadd [#allocation24], %s695
          %s698 = sshll.u32 [#allocation23], 4
          %s699 = int_to_ptr.vmem [resolvable:$true] %s698
          %701 = dma.hbm_to_vmem [thread:$0]  %s16, 16, %s699, [#allocation24]
        $region68: #{tpu_custom_call.1} parent=11 // pred_fallthru
          _
        // Predicated region
        $region69: #{tpu_custom_call.1} parent=11 // pred_check
          %p702 = pneg %p440
        $region70: #{tpu_custom_call.1} parent=11 // pred_check_branch
          %704 = sbr.rel (%p702) target = $region72
        $region71: #{tpu_custom_call.1} parent=11 // pred_region
          %s706 = ssub.s32 16, 16
          %707 = vsyncadd [#allocation24], %s706
          %s709 = sshll.u32 [#allocation25], 4
          %s710 = int_to_ptr.vmem [resolvable:$true] %s709
          %712 = dma.hbm_to_vmem [thread:$0]  %s17, 16, %s710, [#allocation24]
        $region72: #{tpu_custom_call.1} parent=11 // pred_fallthru
          _
        // Predicated region
        $region73: #{tpu_custom_call.1} parent=11 // pred_check
          %p713 = pneg %p461
        $region74: #{tpu_custom_call.1} parent=11 // pred_check_branch
          %715 = sbr.rel (%p713) target = $region76
        $region75: #{tpu_custom_call.1} parent=11 // pred_region
          _
        $region76: #{tpu_custom_call.1} parent=11 // pred_fallthru
          _
        // Predicated region
        $region77: #{tpu_custom_call.1} parent=11 // pred_check
          %p716 = pneg %p482
        $region78: #{tpu_custom_call.1} parent=11 // pred_check_branch
          %718 = sbr.rel (%p716) target = $region80
        $region79: #{tpu_custom_call.1} parent=11 // pred_region
          _
        $region80: #{tpu_custom_call.1} parent=11 // pred_fallthru
          _
        // Predicated region
        $region81: #{tpu_custom_call.1} parent=11 // pred_check
          %p719 = pneg %p503
        $region82: #{tpu_custom_call.1} parent=11 // pred_check_branch
          %721 = sbr.rel (%p719) target = $region84
        $region83: #{tpu_custom_call.1} parent=11 // pred_region
          _
        $region84: #{tpu_custom_call.1} parent=11 // pred_fallthru
          _
      $region12: #{tpu_custom_call.1} parent=5 // pred_fallthru
        _
      %p722 = scmp.lt.s32.totalorder %s47, 2
      // Predicated region
      $region85: #{tpu_custom_call.1} parent=5 // pred_check
        %p723 = pneg %p722
      $region86: #{tpu_custom_call.1} parent=5 // pred_check_branch
        %725 = sbr.rel (%p723) target = $region88
      $region87: #{tpu_custom_call.1} parent=5 // pred_region
        // Predicated region
        $region89: #{tpu_custom_call.1} parent=87 // pred_check
          %p726 = pneg %p67
        $region90: #{tpu_custom_call.1} parent=87 // pred_check_branch
          %728 = sbr.rel (%p726) target = $region92
        $region91: #{tpu_custom_call.1} parent=87 // pred_region
          %s729 = sand.u32 %s57, 1
          %s730 = scalar_lea.sflag [#allocation3], %s729
          %s731 = sand.u32 %s57, 1
          %s732 = smul.addr %s731, 8
          %s733 = scalar_lea.vmem [#allocation2], %s732
          %s735 = ssub.s32 128, 128
          %736 = vsyncadd %s730, %s735
          %s737 = smul.addr %s47, 128
          %s738 = scalar_lea.hbm %s0, %s737
          %s740 = sshll.u32 %s733, 4
          %s741 = int_to_ptr.vmem [resolvable:$true] %s740
          %743 = dma.hbm_to_vmem [thread:$0]  %s738, 128, %s741, %s730
        $region92: #{tpu_custom_call.1} parent=87 // pred_fallthru
          _
        // Predicated region
        $region93: #{tpu_custom_call.1} parent=87 // pred_check
          %p744 = pneg %p93
        $region94: #{tpu_custom_call.1} parent=87 // pred_check_branch
          %746 = sbr.rel (%p744) target = $region96
        $region95: #{tpu_custom_call.1} parent=87 // pred_region
          %s747 = sand.u32 %s47, 1
          %s748 = scalar_lea.sflag [#allocation6], %s747
          %s749 = sand.u32 %s83, 1
          %s750 = smul.addr %s749, 8
          %s751 = scalar_lea.vmem [#allocation5], %s750
          %s753 = ssub.s32 128, 128
          %754 = vsyncadd %s748, %s753
          %s755 = smul.addr %s47, 128
          %s756 = scalar_lea.hbm %s1, %s755
          %s758 = sshll.u32 %s751, 4
          %s759 = int_to_ptr.vmem [resolvable:$true] %s758
          %761 = dma.hbm_to_vmem [thread:$0]  %s756, 128, %s759, %s748
        $region96: #{tpu_custom_call.1} parent=87 // pred_fallthru
          _
        // Predicated region
        $region97: #{tpu_custom_call.1} parent=87 // pred_check
          %p762 = pneg %p119
        $region98: #{tpu_custom_call.1} parent=87 // pred_check_branch
          %764 = sbr.rel (%p762) target = $region100
        $region99: #{tpu_custom_call.1} parent=87 // pred_region
          %s765 = sand.u32 %s47, 1
          %s766 = scalar_lea.sflag [#allocation6], %s765
          %s767 = sand.u32 %s109, 1
          %s768 = smul.addr %s767, 8
          %s769 = scalar_lea.vmem [#allocation7], %s768
          %s771 = ssub.s32 128, 128
          %772 = vsyncadd %s766, %s771
          %s773 = smul.addr %s47, 128
          %s774 = scalar_lea.hbm %s2, %s773
          %s776 = sshll.u32 %s769, 4
          %s777 = int_to_ptr.vmem [resolvable:$true] %s776
          %779 = dma.hbm_to_vmem [thread:$0]  %s774, 128, %s777, %s766
        $region100: #{tpu_custom_call.1} parent=87 // pred_fallthru
          _
      $region88: #{tpu_custom_call.1} parent=5 // pred_fallthru
        _
      %p780 = scmp.le.s32.totalorder 1, %s47
      %p781 = scmp.lt.s32.totalorder %s47, 3
      %p782 = pnand %p780, %p781
      %p783 = pneg %p782
      // Predicated region
      $region101: #{tpu_custom_call.1} parent=5 // pred_check
        _
      $region102: #{tpu_custom_call.1} parent=5 // pred_check_branch
        %785 = sbr.rel (%p782) target = $region104
      $region103: #{tpu_custom_call.1} parent=5 // pred_region
        %s786 = ssub.s32 %s47, 1
        %s787 = sand.u32 %s60, 1
        %s788 = scalar_lea.sflag [#allocation3], %s787
        %s789 = sand.u32 %s60, 1
        %s790 = smul.addr %s789, 8
        %s791 = scalar_lea.vmem [#allocation2], %s790
        // Predicated region
        $region105: #{tpu_custom_call.1} parent=103 // pred_check
          %p792 = pneg %p73
        $region106: #{tpu_custom_call.1} parent=103 // pred_check_branch
          %794 = sbr.rel (%p792) target = $region108
        $region107: #{tpu_custom_call.1} parent=103 // pred_region
          %795 = dma.done %s788, 128
        $region108: #{tpu_custom_call.1} parent=103 // pred_fallthru
          _
        %s796 = sand.u32 %s52, 1
        %s797 = scalar_lea.sflag [#allocation6], %s796
        %s798 = sand.u32 %s86, 1
        %s799 = smul.addr %s798, 8
        %s800 = scalar_lea.vmem [#allocation5], %s799
        // Predicated region
        $region109: #{tpu_custom_call.1} parent=103 // pred_check
          %p801 = pneg %p99
        $region110: #{tpu_custom_call.1} parent=103 // pred_check_branch
          %803 = sbr.rel (%p801) target = $region112
        $region111: #{tpu_custom_call.1} parent=103 // pred_region
          %804 = dma.done %s797, 128
        $region112: #{tpu_custom_call.1} parent=103 // pred_fallthru
          _
        %s805 = sand.u32 %s52, 1
        %s806 = scalar_lea.sflag [#allocation6], %s805
        %s807 = sand.u32 %s112, 1
        %s808 = smul.addr %s807, 8
        %s809 = scalar_lea.vmem [#allocation7], %s808
        // Predicated region
        $region113: #{tpu_custom_call.1} parent=103 // pred_check
          %p810 = pneg %p125
        $region114: #{tpu_custom_call.1} parent=103 // pred_check_branch
          %812 = sbr.rel (%p810) target = $region116
        $region115: #{tpu_custom_call.1} parent=103 // pred_region
          %813 = dma.done %s806, 128
        $region116: #{tpu_custom_call.1} parent=103 // pred_fallthru
          _
        // Predicated region
        $region117: #{tpu_custom_call.1} parent=103 // pred_check
          %p814 = pneg %p146
        $region118: #{tpu_custom_call.1} parent=103 // pred_check_branch
          %816 = sbr.rel (%p814) target = $region120
        $region119: #{tpu_custom_call.1} parent=103 // pred_region
          %817 = dma.done [#allocation9], 16
        $region120: #{tpu_custom_call.1} parent=103 // pred_fallthru
          _
        // Predicated region
        $region121: #{tpu_custom_call.1} parent=103 // pred_check
          %p818 = pneg %p167
        $region122: #{tpu_custom_call.1} parent=103 // pred_check_branch
          %820 = sbr.rel (%p818) target = $region124
        $region123: #{tpu_custom_call.1} parent=103 // pred_region
          %821 = dma.done [#allocation9], 16
        $region124: #{tpu_custom_call.1} parent=103 // pred_fallthru
          _
        // Predicated region
        $region125: #{tpu_custom_call.1} parent=103 // pred_check
          %p822 = pneg %p188
        $region126: #{tpu_custom_call.1} parent=103 // pred_check_branch
          %824 = sbr.rel (%p822) target = $region128
        $region127: #{tpu_custom_call.1} parent=103 // pred_region
          %825 = dma.done [#allocation12], 16
        $region128: #{tpu_custom_call.1} parent=103 // pred_fallthru
          _
        // Predicated region
        $region129: #{tpu_custom_call.1} parent=103 // pred_check
          %p826 = pneg %p209
        $region130: #{tpu_custom_call.1} parent=103 // pred_check_branch
          %828 = sbr.rel (%p826) target = $region132
        $region131: #{tpu_custom_call.1} parent=103 // pred_region
          %829 = dma.done [#allocation12], 16
        $region132: #{tpu_custom_call.1} parent=103 // pred_fallthru
          _
        // Predicated region
        $region133: #{tpu_custom_call.1} parent=103 // pred_check
          %p830 = pneg %p230
        $region134: #{tpu_custom_call.1} parent=103 // pred_check_branch
          %832 = sbr.rel (%p830) target = $region136
        $region135: #{tpu_custom_call.1} parent=103 // pred_region
          %833 = dma.done [#allocation15], 16
        $region136: #{tpu_custom_call.1} parent=103 // pred_fallthru
          _
        // Predicated region
        $region137: #{tpu_custom_call.1} parent=103 // pred_check
          %p834 = pneg %p251
        $region138: #{tpu_custom_call.1} parent=103 // pred_check_branch
          %836 = sbr.rel (%p834) target = $region140
        $region139: #{tpu_custom_call.1} parent=103 // pred_region
          %837 = dma.done [#allocation15], 16
        $region140: #{tpu_custom_call.1} parent=103 // pred_fallthru
          _
        // Predicated region
        $region141: #{tpu_custom_call.1} parent=103 // pred_check
          %p838 = pneg %p314
        $region142: #{tpu_custom_call.1} parent=103 // pred_check_branch
          %840 = sbr.rel (%p838) target = $region144
        $region143: #{tpu_custom_call.1} parent=103 // pred_region
          %841 = dma.done [#allocation18], 256
        $region144: #{tpu_custom_call.1} parent=103 // pred_fallthru
          _
        // Predicated region
        $region145: #{tpu_custom_call.1} parent=103 // pred_check
          %p842 = pneg %p335
        $region146: #{tpu_custom_call.1} parent=103 // pred_check_branch
          %844 = sbr.rel (%p842) target = $region148
        $region147: #{tpu_custom_call.1} parent=103 // pred_region
          %845 = dma.done [#allocation18], 16
        $region148: #{tpu_custom_call.1} parent=103 // pred_fallthru
          _
        // Predicated region
        $region149: #{tpu_custom_call.1} parent=103 // pred_check
          %p846 = pneg %p356
        $region150: #{tpu_custom_call.1} parent=103 // pred_check_branch
          %848 = sbr.rel (%p846) target = $region152
        $region151: #{tpu_custom_call.1} parent=103 // pred_region
          %849 = dma.done [#allocation21], 16
        $region152: #{tpu_custom_call.1} parent=103 // pred_fallthru
          _
        // Predicated region
        $region153: #{tpu_custom_call.1} parent=103 // pred_check
          %p850 = pneg %p377
        $region154: #{tpu_custom_call.1} parent=103 // pred_check_branch
          %852 = sbr.rel (%p850) target = $region156
        $region155: #{tpu_custom_call.1} parent=103 // pred_region
          %853 = dma.done [#allocation21], 16
        $region156: #{tpu_custom_call.1} parent=103 // pred_fallthru
          _
        // Predicated region
        $region157: #{tpu_custom_call.1} parent=103 // pred_check
          %p854 = pneg %p419
        $region158: #{tpu_custom_call.1} parent=103 // pred_check_branch
          %856 = sbr.rel (%p854) target = $region160
        $region159: #{tpu_custom_call.1} parent=103 // pred_region
          %857 = dma.done [#allocation24], 16
        $region160: #{tpu_custom_call.1} parent=103 // pred_fallthru
          _
        // Predicated region
        $region161: #{tpu_custom_call.1} parent=103 // pred_check
          %p858 = pneg %p440
        $region162: #{tpu_custom_call.1} parent=103 // pred_check_branch
          %860 = sbr.rel (%p858) target = $region164
        $region163: #{tpu_custom_call.1} parent=103 // pred_region
          %861 = dma.done [#allocation24], 16
        $region164: #{tpu_custom_call.1} parent=103 // pred_fallthru
          _
        %s862 = sand.u32 %s60, 1
        %s863 = scalar_lea.sflag [#allocation3], %s862
        %s864 = sand.u32 %s60, 1
        %s865 = smul.addr %s864, 8
        %s866 = scalar_lea.vmem [#allocation2], %s865
        %p867 = pneg %p73
        %p868 = pneg %p70
        %s869 = sand.u32 %s52, 1
        %s870 = scalar_lea.sflag [#allocation6], %s869
        %s871 = sand.u32 %s86, 1
        %s872 = smul.addr %s871, 8
        %s873 = scalar_lea.vmem [#allocation5], %s872
        %p874 = pneg %p99
        %p875 = pneg %p96
        %s876 = sand.u32 %s52, 1
        %s877 = scalar_lea.sflag [#allocation6], %s876
        %s878 = sand.u32 %s112, 1
        %s879 = smul.addr %s878, 8
        %s880 = scalar_lea.vmem [#allocation7], %s879
        %p881 = pneg %p125
        %p882 = pneg %p122
        %p883 = pneg %p146
        %p884 = pneg %p143
        %p885 = pneg %p167
        %p886 = pneg %p164
        %p887 = pneg %p188
        %p888 = pneg %p185
        %p889 = pneg %p209
        %p890 = pneg %p206
        %p891 = pneg %p230
        %p892 = pneg %p227
        %p893 = pneg %p251
        %p894 = pneg %p248
        %p895 = pneg %p272
        %p896 = pneg %p269
        %p897 = pneg %p293
        %p898 = pneg %p290
        %p899 = pneg %p314
        %p900 = pneg %p311
        %p901 = pneg %p335
        %p902 = pneg %p332
        %p903 = pneg %p356
        %p904 = pneg %p353
        %p905 = pneg %p377
        %p906 = pneg %p374
        %p907 = pneg %p398
        %p908 = pneg %p395
        %p909 = pneg %p419
        %p910 = pneg %p416
        %p911 = pneg %p440
        %p912 = pneg %p437
        %p913 = pneg %p461
        %p914 = pneg %p458
        %p915 = pneg %p482
        %p916 = pneg %p479
        %p917 = pneg %p503
        %p918 = pneg %p500
        %p919 = pneg %p529
        %p920 = pneg %p526
        %s921 = sand.u32 %s516, 1
        %s922 = scalar_lea.sflag [#allocation4], %s921
        %s923 = sand.u32 %s516, 1
        %s924 = smul.addr %s923, 8
        %s925 = scalar_lea.vmem [#allocation26], %s924
        %p926 = pneg %p555
        %p927 = pneg %p552
        %s928 = sand.u32 %s542, 1
        %s929 = scalar_lea.sflag [#allocation28], %s928
        %s930 = sand.u32 %s542, 1
        %s931 = smul.addr %s930, 8
        %s932 = scalar_lea.vmem [#allocation27], %s931
        %v934 = vld [vmem:[%s791] sm:$0xff]
        %v935 = vld [vmem:[%s800] sm:$0xff]
        %v936 = vld [vmem:[%s809] sm:$0xff]
        %v937 = vld [vmem:[#allocation8] sm:$0x1]
        %v938 = vld [vmem:[#allocation10] sm:$0x1]
        %vm939 = vcmask 261120
        %v940 = vsel %vm939, %v934, 0.0
        %941 = vadd.xlane.f32.xlu0 %v940
        %v942 = vpop.xlane.xlu0 %941
        %v943 = vrcp.pop 32.0
        %v944 = vmul.f32 %v942, %v943
        %v945 = vsub.f32 %v934, %v944
        %v946 = vmul.f32 %v945, %v945
        %v947 = vsel %vm939, %v946, 0.0
        %948 = vadd.xlane.f32.xlu0 %v947
        %v949 = vpop.xlane.xlu0 %948
        %v950 = vmul.f32 %v949, %v943
        %v951 = vadd.f32 %v950, 1e-05
        %v952 = vrsqrt.pop %v951
        %v953 = vmul.f32 %v945, %v952
        %v955 = vlaneseq
        %v956 = vshrl.u32 %v955, 7
        %v957 = vsub.s32 0, %v956
        %v958 = vrot.slane %v937, %v957
        %v960 = vmul.f32 %v953, %v958
        %v962 = vlaneseq
        %v963 = vshrl.u32 %v962, 7
        %v964 = vsub.s32 0, %v963
        %v965 = vrot.slane %v938, %v964
        %v967 = vadd.f32 %v960, %v965
        %v968 = vld [vmem:[#allocation11] sm:$0x1]
        %v969 = vld [vmem:[#allocation13] sm:$0x1]
        %v970 = vsel %vm939, %v935, 0.0
        %971 = vadd.xlane.f32.xlu0 %v970
        %v972 = vpop.xlane.xlu0 %971
        %v973 = vmul.f32 %v972, %v943
        %v974 = vsub.f32 %v935, %v973
        %v975 = vmul.f32 %v974, %v974
        %v976 = vsel %vm939, %v975, 0.0
        %977 = vadd.xlane.f32.xlu0 %v976
        %v978 = vpop.xlane.xlu0 %977
        %v979 = vmul.f32 %v978, %v943
        %v980 = vadd.f32 %v979, 1e-05
        %v981 = vrsqrt.pop %v980
        %v982 = vmul.f32 %v974, %v981
        %v984 = vlaneseq
        %v985 = vshrl.u32 %v984, 7
        %v986 = vsub.s32 0, %v985
        %v987 = vrot.slane %v968, %v986
        %v989 = vmul.f32 %v982, %v987
        %v991 = vlaneseq
        %v992 = vshrl.u32 %v991, 7
        %v993 = vsub.s32 0, %v992
        %v994 = vrot.slane %v969, %v993
        %v996 = vadd.f32 %v989, %v994
        %v997 = vld [vmem:[#allocation14] sm:$0x1]
        %v998 = vld [vmem:[#allocation16] sm:$0x1]
        %v999 = vsel %vm939, %v936, 0.0
        %1000 = vadd.xlane.f32.xlu0 %v999
        %v1001 = vpop.xlane.xlu0 %1000
        %v1002 = vmul.f32 %v1001, %v943
        %v1003 = vsub.f32 %v936, %v1002
        %v1004 = vmul.f32 %v1003, %v1003
        %v1005 = vsel %vm939, %v1004, 0.0
        %1006 = vadd.xlane.f32.xlu0 %v1005
        %v1007 = vpop.xlane.xlu0 %1006
        %v1008 = vmul.f32 %v1007, %v943
        %v1009 = vadd.f32 %v1008, 1e-05
        %v1010 = vrsqrt.pop %v1009
        %v1011 = vmul.f32 %v1003, %v1010
        %v1013 = vlaneseq
        %v1014 = vshrl.u32 %v1013, 7
        %v1015 = vsub.s32 0, %v1014
        %v1016 = vrot.slane %v997, %v1015
        %v1018 = vmul.f32 %v1011, %v1016
        %v1020 = vlaneseq
        %v1021 = vshrl.u32 %v1020, 7
        %v1022 = vsub.s32 0, %v1021
        %v1023 = vrot.slane %v998, %v1022
        %v1025 = vadd.f32 %v1018, %v1023
        %v1026 = vpack.c.bf16 %v967, %v967
        %v1027 = vld [vmem:[%s9] sm:$0xf]
        %v1028 = vld [vmem:[%s9 + $0x4] sm:$0xf]
        %v1029 = vld [vmem:[%s9 + $0x8] sm:$0xf]
        %v1030 = vld [vmem:[%s9 + $0xc] sm:$0xf]
        %v1031 = vld [vmem:[#allocation19] sm:$0x1]
        %v1033 = vlaneseq
        %v1034 = vshrl.u32 %v1033, 7
        %v1035 = vsub.s32 0, %v1034
        %v1036 = vrot.slane %v1031, %v1035
        %v1042 = vunpack.c.l.b16 %v1027
        %v1043 = vunpack.c.l.b16 %v1028
        %v1044 = vunpack.c.l.b16 %v1029
        %v1045 = vunpack.c.l.b16 %v1030
        %v1046 = vpack.c.b16 %v1043, %v1042
        %v1047 = vpack.c.b16 %v1045, %v1044
        %v1051 = vsel %vm939, %v1026, 0
        %1053 = vmatprep.subr.bf16.mxu0 0
        %1054 = vmatpush1.bf16.msra.mxu0 %v1046
        %1055 = vmatprep.subr.bf16.mxu0 0
        %1056 = vmatpush1.bf16.msra.mxu0 %v1047
        %1057 = vmatprep.subr.bf16.mxu0 0
        %1058 = vmatpush1.bf16.msra.mxu0 0
        %1059 = vmatprep.subr.bf16.mxu0 0
        %1060 = vmatpush1.bf16.msra.mxu0 0
        %1061 = vmatprep.subr.bf16.mxu0 0
        %1062 = vmatpush1.bf16.msra.mxu0 0
        %1063 = vmatprep.subr.bf16.mxu0 0
        %1064 = vmatpush1.bf16.msra.mxu0 0
        %1065 = vmatprep.subr.bf16.mxu0 0
        %1066 = vmatpush1.bf16.msra.mxu0 0
        %1067 = vmatprep.subr.bf16.mxu0 0
        %1068 = vmatpush1.bf16.msra.mxu0 0
        %1069 = vmatprep.subr.bf16.mxu0 0
        %1070 = vmatpush1.bf16.msra.mxu0 0
        %1071 = vmatprep.subr.bf16.mxu0 0
        %1072 = vmatpush1.bf16.msra.mxu0 0
        %1073 = vmatprep.subr.bf16.mxu0 0
        %1074 = vmatpush1.bf16.msra.mxu0 0
        %1075 = vmatprep.subr.bf16.mxu0 0
        %1076 = vmatpush1.bf16.msra.mxu0 0
        %1077 = vmatprep.subr.bf16.mxu0 0
        %1078 = vmatpush1.bf16.msra.mxu0 0
        %1079 = vmatprep.subr.bf16.mxu0 0
        %1080 = vmatpush1.bf16.msra.mxu0 0
        %1081 = vmatprep.subr.bf16.mxu0 0
        %1082 = vmatpush1.bf16.msra.mxu0 0
        %1083 = vmatprep.subr.bf16.mxu0 0
        %1084 = vmatpush1.bf16.msra.mxu0 0
        %1085 = vmatprep.mubr.bf16.mxu0 0
        %1086 = vmatmul.mubr.bf16.gmra.mrb[0].mxu0 %v1051
        %v1087 = vpop.f32.mrb[0].mxu0
        %v1088 = vadd.f32 %v1036, %v1087
        %v1089 = vpop.f32.mrb[0].mxu0
        %v1090 = vpop.f32.mrb[0].mxu0
        %v1091 = vpop.f32.mrb[0].mxu0
        %1092 = vdwg.mxu0
        %v1093 = vpack.c.bf16 %v1088, %v1088
        %v1094 = vpack.c.bf16 %v996, %v996
        %v1095 = vld [vmem:[%s10] sm:$0xf]
        %v1096 = vld [vmem:[%s10 + $0x4] sm:$0xf]
        %v1097 = vld [vmem:[%s10 + $0x8] sm:$0xf]
        %v1098 = vld [vmem:[%s10 + $0xc] sm:$0xf]
        %v1099 = vld [vmem:[#allocation20] sm:$0x1]
        %v1101 = vlaneseq
        %v1102 = vshrl.u32 %v1101, 7
        %v1103 = vsub.s32 0, %v1102
        %v1104 = vrot.slane %v1099, %v1103
        %v1110 = vunpack.c.l.b16 %v1095
        %v1111 = vunpack.c.l.b16 %v1096
        %v1112 = vunpack.c.l.b16 %v1097
        %v1113 = vunpack.c.l.b16 %v1098
        %v1114 = vpack.c.b16 %v1111, %v1110
        %v1115 = vpack.c.b16 %v1113, %v1112
        %v1119 = vsel %vm939, %v1094, 0
        %1121 = vmatprep.subr.bf16.mxu0 0
        %1122 = vmatpush1.bf16.msra.mxu0 %v1114
        %1123 = vmatprep.subr.bf16.mxu0 0
        %1124 = vmatpush1.bf16.msra.mxu0 %v1115
        %1125 = vmatprep.subr.bf16.mxu0 0
        %1126 = vmatpush1.bf16.msra.mxu0 0
        %1127 = vmatprep.subr.bf16.mxu0 0
        %1128 = vmatpush1.bf16.msra.mxu0 0
        %1129 = vmatprep.subr.bf16.mxu0 0
        %1130 = vmatpush1.bf16.msra.mxu0 0
        %1131 = vmatprep.subr.bf16.mxu0 0
        %1132 = vmatpush1.bf16.msra.mxu0 0
        %1133 = vmatprep.subr.bf16.mxu0 0
        %1134 = vmatpush1.bf16.msra.mxu0 0
        %1135 = vmatprep.subr.bf16.mxu0 0
        %1136 = vmatpush1.bf16.msra.mxu0 0
        %1137 = vmatprep.subr.bf16.mxu0 0
        %1138 = vmatpush1.bf16.msra.mxu0 0
        %1139 = vmatprep.subr.bf16.mxu0 0
        %1140 = vmatpush1.bf16.msra.mxu0 0
        %1141 = vmatprep.subr.bf16.mxu0 0
        %1142 = vmatpush1.bf16.msra.mxu0 0
        %1143 = vmatprep.subr.bf16.mxu0 0
        %1144 = vmatpush1.bf16.msra.mxu0 0
        %1145 = vmatprep.subr.bf16.mxu0 0
        %1146 = vmatpush1.bf16.msra.mxu0 0
        %1147 = vmatprep.subr.bf16.mxu0 0
        %1148 = vmatpush1.bf16.msra.mxu0 0
        %1149 = vmatprep.subr.bf16.mxu0 0
        %1150 = vmatpush1.bf16.msra.mxu0 0
        %1151 = vmatprep.subr.bf16.mxu0 0
        %1152 = vmatpush1.bf16.msra.mxu0 0
        %1153 = vmatprep.mubr.bf16.mxu0 0
        %1154 = vmatmul.mubr.bf16.gmra.mrb[0].mxu0 %v1119
        %v1155 = vpop.f32.mrb[0].mxu0
        %v1156 = vadd.f32 %v1104, %v1155
        %v1157 = vpop.f32.mrb[0].mxu0
        %v1158 = vpop.f32.mrb[0].mxu0
        %v1159 = vpop.f32.mrb[0].mxu0
        %1160 = vdwg.mxu0
        %v1161 = vpack.c.bf16 %v1156, %v1156
        %v1162 = vpack.c.bf16 %v1025, %v1025
        %v1163 = vld [vmem:[#allocation17] sm:$0xf]
        %v1164 = vld [vmem:[#allocation17 + $0x4] sm:$0xf]
        %v1165 = vld [vmem:[#allocation17 + $0x8] sm:$0xf]
        %v1166 = vld [vmem:[#allocation17 + $0xc] sm:$0xf]
        %v1167 = vld [vmem:[#allocation22] sm:$0x1]
        %v1169 = vlaneseq
        %v1170 = vshrl.u32 %v1169, 7
        %v1171 = vsub.s32 0, %v1170
        %v1172 = vrot.slane %v1167, %v1171
        %v1178 = vunpack.c.l.b16 %v1163
        %v1179 = vunpack.c.l.b16 %v1164
        %v1180 = vunpack.c.l.b16 %v1165
        %v1181 = vunpack.c.l.b16 %v1166
        %v1182 = vpack.c.b16 %v1179, %v1178
        %v1183 = vpack.c.b16 %v1181, %v1180
        %v1187 = vsel %vm939, %v1162, 0
        %1189 = vmatprep.subr.bf16.mxu0 0
        %1190 = vmatpush1.bf16.msra.mxu0 %v1182
        %1191 = vmatprep.subr.bf16.mxu0 0
        %1192 = vmatpush1.bf16.msra.mxu0 %v1183
        %1193 = vmatprep.subr.bf16.mxu0 0
        %1194 = vmatpush1.bf16.msra.mxu0 0
        %1195 = vmatprep.subr.bf16.mxu0 0
        %1196 = vmatpush1.bf16.msra.mxu0 0
        %1197 = vmatprep.subr.bf16.mxu0 0
        %1198 = vmatpush1.bf16.msra.mxu0 0
        %1199 = vmatprep.subr.bf16.mxu0 0
        %1200 = vmatpush1.bf16.msra.mxu0 0
        %1201 = vmatprep.subr.bf16.mxu0 0
        %1202 = vmatpush1.bf16.msra.mxu0 0
        %1203 = vmatprep.subr.bf16.mxu0 0
        %1204 = vmatpush1.bf16.msra.mxu0 0
        %1205 = vmatprep.subr.bf16.mxu0 0
        %1206 = vmatpush1.bf16.msra.mxu0 0
        %1207 = vmatprep.subr.bf16.mxu0 0
        %1208 = vmatpush1.bf16.msra.mxu0 0
        %1209 = vmatprep.subr.bf16.mxu0 0
        %1210 = vmatpush1.bf16.msra.mxu0 0
        %1211 = vmatprep.subr.bf16.mxu0 0
        %1212 = vmatpush1.bf16.msra.mxu0 0
        %1213 = vmatprep.subr.bf16.mxu0 0
        %1214 = vmatpush1.bf16.msra.mxu0 0
        %1215 = vmatprep.subr.bf16.mxu0 0
        %1216 = vmatpush1.bf16.msra.mxu0 0
        %1217 = vmatprep.subr.bf16.mxu0 0
        %1218 = vmatpush1.bf16.msra.mxu0 0
        %1219 = vmatprep.subr.bf16.mxu0 0
        %1220 = vmatpush1.bf16.msra.mxu0 0
        %1221 = vmatprep.mubr.bf16.mxu0 0
        %1222 = vmatmul.mubr.bf16.gmra.mrb[0].mxu0 %v1187
        %v1223 = vpop.f32.mrb[0].mxu0
        %v1224 = vadd.f32 %v1172, %v1223
        %v1225 = vpop.f32.mrb[0].mxu0
        %v1226 = vpop.f32.mrb[0].mxu0
        %v1227 = vpop.f32.mrb[0].mxu0
        %1228 = vdwg.mxu0
        %v1229 = vpack.c.bf16 %v1224, %v1224
        %1231 = vrot.lane.b32.xlu0 %v1093, 120
        %v1232 = vpop.permute.xlu0 %1231
        %1233 = vrot.lane.b32.xlu0 %v1093, 112
        %v1234 = vpop.permute.xlu0 %1233
        %1235 = vrot.lane.b32.xlu0 %v1093, 104
        %v1236 = vpop.permute.xlu0 %1235
        %1238 = vrot.lane.b32.xlu0 %v1161, 120
        %v1239 = vpop.permute.xlu0 %1238
        %1240 = vrot.lane.b32.xlu0 %v1161, 112
        %v1241 = vpop.permute.xlu0 %1240
        %1242 = vrot.lane.b32.xlu0 %v1161, 104
        %v1243 = vpop.permute.xlu0 %1242
        %1245 = vrot.lane.b32.xlu0 %v1229, 120
        %v1246 = vpop.permute.xlu0 %1245
        %1247 = vrot.lane.b32.xlu0 %v1229, 112
        %v1248 = vpop.permute.xlu0 %1247
        %1249 = vrot.lane.b32.xlu0 %v1229, 104
        %v1250 = vpop.permute.xlu0 %1249
        %vm1251 = vcmask 64512
        %v1253 = vsel %vm1251, %v1093, 0
        %v1256 = vsel %vm1251, %v1161, 0
        %1258 = vmatprep.subr.bf16.mxu0 0
        %1259 = vmatpush1.bf16.xpose.msra.mxu0 %v1256
        %1260 = vmatprep.subr.bf16.mxu0 0
        %1261 = vmatpush1.bf16.xpose.msra.mxu0 0
        %1262 = vmatprep.subr.bf16.mxu0 0
        %1263 = vmatpush1.bf16.xpose.msra.mxu0 0
        %1264 = vmatprep.subr.bf16.mxu0 0
        %1265 = vmatpush1.bf16.xpose.msra.mxu0 0
        %1266 = vmatprep.subr.bf16.mxu0 0
        %1267 = vmatpush1.bf16.xpose.msra.mxu0 0
        %1268 = vmatprep.subr.bf16.mxu0 0
        %1269 = vmatpush1.bf16.xpose.msra.mxu0 0
        %1270 = vmatprep.subr.bf16.mxu0 0
        %1271 = vmatpush1.bf16.xpose.msra.mxu0 0
        %1272 = vmatprep.subr.bf16.mxu0 0
        %1273 = vmatpush1.bf16.xpose.msra.mxu0 0
        %1274 = vmatprep.subr.bf16.mxu0 0
        %1275 = vmatpush1.bf16.xpose.msra.mxu0 0
        %1276 = vmatprep.subr.bf16.mxu0 0
        %1277 = vmatpush1.bf16.xpose.msra.mxu0 0
        %1278 = vmatprep.subr.bf16.mxu0 0
        %1279 = vmatpush1.bf16.xpose.msra.mxu0 0
        %1280 = vmatprep.subr.bf16.mxu0 0
        %1281 = vmatpush1.bf16.xpose.msra.mxu0 0
        %1282 = vmatprep.subr.bf16.mxu0 0
        %1283 = vmatpush1.bf16.xpose.msra.mxu0 0
        %1284 = vmatprep.subr.bf16.mxu0 0
        %1285 = vmatpush1.bf16.xpose.msra.mxu0 0
        %1286 = vmatprep.subr.bf16.mxu0 0
        %1287 = vmatpush1.bf16.xpose.msra.mxu0 0
        %1288 = vmatprep.subr.bf16.mxu0 0
        %1289 = vmatpush1.bf16.xpose.msra.mxu0 0
        %1290 = vmatprep.mubr.bf16.mxu0 0
        %1291 = vmatmul.mubr.bf16.gmra.mrb[0].mxu0 %v1253
        %v1292 = vpop.f32.mrb[0].mxu0
        %v1293 = vadd.f32 0.0, %v1292
        %v1294 = vpop.f32.mrb[0].mxu0
        %v1295 = vpop.f32.mrb[0].mxu0
        %v1296 = vpop.f32.mrb[0].mxu0
        %1297 = vdwg.mxu0
        %v1299 = vsel %vm1251, %v1232, 0
        %v1302 = vsel %vm1251, %v1239, 0
        %1304 = vmatprep.subr.bf16.mxu0 0
        %1305 = vmatpush1.bf16.xpose.msra.mxu0 %v1302
        %1306 = vmatprep.subr.bf16.mxu0 0
        %1307 = vmatpush1.bf16.xpose.msra.mxu0 0
        %1308 = vmatprep.subr.bf16.mxu0 0
        %1309 = vmatpush1.bf16.xpose.msra.mxu0 0
        %1310 = vmatprep.subr.bf16.mxu0 0
        %1311 = vmatpush1.bf16.xpose.msra.mxu0 0
        %1312 = vmatprep.subr.bf16.mxu0 0
        %1313 = vmatpush1.bf16.xpose.msra.mxu0 0
        %1314 = vmatprep.subr.bf16.mxu0 0
        %1315 = vmatpush1.bf16.xpose.msra.mxu0 0
        %1316 = vmatprep.subr.bf16.mxu0 0
        %1317 = vmatpush1.bf16.xpose.msra.mxu0 0
        %1318 = vmatprep.subr.bf16.mxu0 0
        %1319 = vmatpush1.bf16.xpose.msra.mxu0 0
        %1320 = vmatprep.subr.bf16.mxu0 0
        %1321 = vmatpush1.bf16.xpose.msra.mxu0 0
        %1322 = vmatprep.subr.bf16.mxu0 0
        %1323 = vmatpush1.bf16.xpose.msra.mxu0 0
        %1324 = vmatprep.subr.bf16.mxu0 0
        %1325 = vmatpush1.bf16.xpose.msra.mxu0 0
        %1326 = vmatprep.subr.bf16.mxu0 0
        %1327 = vmatpush1.bf16.xpose.msra.mxu0 0
        %1328 = vmatprep.subr.bf16.mxu0 0
        %1329 = vmatpush1.bf16.xpose.msra.mxu0 0
        %1330 = vmatprep.subr.bf16.mxu0 0
        %1331 = vmatpush1.bf16.xpose.msra.mxu0 0
        %1332 = vmatprep.subr.bf16.mxu0 0
        %1333 = vmatpush1.bf16.xpose.msra.mxu0 0
        %1334 = vmatprep.subr.bf16.mxu0 0
        %1335 = vmatpush1.bf16.xpose.msra.mxu0 0
        %1336 = vmatprep.mubr.bf16.mxu0 0
        %1337 = vmatmul.mubr.bf16.gmra.mrb[0].mxu0 %v1299
        %v1338 = vpop.f32.mrb[0].mxu0
        %v1339 = vadd.f32 0.0, %v1338
        %v1340 = vpop.f32.mrb[0].mxu0
        %v1341 = vpop.f32.mrb[0].mxu0
        %v1342 = vpop.f32.mrb[0].mxu0
        %1343 = vdwg.mxu0
        %v1345 = vsel %vm1251, %v1234, 0
        %v1348 = vsel %vm1251, %v1241, 0
        %1350 = vmatprep.subr.bf16.mxu0 0
        %1351 = vmatpush1.bf16.xpose.msra.mxu0 %v1348
        %1352 = vmatprep.subr.bf16.mxu0 0
        %1353 = vmatpush1.bf16.xpose.msra.mxu0 0
        %1354 = vmatprep.subr.bf16.mxu0 0
        %1355 = vmatpush1.bf16.xpose.msra.mxu0 0
        %1356 = vmatprep.subr.bf16.mxu0 0
        %1357 = vmatpush1.bf16.xpose.msra.mxu0 0
        %1358 = vmatprep.subr.bf16.mxu0 0
        %1359 = vmatpush1.bf16.xpose.msra.mxu0 0
        %1360 = vmatprep.subr.bf16.mxu0 0
        %1361 = vmatpush1.bf16.xpose.msra.mxu0 0
        %1362 = vmatprep.subr.bf16.mxu0 0
        %1363 = vmatpush1.bf16.xpose.msra.mxu0 0
        %1364 = vmatprep.subr.bf16.mxu0 0
        %1365 = vmatpush1.bf16.xpose.msra.mxu0 0
        %1366 = vmatprep.subr.bf16.mxu0 0
        %1367 = vmatpush1.bf16.xpose.msra.mxu0 0
        %1368 = vmatprep.subr.bf16.mxu0 0
        %1369 = vmatpush1.bf16.xpose.msra.mxu0 0
        %1370 = vmatprep.subr.bf16.mxu0 0
        %1371 = vmatpush1.bf16.xpose.msra.mxu0 0
        %1372 = vmatprep.subr.bf16.mxu0 0
        %1373 = vmatpush1.bf16.xpose.msra.mxu0 0
        %1374 = vmatprep.subr.bf16.mxu0 0
        %1375 = vmatpush1.bf16.xpose.msra.mxu0 0
        %1376 = vmatprep.subr.bf16.mxu0 0
        %1377 = vmatpush1.bf16.xpose.msra.mxu0 0
        %1378 = vmatprep.subr.bf16.mxu0 0
        %1379 = vmatpush1.bf16.xpose.msra.mxu0 0
        %1380 = vmatprep.subr.bf16.mxu0 0
        %1381 = vmatpush1.bf16.xpose.msra.mxu0 0
        %1382 = vmatprep.mubr.bf16.mxu0 0
        %1383 = vmatmul.mubr.bf16.gmra.mrb[0].mxu0 %v1345
        %v1384 = vpop.f32.mrb[0].mxu0
        %v1385 = vadd.f32 0.0, %v1384
        %v1386 = vpop.f32.mrb[0].mxu0
        %v1387 = vpop.f32.mrb[0].mxu0
        %v1388 = vpop.f32.mrb[0].mxu0
        %1389 = vdwg.mxu0
        %v1391 = vsel %vm1251, %v1236, 0
        %v1394 = vsel %vm1251, %v1243, 0
        %1396 = vmatprep.subr.bf16.mxu0 0
        %1397 = vmatpush1.bf16.xpose.msra.mxu0 %v1394
        %1398 = vmatprep.subr.bf16.mxu0 0
        %1399 = vmatpush1.bf16.xpose.msra.mxu0 0
        %1400 = vmatprep.subr.bf16.mxu0 0
        %1401 = vmatpush1.bf16.xpose.msra.mxu0 0
        %1402 = vmatprep.subr.bf16.mxu0 0
        %1403 = vmatpush1.bf16.xpose.msra.mxu0 0
        %1404 = vmatprep.subr.bf16.mxu0 0
        %1405 = vmatpush1.bf16.xpose.msra.mxu0 0
        %1406 = vmatprep.subr.bf16.mxu0 0
        %1407 = vmatpush1.bf16.xpose.msra.mxu0 0
        %1408 = vmatprep.subr.bf16.mxu0 0
        %1409 = vmatpush1.bf16.xpose.msra.mxu0 0
        %1410 = vmatprep.subr.bf16.mxu0 0
        %1411 = vmatpush1.bf16.xpose.msra.mxu0 0
        %1412 = vmatprep.subr.bf16.mxu0 0
        %1413 = vmatpush1.bf16.xpose.msra.mxu0 0
        %1414 = vmatprep.subr.bf16.mxu0 0
        %1415 = vmatpush1.bf16.xpose.msra.mxu0 0
        %1416 = vmatprep.subr.bf16.mxu0 0
        %1417 = vmatpush1.bf16.xpose.msra.mxu0 0
        %1418 = vmatprep.subr.bf16.mxu0 0
        %1419 = vmatpush1.bf16.xpose.msra.mxu0 0
        %1420 = vmatprep.subr.bf16.mxu0 0
        %1421 = vmatpush1.bf16.xpose.msra.mxu0 0
        %1422 = vmatprep.subr.bf16.mxu0 0
        %1423 = vmatpush1.bf16.xpose.msra.mxu0 0
        %1424 = vmatprep.subr.bf16.mxu0 0
        %1425 = vmatpush1.bf16.xpose.msra.mxu0 0
        %1426 = vmatprep.subr.bf16.mxu0 0
        %1427 = vmatpush1.bf16.xpose.msra.mxu0 0
        %1428 = vmatprep.mubr.bf16.mxu0 0
        %1429 = vmatmul.mubr.bf16.gmra.mrb[0].mxu0 %v1391
        %v1430 = vpop.f32.mrb[0].mxu0
        %v1431 = vadd.f32 0.0, %v1430
        %v1432 = vpop.f32.mrb[0].mxu0
        %v1433 = vpop.f32.mrb[0].mxu0
        %v1434 = vpop.f32.mrb[0].mxu0
        %1435 = vdwg.mxu0
        %v1436 = vsel %vm1251, %v1293, -inf
        %1437 = vmax.xlane.f32.xlu0 %v1436
        %v1438 = vpop.xlane.xlu0 %1437
        %v1439 = vsel %vm1251, %v1339, -inf
        %1440 = vmax.xlane.f32.xlu0 %v1439
        %v1441 = vpop.xlane.xlu0 %1440
        %v1442 = vsel %vm1251, %v1385, -inf
        %1443 = vmax.xlane.f32.xlu0 %v1442
        %v1444 = vpop.xlane.xlu0 %1443
        %v1445 = vsel %vm1251, %v1431, -inf
        %1446 = vmax.xlane.f32.xlu0 %v1445
        %v1447 = vpop.xlane.xlu0 %1446
        %v1448 = vsub.f32 %v1293, %v1438
        %v1449 = vsub.f32 %v1339, %v1441
        %v1450 = vsub.f32 %v1385, %v1444
        %v1451 = vsub.f32 %v1431, %v1447
        %v1452 = vmul.f32 %v1448, 1.442695
        %v1453 = vpow.pop %v1452
        %v1454 = vmul.f32 %v1449, 1.442695
        %v1455 = vpow.pop %v1454
        %v1456 = vmul.f32 %v1450, 1.442695
        %v1457 = vpow.pop %v1456
        %v1458 = vmul.f32 %v1451, 1.442695
        %v1459 = vpow.pop %v1458
        %v1460 = vsel %vm1251, %v1453, 0.0
        %1461 = vadd.xlane.f32.xlu0 %v1460
        %v1462 = vpop.xlane.xlu0 %1461
        %v1463 = vsel %vm1251, %v1455, 0.0
        %1464 = vadd.xlane.f32.xlu0 %v1463
        %v1465 = vpop.xlane.xlu0 %1464
        %v1466 = vsel %vm1251, %v1457, 0.0
        %1467 = vadd.xlane.f32.xlu0 %v1466
        %v1468 = vpop.xlane.xlu0 %1467
        %v1469 = vsel %vm1251, %v1459, 0.0
        %1470 = vadd.xlane.f32.xlu0 %v1469
        %v1471 = vpop.xlane.xlu0 %1470
        %v1472 = vrcp.pop %v1462
        %v1473 = vmul.f32 %v1453, %v1472
        %v1474 = vrcp.pop %v1465
        %v1475 = vmul.f32 %v1455, %v1474
        %v1476 = vrcp.pop %v1468
        %v1477 = vmul.f32 %v1457, %v1476
        %v1478 = vrcp.pop %v1471
        %v1479 = vmul.f32 %v1459, %v1478
        %v1480 = vpack.c.bf16 %v1473, %v1473
        %v1481 = vpack.c.bf16 %v1475, %v1475
        %v1482 = vpack.c.bf16 %v1477, %v1477
        %v1483 = vpack.c.bf16 %v1479, %v1479
        %v1485 = vsel %vm1251, %v1480, 0
        %vm1487 = vcmask 1043456
        %v1489 = vsel %vm1487, %v1229, 0
        %1491 = vmatprep.subr.bf16.mxu0 0
        %1492 = vmatpush1.bf16.msra.mxu0 %v1489
        %1493 = vmatprep.subr.bf16.mxu0 0
        %1494 = vmatpush1.bf16.msra.mxu0 0
        %1495 = vmatprep.subr.bf16.mxu0 0
        %1496 = vmatpush1.bf16.msra.mxu0 0
        %1497 = vmatprep.subr.bf16.mxu0 0
        %1498 = vmatpush1.bf16.msra.mxu0 0
        %1499 = vmatprep.subr.bf16.mxu0 0
        %1500 = vmatpush1.bf16.msra.mxu0 0
        %1501 = vmatprep.subr.bf16.mxu0 0
        %1502 = vmatpush1.bf16.msra.mxu0 0
        %1503 = vmatprep.subr.bf16.mxu0 0
        %1504 = vmatpush1.bf16.msra.mxu0 0
        %1505 = vmatprep.subr.bf16.mxu0 0
        %1506 = vmatpush1.bf16.msra.mxu0 0
        %1507 = vmatprep.subr.bf16.mxu0 0
        %1508 = vmatpush1.bf16.msra.mxu0 0
        %1509 = vmatprep.subr.bf16.mxu0 0
        %1510 = vmatpush1.bf16.msra.mxu0 0
        %1511 = vmatprep.subr.bf16.mxu0 0
        %1512 = vmatpush1.bf16.msra.mxu0 0
        %1513 = vmatprep.subr.bf16.mxu0 0
        %1514 = vmatpush1.bf16.msra.mxu0 0
        %1515 = vmatprep.subr.bf16.mxu0 0
        %1516 = vmatpush1.bf16.msra.mxu0 0
        %1517 = vmatprep.subr.bf16.mxu0 0
        %1518 = vmatpush1.bf16.msra.mxu0 0
        %1519 = vmatprep.subr.bf16.mxu0 0
        %1520 = vmatpush1.bf16.msra.mxu0 0
        %1521 = vmatprep.subr.bf16.mxu0 0
        %1522 = vmatpush1.bf16.msra.mxu0 0
        %1523 = vmatprep.mubr.bf16.mxu0 0
        %1524 = vmatmul.mubr.bf16.gmra.mrb[0].mxu0 %v1485
        %v1525 = vpop.f32.mrb[0].mxu0
        %v1526 = vadd.f32 0.0, %v1525
        %v1527 = vpop.f32.mrb[0].mxu0
        %v1528 = vpop.f32.mrb[0].mxu0
        %v1529 = vpop.f32.mrb[0].mxu0
        %1530 = vdwg.mxu0
        %v1532 = vsel %vm1251, %v1481, 0
        %v1535 = vsel %vm1487, %v1246, 0
        %1537 = vmatprep.subr.bf16.mxu0 0
        %1538 = vmatpush1.bf16.msra.mxu0 %v1535
        %1539 = vmatprep.subr.bf16.mxu0 0
        %1540 = vmatpush1.bf16.msra.mxu0 0
        %1541 = vmatprep.subr.bf16.mxu0 0
        %1542 = vmatpush1.bf16.msra.mxu0 0
        %1543 = vmatprep.subr.bf16.mxu0 0
        %1544 = vmatpush1.bf16.msra.mxu0 0
        %1545 = vmatprep.subr.bf16.mxu0 0
        %1546 = vmatpush1.bf16.msra.mxu0 0
        %1547 = vmatprep.subr.bf16.mxu0 0
        %1548 = vmatpush1.bf16.msra.mxu0 0
        %1549 = vmatprep.subr.bf16.mxu0 0
        %1550 = vmatpush1.bf16.msra.mxu0 0
        %1551 = vmatprep.subr.bf16.mxu0 0
        %1552 = vmatpush1.bf16.msra.mxu0 0
        %1553 = vmatprep.subr.bf16.mxu0 0
        %1554 = vmatpush1.bf16.msra.mxu0 0
        %1555 = vmatprep.subr.bf16.mxu0 0
        %1556 = vmatpush1.bf16.msra.mxu0 0
        %1557 = vmatprep.subr.bf16.mxu0 0
        %1558 = vmatpush1.bf16.msra.mxu0 0
        %1559 = vmatprep.subr.bf16.mxu0 0
        %1560 = vmatpush1.bf16.msra.mxu0 0
        %1561 = vmatprep.subr.bf16.mxu0 0
        %1562 = vmatpush1.bf16.msra.mxu0 0
        %1563 = vmatprep.subr.bf16.mxu0 0
        %1564 = vmatpush1.bf16.msra.mxu0 0
        %1565 = vmatprep.subr.bf16.mxu0 0
        %1566 = vmatpush1.bf16.msra.mxu0 0
        %1567 = vmatprep.subr.bf16.mxu0 0
        %1568 = vmatpush1.bf16.msra.mxu0 0
        %1569 = vmatprep.mubr.bf16.mxu0 0
        %1570 = vmatmul.mubr.bf16.gmra.mrb[0].mxu0 %v1532
        %v1571 = vpop.f32.mrb[0].mxu0
        %v1572 = vadd.f32 0.0, %v1571
        %v1573 = vpop.f32.mrb[0].mxu0
        %v1574 = vpop.f32.mrb[0].mxu0
        %v1575 = vpop.f32.mrb[0].mxu0
        %1576 = vdwg.mxu0
        %v1578 = vsel %vm1251, %v1482, 0
        %v1581 = vsel %vm1487, %v1248, 0
        %1583 = vmatprep.subr.bf16.mxu0 0
        %1584 = vmatpush1.bf16.msra.mxu0 %v1581
        %1585 = vmatprep.subr.bf16.mxu0 0
        %1586 = vmatpush1.bf16.msra.mxu0 0
        %1587 = vmatprep.subr.bf16.mxu0 0
        %1588 = vmatpush1.bf16.msra.mxu0 0
        %1589 = vmatprep.subr.bf16.mxu0 0
        %1590 = vmatpush1.bf16.msra.mxu0 0
        %1591 = vmatprep.subr.bf16.mxu0 0
        %1592 = vmatpush1.bf16.msra.mxu0 0
        %1593 = vmatprep.subr.bf16.mxu0 0
        %1594 = vmatpush1.bf16.msra.mxu0 0
        %1595 = vmatprep.subr.bf16.mxu0 0
        %1596 = vmatpush1.bf16.msra.mxu0 0
        %1597 = vmatprep.subr.bf16.mxu0 0
        %1598 = vmatpush1.bf16.msra.mxu0 0
        %1599 = vmatprep.subr.bf16.mxu0 0
        %1600 = vmatpush1.bf16.msra.mxu0 0
        %1601 = vmatprep.subr.bf16.mxu0 0
        %1602 = vmatpush1.bf16.msra.mxu0 0
        %1603 = vmatprep.subr.bf16.mxu0 0
        %1604 = vmatpush1.bf16.msra.mxu0 0
        %1605 = vmatprep.subr.bf16.mxu0 0
        %1606 = vmatpush1.bf16.msra.mxu0 0
        %1607 = vmatprep.subr.bf16.mxu0 0
        %1608 = vmatpush1.bf16.msra.mxu0 0
        %1609 = vmatprep.subr.bf16.mxu0 0
        %1610 = vmatpush1.bf16.msra.mxu0 0
        %1611 = vmatprep.subr.bf16.mxu0 0
        %1612 = vmatpush1.bf16.msra.mxu0 0
        %1613 = vmatprep.subr.bf16.mxu0 0
        %1614 = vmatpush1.bf16.msra.mxu0 0
        %1615 = vmatprep.mubr.bf16.mxu0 0
        %1616 = vmatmul.mubr.bf16.gmra.mrb[0].mxu0 %v1578
        %v1617 = vpop.f32.mrb[0].mxu0
        %v1618 = vadd.f32 0.0, %v1617
        %v1619 = vpop.f32.mrb[0].mxu0
        %v1620 = vpop.f32.mrb[0].mxu0
        %v1621 = vpop.f32.mrb[0].mxu0
        %1622 = vdwg.mxu0
        %v1624 = vsel %vm1251, %v1483, 0
        %v1627 = vsel %vm1487, %v1250, 0
        %1629 = vmatprep.subr.bf16.mxu0 0
        %1630 = vmatpush1.bf16.msra.mxu0 %v1627
        %1631 = vmatprep.subr.bf16.mxu0 0
        %1632 = vmatpush1.bf16.msra.mxu0 0
        %1633 = vmatprep.subr.bf16.mxu0 0
        %1634 = vmatpush1.bf16.msra.mxu0 0
        %1635 = vmatprep.subr.bf16.mxu0 0
        %1636 = vmatpush1.bf16.msra.mxu0 0
        %1637 = vmatprep.subr.bf16.mxu0 0
        %1638 = vmatpush1.bf16.msra.mxu0 0
        %1639 = vmatprep.subr.bf16.mxu0 0
        %1640 = vmatpush1.bf16.msra.mxu0 0
        %1641 = vmatprep.subr.bf16.mxu0 0
        %1642 = vmatpush1.bf16.msra.mxu0 0
        %1643 = vmatprep.subr.bf16.mxu0 0
        %1644 = vmatpush1.bf16.msra.mxu0 0
        %1645 = vmatprep.subr.bf16.mxu0 0
        %1646 = vmatpush1.bf16.msra.mxu0 0
        %1647 = vmatprep.subr.bf16.mxu0 0
        %1648 = vmatpush1.bf16.msra.mxu0 0
        %1649 = vmatprep.subr.bf16.mxu0 0
        %1650 = vmatpush1.bf16.msra.mxu0 0
        %1651 = vmatprep.subr.bf16.mxu0 0
        %1652 = vmatpush1.bf16.msra.mxu0 0
        %1653 = vmatprep.subr.bf16.mxu0 0
        %1654 = vmatpush1.bf16.msra.mxu0 0
        %1655 = vmatprep.subr.bf16.mxu0 0
        %1656 = vmatpush1.bf16.msra.mxu0 0
        %1657 = vmatprep.subr.bf16.mxu0 0
        %1658 = vmatpush1.bf16.msra.mxu0 0
        %1659 = vmatprep.subr.bf16.mxu0 0
        %1660 = vmatpush1.bf16.msra.mxu0 0
        %1661 = vmatprep.mubr.bf16.mxu0 0
        %1662 = vmatmul.mubr.bf16.gmra.mrb[0].mxu0 %v1624
        %v1663 = vpop.f32.mrb[0].mxu0
        %v1664 = vadd.f32 0.0, %v1663
        %v1665 = vpop.f32.mrb[0].mxu0
        %v1666 = vpop.f32.mrb[0].mxu0
        %v1667 = vpop.f32.mrb[0].mxu0
        %1668 = vdwg.mxu0
        %v1669 = vsel %vm1251, %v1473, 0.0
        %v1670 = vsel %vm1251, %v1475, 0.0
        %v1671 = vadd.f32 %v1669, %v1670
        %v1672 = vsel %vm1251, %v1477, 0.0
        %v1673 = vadd.f32 %v1671, %v1672
        %v1674 = vsel %vm1251, %v1479, 0.0
        %v1675 = vadd.f32 %v1673, %v1674
        %v1676 = vrcp.pop 4.0
        %v1677 = vmul.f32 %v1675, %v1676
        %v1678 = vpack.c.bf16 %v1526, %v1526
        %v1679 = vpack.c.bf16 %v1572, %v1572
        %v1680 = vpack.c.bf16 %v1618, %v1618
        %v1681 = vpack.c.bf16 %v1664, %v1664
        %1683 = vrot.lane.b32.xlu0 %v1679, 8
        %v1684 = vpop.permute.xlu0 %1683
        %1686 = vrot.lane.b32.xlu0 %v1680, 16
        %v1687 = vpop.permute.xlu0 %1686
        %1689 = vrot.lane.b32.xlu0 %v1681, 24
        %v1690 = vpop.permute.xlu0 %1689
        %v1693 = vsel %vm1251, %v1678, %v1684
        %vm1694 = vcmask 130048
        %v1696 = vsel %vm1694, %v1693, %v1687
        %vm1697 = vcmask 195584
        %v1699 = vsel %vm1697, %v1696, %v1690
        %v1700 = vld [vmem:[%s15] sm:$0xf]
        %v1701 = vld [vmem:[%s15 + $0x4] sm:$0xf]
        %v1702 = vld [vmem:[%s15 + $0x8] sm:$0xf]
        %v1703 = vld [vmem:[%s15 + $0xc] sm:$0xf]
        %v1704 = vld [vmem:[#allocation23] sm:$0x1]
        %v1706 = vlaneseq
        %v1707 = vshrl.u32 %v1706, 7
        %v1708 = vsub.s32 0, %v1707
        %v1709 = vrot.slane %v1704, %v1708
        %v1715 = vunpack.c.l.b16 %v1700
        %v1716 = vunpack.c.l.b16 %v1701
        %v1717 = vunpack.c.l.b16 %v1702
        %v1718 = vunpack.c.l.b16 %v1703
        %v1719 = vpack.c.b16 %v1716, %v1715
        %v1720 = vpack.c.b16 %v1718, %v1717
        %v1723 = vsel %vm939, %v1699, 0
        %1725 = vmatprep.subr.bf16.mxu0 0
        %1726 = vmatpush1.bf16.msra.mxu0 %v1719
        %1727 = vmatprep.subr.bf16.mxu0 0
        %1728 = vmatpush1.bf16.msra.mxu0 %v1720
        %1729 = vmatprep.subr.bf16.mxu0 0
        %1730 = vmatpush1.bf16.msra.mxu0 0
        %1731 = vmatprep.subr.bf16.mxu0 0
        %1732 = vmatpush1.bf16.msra.mxu0 0
        %1733 = vmatprep.subr.bf16.mxu0 0
        %1734 = vmatpush1.bf16.msra.mxu0 0
        %1735 = vmatprep.subr.bf16.mxu0 0
        %1736 = vmatpush1.bf16.msra.mxu0 0
        %1737 = vmatprep.subr.bf16.mxu0 0
        %1738 = vmatpush1.bf16.msra.mxu0 0
        %1739 = vmatprep.subr.bf16.mxu0 0
        %1740 = vmatpush1.bf16.msra.mxu0 0
        %1741 = vmatprep.subr.bf16.mxu0 0
        %1742 = vmatpush1.bf16.msra.mxu0 0
        %1743 = vmatprep.subr.bf16.mxu0 0
        %1744 = vmatpush1.bf16.msra.mxu0 0
        %1745 = vmatprep.subr.bf16.mxu0 0
        %1746 = vmatpush1.bf16.msra.mxu0 0
        %1747 = vmatprep.subr.bf16.mxu0 0
        %1748 = vmatpush1.bf16.msra.mxu0 0
        %1749 = vmatprep.subr.bf16.mxu0 0
        %1750 = vmatpush1.bf16.msra.mxu0 0
        %1751 = vmatprep.subr.bf16.mxu0 0
        %1752 = vmatpush1.bf16.msra.mxu0 0
        %1753 = vmatprep.subr.bf16.mxu0 0
        %1754 = vmatpush1.bf16.msra.mxu0 0
        %1755 = vmatprep.subr.bf16.mxu0 0
        %1756 = vmatpush1.bf16.msra.mxu0 0
        %1757 = vmatprep.mubr.bf16.mxu0 0
        %1758 = vmatmul.mubr.bf16.gmra.mrb[0].mxu0 %v1723
        %v1759 = vpop.f32.mrb[0].mxu0
        %v1760 = vadd.f32 %v1709, %v1759
        %v1761 = vpop.f32.mrb[0].mxu0
        %v1762 = vpop.f32.mrb[0].mxu0
        %v1763 = vpop.f32.mrb[0].mxu0
        %1764 = vdwg.mxu0
        %v1765 = vld [vmem:[#allocation25] sm:$0x1]
        %v1766 = vld [vmem:[%s18] sm:$0x1]
        %v1767 = vsel %vm939, %v1760, 0.0
        %1768 = vadd.xlane.f32.xlu0 %v1767
        %v1769 = vpop.xlane.xlu0 %1768
        %v1770 = vmul.f32 %v1769, %v943
        %v1771 = vsub.f32 %v1760, %v1770
        %v1772 = vmul.f32 %v1771, %v1771
        %v1773 = vsel %vm939, %v1772, 0.0
        %1774 = vadd.xlane.f32.xlu0 %v1773
        %v1775 = vpop.xlane.xlu0 %1774
        %v1776 = vmul.f32 %v1775, %v943
        %v1777 = vadd.f32 %v1776, 1e-05
        %v1778 = vrsqrt.pop %v1777
        %v1779 = vmul.f32 %v1771, %v1778
        %v1781 = vlaneseq
        %v1782 = vshrl.u32 %v1781, 7
        %v1783 = vsub.s32 0, %v1782
        %v1784 = vrot.slane %v1765, %v1783
        %v1786 = vmul.f32 %v1779, %v1784
        %v1788 = vlaneseq
        %v1789 = vshrl.u32 %v1788, 7
        %v1790 = vsub.s32 0, %v1789
        %v1791 = vrot.slane %v1766, %v1790
        %v1793 = vadd.f32 %v1786, %v1791
        %v1794 = vadd.f32 %v967, %v1793
        %v1795 = vpack.c.bf16 %v1794, %v1794
        %v1796 = vld [vmem:[%s19] sm:$0xf]
        %v1797 = vld [vmem:[%s19 + $0x4] sm:$0xf]
        %v1798 = vld [vmem:[%s19 + $0x8] sm:$0xf]
        %v1799 = vld [vmem:[%s19 + $0xc] sm:$0xf]
        %v1800 = vld [vmem:[%s20] sm:$0x1]
        %v1802 = vlaneseq
        %v1803 = vshrl.u32 %v1802, 7
        %v1804 = vsub.s32 0, %v1803
        %v1805 = vrot.slane %v1800, %v1804
        %v1811 = vunpack.c.l.b16 %v1796
        %v1812 = vunpack.c.l.b16 %v1797
        %v1813 = vunpack.c.l.b16 %v1798
        %v1814 = vunpack.c.l.b16 %v1799
        %v1815 = vpack.c.b16 %v1812, %v1811
        %v1816 = vpack.c.b16 %v1814, %v1813
        %v1820 = vsel %vm939, %v1795, 0
        %1822 = vmatprep.subr.bf16.mxu0 0
        %1823 = vmatpush1.bf16.msra.mxu0 %v1815
        %1824 = vmatprep.subr.bf16.mxu0 0
        %1825 = vmatpush1.bf16.msra.mxu0 %v1816
        %1826 = vmatprep.subr.bf16.mxu0 0
        %1827 = vmatpush1.bf16.msra.mxu0 0
        %1828 = vmatprep.subr.bf16.mxu0 0
        %1829 = vmatpush1.bf16.msra.mxu0 0
        %1830 = vmatprep.subr.bf16.mxu0 0
        %1831 = vmatpush1.bf16.msra.mxu0 0
        %1832 = vmatprep.subr.bf16.mxu0 0
        %1833 = vmatpush1.bf16.msra.mxu0 0
        %1834 = vmatprep.subr.bf16.mxu0 0
        %1835 = vmatpush1.bf16.msra.mxu0 0
        %1836 = vmatprep.subr.bf16.mxu0 0
        %1837 = vmatpush1.bf16.msra.mxu0 0
        %1838 = vmatprep.subr.bf16.mxu0 0
        %1839 = vmatpush1.bf16.msra.mxu0 0
        %1840 = vmatprep.subr.bf16.mxu0 0
        %1841 = vmatpush1.bf16.msra.mxu0 0
        %1842 = vmatprep.subr.bf16.mxu0 0
        %1843 = vmatpush1.bf16.msra.mxu0 0
        %1844 = vmatprep.subr.bf16.mxu0 0
        %1845 = vmatpush1.bf16.msra.mxu0 0
        %1846 = vmatprep.subr.bf16.mxu0 0
        %1847 = vmatpush1.bf16.msra.mxu0 0
        %1848 = vmatprep.subr.bf16.mxu0 0
        %1849 = vmatpush1.bf16.msra.mxu0 0
        %1850 = vmatprep.subr.bf16.mxu0 0
        %1851 = vmatpush1.bf16.msra.mxu0 0
        %1852 = vmatprep.subr.bf16.mxu0 0
        %1853 = vmatpush1.bf16.msra.mxu0 0
        %1854 = vmatprep.mubr.bf16.mxu0 0
        %1855 = vmatmul.mubr.bf16.gmra.mrb[0].mxu0 %v1820
        %v1856 = vpop.f32.mrb[0].mxu0
        %v1857 = vadd.f32 %v1805, %v1856
        %v1858 = vpop.f32.mrb[0].mxu0
        %v1859 = vpop.f32.mrb[0].mxu0
        %v1860 = vpop.f32.mrb[0].mxu0
        %1861 = vdwg.mxu0
        %v1862 = vmul.f32 %v1857, 0.5
        %v1863 = vmul.f32 %v1857, %v1857
        %v1864 = vmul.f32 %v1863, %v1857
        %v1865 = vmul.f32 %v1864, 0.044715
        %v1866 = vadd.f32 %v1857, %v1865
        %v1867 = vmul.f32 %v1866, 0.7978846
        %v1868 = vtanh.pop %v1867
        %v1869 = vadd.f32 %v1868, 1.0
        %v1870 = vmul.f32 %v1862, %v1869
        %v1871 = vadd.f32 %v1794, %v1870
        %1872 = vst.msk [vmem:[%s925] sm:$0xff] %vm939, %v1871
        %1873 = vst.msk [vmem:[%s932] sm:$0xff] %vm1251, %v1677
        %s1874 = sand.u32 %s516, 1
        %s1875 = scalar_lea.sflag [#allocation4], %s1874
        %s1876 = sand.u32 %s516, 1
        %s1877 = smul.addr %s1876, 8
        %s1878 = scalar_lea.vmem [#allocation26], %s1877
        %s1879 = sand.u32 %s542, 1
        %s1880 = scalar_lea.sflag [#allocation28], %s1879
        %s1881 = sand.u32 %s542, 1
        %s1882 = smul.addr %s1881, 8
        %s1883 = scalar_lea.vmem [#allocation27], %s1882
        // Predicated region
        $region165: #{tpu_custom_call.1} parent=103 // pred_check
          %p1884 = pneg %p526
        $region166: #{tpu_custom_call.1} parent=103 // pred_check_branch
          %1886 = sbr.rel (%p1884) target = $region168
        $region167: #{tpu_custom_call.1} parent=103 // pred_region
          %s1888 = ssub.s32 128, 128
          %1889 = vsyncadd %s1875, %s1888
          %s1890 = smul.addr %s52, 128
          %s1891 = scalar_lea.hbm %s21, %s1890
          %s1893 = sshll.u32 %s1878, 4
          %s1894 = int_to_ptr.vmem [resolvable:$true] %s1893
          %1896 = dma.vmem_to_hbm [thread:$0]  %s1894, 128, %s1891, %s1875
        $region168: #{tpu_custom_call.1} parent=103 // pred_fallthru
          _
        // Predicated region
        $region169: #{tpu_custom_call.1} parent=103 // pred_check
          %p1897 = pneg %p552
        $region170: #{tpu_custom_call.1} parent=103 // pred_check_branch
          %1899 = sbr.rel (%p1897) target = $region172
        $region171: #{tpu_custom_call.1} parent=103 // pred_region
          %s1901 = ssub.s32 128, 128
          %1902 = vsyncadd %s1880, %s1901
          %s1903 = smul.addr %s52, 128
          %s1904 = scalar_lea.hbm %s22, %s1903
          %s1906 = sshll.u32 %s1883, 4
          %s1907 = int_to_ptr.vmem [resolvable:$true] %s1906
          %1909 = dma.vmem_to_hbm [thread:$0]  %s1907, 128, %s1904, %s1880
        $region172: #{tpu_custom_call.1} parent=103 // pred_fallthru
          _
      $region104: #{tpu_custom_call.1} parent=5 // pred_fallthru
        _
      %p1910 = scmp.le.s32.totalorder 2, %s47
      // Predicated region
      $region173: #{tpu_custom_call.1} parent=5 // pred_check
        %p1911 = pneg %p1910
      $region174: #{tpu_custom_call.1} parent=5 // pred_check_branch
        %1913 = sbr.rel (%p1911) target = $region176
      $region175: #{tpu_custom_call.1} parent=5 // pred_region
        %s1914 = ssub.s32 %s47, 2
        // Predicated region
        $region177: #{tpu_custom_call.1} parent=175 // pred_check
          %p1915 = pneg %p532
        $region178: #{tpu_custom_call.1} parent=175 // pred_check_branch
          %1917 = sbr.rel (%p1915) target = $region180
        $region179: #{tpu_custom_call.1} parent=175 // pred_region
          %s1918 = sand.u32 %s517, 1
          %s1919 = scalar_lea.sflag [#allocation4], %s1918
          %s1920 = sand.u32 %s517, 1
          %s1921 = smul.addr %s1920, 8
          %s1922 = scalar_lea.vmem [#allocation26], %s1921
          %1923 = dma.done %s1919, 128
        $region180: #{tpu_custom_call.1} parent=175 // pred_fallthru
          _
        // Predicated region
        $region181: #{tpu_custom_call.1} parent=175 // pred_check
          %p1924 = pneg %p558
        $region182: #{tpu_custom_call.1} parent=175 // pred_check_branch
          %1926 = sbr.rel (%p1924) target = $region184
        $region183: #{tpu_custom_call.1} parent=175 // pred_region
          %s1927 = sand.u32 %s543, 1
          %s1928 = scalar_lea.sflag [#allocation28], %s1927
          %s1929 = sand.u32 %s543, 1
          %s1930 = smul.addr %s1929, 8
          %s1931 = scalar_lea.vmem [#allocation27], %s1930
          %1932 = dma.done %s1928, 128
        $region184: #{tpu_custom_call.1} parent=175 // pred_fallthru
          _
      $region176: #{tpu_custom_call.1} parent=5 // pred_fallthru
        _
    $region6: #{tpu_custom_call.1} parent=1 // loop_footer
      %s51 = sadd.s32 1, %s47
    $region7: #{tpu_custom_call.1} parent=1 // loop_footer_branch
      %46 = sbr.rel target = $region3
    $region8: #{tpu_custom_call.1} parent=1 // loop_exit
      _
    %1933 = vsyncpa [#allocation3], 1
    %s1934 = scalar_lea.sflag [#allocation3], 1
    %1935 = vsyncpa %s1934, 1
    %1936 = vsyncpa [#allocation6], 1
    %s1937 = scalar_lea.sflag [#allocation6], 1
    %1938 = vsyncpa %s1937, 1
    %1939 = vsyncpa [#allocation9], 1
    %1940 = vsyncpa [#allocation12], 1
    %1941 = vsyncpa [#allocation15], 1
    %1942 = vsyncpa [#allocation18], 1
    %1943 = vsyncpa [#allocation21], 1
    %1944 = vsyncpa [#allocation24], 1
    %1945 = vsyncpa [#allocation4], 1
    %s1946 = scalar_lea.sflag [#allocation4], 1
    %1947 = vsyncpa %s1946, 1
    %1948 = vsyncpa [#allocation28], 1
    %s1949 = scalar_lea.sflag [#allocation28], 1
    %1950 = vsyncpa %s1949, 1

</llo_original>
